<compile_context>
chip_gen: v7x
topology: tpu7x:2x2x1
jax: 0.10.0
libtpu: 0.0.40
codegen_flags: <defaults>
</compile_context>

<pallas_src>
import math

import jax
import jax.numpy as jnp
from jax import lax
from jax.experimental import pallas as pl
from jax.experimental.pallas import tpu as pltpu

# --------------------------- synthetic HubertConfig ---------------------------
CONV_DIMS = (16, 16)        # feature-extractor conv channels
CONV_KERNELS = (10, 3)
CONV_STRIDES = (5, 2)
HIDDEN = 32                 # hidden_size (== out_dim of HubertEncoder)
NUM_LAYERS = 2
NUM_HEADS = 4
HEAD_DIM = HIDDEN // NUM_HEADS
INTERMEDIATE = 64
POS_CONV_KERNEL = 16        # num_conv_pos_embeddings (even -> drop last frame)
POS_CONV_GROUPS = 4
POS_CG_IN = HIDDEN // POS_CONV_GROUPS       # per-group input channels  (8)
POS_CG_OUT = HIDDEN // POS_CONV_GROUPS      # per-group output channels (8)
LAYER_NORM_EPS = 1e-5

_BF16 = jnp.bfloat16
_NEG_BIG = -1.0e30


# ------------------------------ in-kernel helpers ------------------------------
def _gelu(x):
    # exact (erf) GELU, matching torch.nn.functional.gelu default (f32 math)
    return 0.5 * x * (1.0 + lax.erf(x * (1.0 / math.sqrt(2.0))))


def _layernorm(x, g, b, eps=LAYER_NORM_EPS):
    mean = jnp.mean(x, axis=-1, keepdims=True)
    var = jnp.mean(jnp.square(x - mean), axis=-1, keepdims=True)
    return (x - mean) * lax.rsqrt(var + eps) * g + b


def _full_spec(a):
    """BlockSpec covering the whole (small) array, same block for every step."""
    zeros = (0,) * a.ndim
    return pl.BlockSpec(a.shape, lambda *_: zeros)


def _per_layer_spec(a):
    """BlockSpec slicing one layer (leading axis) per grid step."""
    tail = (0,) * (a.ndim - 1)
    return pl.BlockSpec((1,) + a.shape[1:], lambda l: (l,) + tail)


# ------------------------------- Pallas kernels --------------------------------
def _conv0_gn_kernel(p_ref, w_ref, g_ref, b_ref, o_ref):
    """conv0 (as patch-matmul, no bias) + per-channel GroupNorm over time + GELU."""
    x = p_ref[0]                                              # (T0, K0*Cin) f32
    y = jnp.dot(x.astype(_BF16), w_ref[...],
                preferred_element_type=jnp.float32)           # (T0, C0)
    # GroupNorm with num_groups == num_channels: normalize each channel over time
    mean = jnp.mean(y, axis=0, keepdims=True)
    var = jnp.mean(jnp.square(y - mean), axis=0, keepdims=True)
    y = (y - mean) * lax.rsqrt(var + LAYER_NORM_EPS)
    y = y * g_ref[...] + b_ref[...]
    o_ref[0] = _gelu(y).astype(o_ref.dtype)


def _conv1_featproj_kernel(p_ref, w1_ref, ln_g_ref, ln_b_ref, wp_ref, bp_ref, o_ref):
    """conv1 (patch-matmul, no bias) + GELU + feature-projection LN + Linear."""
    x = p_ref[0]                                              # (T, K1*C0) bf16
    y = _gelu(jnp.dot(x.astype(_BF16), w1_ref[...],
                      preferred_element_type=jnp.float32))    # (T, C1) f32
    y = _layernorm(y, ln_g_ref[...], ln_b_ref[...])
    y = jnp.dot(y.astype(_BF16), wp_ref[...],
                preferred_element_type=jnp.float32) + bp_ref[...]
    o_ref[0] = y.astype(o_ref.dtype)                          # (T, H) bf16


def _posconv_transformer_kernel(h_ref, pp_ref, pw_ref, pb_ref, mask_ref,
                                eg_ref, eb_ref,
                                wqkv_ref, bqkv_ref, wo_ref, bo_ref,
                                ln1g_ref, ln1b_ref, w1_ref, b1_ref,
                                w2_ref, b2_ref, ln2g_ref, ln2b_ref,
                                o_ref, h_scr, attn_scr):
    """Grouped pos-conv + residual + encoder LN (step 0), then one transformer
    encoder layer per grid step; hidden state stays in VMEM scratch h_scr."""
    GK = POS_CONV_KERNEL * POS_CG_IN        # 128 patch columns per group

    # ---- step 0: positional conv embedding + GELU + residual + encoder LN ----
    @pl.when(pl.program_id(0) == 0)
    def _():
        h_in = h_ref[...].astype(jnp.float32)                 # (BT, H)
        for g in range(POS_CONV_GROUPS):
            attn_scr[:, g * POS_CG_OUT:(g + 1) * POS_CG_OUT] = jnp.dot(
                pp_ref[:, g * GK:(g + 1) * GK], pw_ref[g],
                preferred_element_type=jnp.float32)           # (BT, 8)
        pos = _gelu(attn_scr[...] + pb_ref[...])
        h_scr[...] = _layernorm(h_in + pos, eg_ref[...], eb_ref[...])

    # ---- one post-LN transformer encoder layer (weights for layer l) ----
    x = h_scr[...]                                            # (BT, H) f32
    xb = x.astype(_BF16)

    # fused QKV projection over all batch rows (scale folded into Q weights)
    qkv = jnp.dot(xb, wqkv_ref[0],
                  preferred_element_type=jnp.float32) + bqkv_ref[0]   # (BT, 3H)
    mask = mask_ref[...]                                      # block-diag batch mask

    for hd in range(NUM_HEADS):
        lo = hd * HEAD_DIM
        qh = qkv[:, lo:lo + HEAD_DIM]
        kh = qkv[:, HIDDEN + lo:HIDDEN + lo + HEAD_DIM]
        vh = qkv[:, 2 * HIDDEN + lo:2 * HIDDEN + lo + HEAD_DIM]
        s = lax.dot_general(qh.astype(_BF16), kh.astype(_BF16),
                            (((1,), (1,)), ((), ())),
                            preferred_element_type=jnp.float32)        # (BT, BT)
        s = s + mask
        s = s - jnp.max(s, axis=-1, keepdims=True)
        p = jnp.exp(s)
        p = p / jnp.sum(p, axis=-1, keepdims=True)             # exact softmax
        attn_scr[:, lo:lo + HEAD_DIM] = jnp.dot(
            p.astype(_BF16), vh.astype(_BF16),
            preferred_element_type=jnp.float32)                # (BT, HD)

    ctx = jnp.dot(attn_scr[...].astype(_BF16), wo_ref[0],
                  preferred_element_type=jnp.float32) + bo_ref[0]

    h1 = _layernorm(x + ctx, ln1g_ref[0], ln1b_ref[0])
    ff = _gelu(jnp.dot(h1.astype(_BF16), w1_ref[0],
                       preferred_element_type=jnp.float32) + b1_ref[0])
    ff = jnp.dot(ff.astype(_BF16), w2_ref[0],
                 preferred_element_type=jnp.float32) + b2_ref[0]
    h2 = _layernorm(h1 + ff, ln2g_ref[0], ln2b_ref[0])

    h_scr[...] = h2                      # carry to next layer (VMEM resident)
    o_ref[...] = h2.astype(o_ref.dtype)  # output block resident; DMA'd once at end


# ------------------------------- Pallas wrappers --------------------------------
_PARALLEL = pltpu.CompilerParams(dimension_semantics=("parallel",))


def pallas_conv0_groupnorm(patches, w_mat, g, b):
    B, T0, P = patches.shape
    C = w_mat.shape[1]
    return pl.pallas_call(
        _conv0_gn_kernel,
        grid=(B,),
        in_specs=[pl.BlockSpec((1, T0, P), lambda i: (i, 0, 0)),
                  _full_spec(w_mat), _full_spec(g), _full_spec(b)],
        out_specs=pl.BlockSpec((1, T0, C), lambda i: (i, 0, 0)),
        out_shape=jax.ShapeDtypeStruct((B, T0, C), _BF16),
        compiler_params=_PARALLEL,
    )(patches, w_mat, g, b)


def pallas_conv1_featproj(patches, w1, ln_g, ln_b, wp, bp):
    B, T, P = patches.shape
    H = wp.shape[1]
    return pl.pallas_call(
        _conv1_featproj_kernel,
        grid=(B,),
        in_specs=[pl.BlockSpec((1, T, P), lambda i: (i, 0, 0)),
                  _full_spec(w1), _full_spec(ln_g), _full_spec(ln_b),
                  _full_spec(wp), _full_spec(bp)],
        out_specs=pl.BlockSpec((1, T, H), lambda i: (i, 0, 0)),
        out_shape=jax.ShapeDtypeStruct((B, T, H), _BF16),
        compiler_params=_PARALLEL,
    )(patches, w1, ln_g, ln_b, wp, bp)


def pallas_posconv_transformer(h_flat, pos_patch, mask, kp):
    """One fused call: grouped pos-conv + residual + encoder LN + all layers."""
    BT, H = h_flat.shape
    st = kp["stack"]
    args = (h_flat, pos_patch, kp["pos_w"], kp["pos_b"], mask,
            kp["enc_ln_g"], kp["enc_ln_b"],
            st["wqkv"], st["bqkv"], st["wo"], st["bo"],
            st["ln1_g"], st["ln1_b"], st["w_ff1"], st["b_ff1"],
            st["w_ff2"], st["b_ff2"], st["ln2_g"], st["ln2_b"])
    in_specs = ([_full_spec(a) for a in args[:7]]
                + [_per_layer_spec(a) for a in args[7:]])
    return pl.pallas_call(
        _posconv_transformer_kernel,
        grid=(NUM_LAYERS,),
        in_specs=in_specs,
        out_specs=pl.BlockSpec((BT, H), lambda l: (0, 0)),
        out_shape=jax.ShapeDtypeStruct((BT, H), jnp.float32),
        scratch_shapes=[pltpu.VMEM((BT, H), jnp.float32),   # h carried across layers
                        pltpu.VMEM((BT, H), jnp.float32)],  # attention/pos-conv context
        compiler_params=pltpu.CompilerParams(dimension_semantics=("arbitrary",)),
    )(*args)


# --------------------- gather-free im2col (strided slices) ---------------------
def _extract_patches(x, kernel, stride):
    """x: (B, T, C) -> (B, T_out, kernel*C), element order (tap, channel).
    Built from K strided slices + stack, so no XLA gather materializes."""
    B, T, C = x.shape
    T_out = (T - kernel) // stride + 1
    taps = [x[:, k:k + (T_out - 1) * stride + 1:stride, :] for k in range(kernel)]
    return jnp.stack(taps, axis=2).reshape(B, T_out, kernel * C)


def _conv_w_mat(w):
    """(Cout, Cin, K) PyTorch conv weight -> (K*Cin, Cout) patch-matmul weight."""
    Cout, Cin, K = w.shape
    return jnp.transpose(w, (2, 1, 0)).reshape(K * Cin, Cout)


def _grouped_pos_w(w):
    """(Cout, Cin//G, K) grouped-conv weight -> (G, K*Cg_in, Cg_out) per-group mats."""
    Cout, Cg_in, K = w.shape
    mats = []
    for g in range(POS_CONV_GROUPS):
        wg = w[g * POS_CG_OUT:(g + 1) * POS_CG_OUT]            # (Cg_out, Cg_in, K)
        mats.append(jnp.transpose(wg, (2, 1, 0)).reshape(K * Cg_in, POS_CG_OUT))
    return jnp.stack(mats, axis=0).astype(_BF16)               # (G, 128, 8)


# ------------------------------ model definition ------------------------------
def hubert_encoder_forward(kp, wave, wave_len):
    """wave: (B, S) float32 raw waveform; wave_len: (B,) int32."""
    B, S = wave.shape

    # ---- HubertFeatureEncoder (conv stack, conv_bias=False) ----
    x = wave[:, :, None]                                        # (B, S, 1)
    p0 = _extract_patches(x, CONV_KERNELS[0], CONV_STRIDES[0])  # (B, T0, 10)
    h0 = pallas_conv0_groupnorm(p0, kp["conv0_w"], kp["gn_g"], kp["gn_b"])  # bf16

    p1 = _extract_patches(h0, CONV_KERNELS[1], CONV_STRIDES[1])  # (B, T, 48) bf16
    _, T, _ = p1.shape
    # conv1 + GELU + HubertFeatureProjection (LayerNorm + Linear), fused
    h = pallas_conv1_featproj(p1, kp["conv1_w"], kp["fp_ln_g"], kp["fp_ln_b"],
                              kp["fp_w"], kp["fp_b"])            # (B, T, H) bf16
    # TODO(synk): dropout / spec-augment masking are training-only stochastic ops; omitted.

    # ---- positional conv patches, group-major (g, tap, cg) column layout ----
    # TODO(synk): weight-norm reparam of the positional conv is folded into one weight.
    K = POS_CONV_KERNEL
    hp = jnp.pad(h, ((0, 0), (K // 2, K // 2), (0, 0)))          # (B, T+K, H) bf16
    taps = jnp.stack([hp[:, k:k + T, :] for k in range(K)], axis=2)   # (B,T,K,H)
    pos_patch = (taps.reshape(B, T, K, POS_CONV_GROUPS, POS_CG_IN)
                 .transpose(0, 1, 3, 2, 4)
                 .reshape(B * T, POS_CONV_GROUPS * K * POS_CG_IN))    # (B*T, 512)

    # ---- block-diagonal additive mask: attention stays within each batch elem ----
    # TODO(synk): no per-length attention mask (matches the reference, which calls
    # model(inputs) without an attention_mask).
    row_b = jnp.arange(B * T, dtype=jnp.int32) // T
    attn_mask = jnp.where(row_b[:, None] == row_b[None, :], 0.0, _NEG_BIG
                          ).astype(jnp.float32)                       # (B*T, B*T)

    # ---- fused pos-conv + encoder LN + full transformer stack (one call) ----
    h_flat = h.reshape(B * T, HIDDEN)
    out = pallas_posconv_transformer(h_flat, pos_patch, attn_mask, kp)  # (B*T, H) f32
    h_out = out.reshape(B, T, HIDDEN)

    # ---- enc_len exactly as in HubertEncoder.forward ----
    enc_len = jnp.floor(
        wave_len.astype(jnp.float32) * (T / jnp.max(wave_len).astype(jnp.float32))
    ).astype(jnp.int32)
    return h_out, enc_len


# ------------------------------ parameter setup ------------------------------
def init_params(key):
    def nrm(k, shape, scale=0.02):
        return scale * jax.random.normal(k, shape, dtype=jnp.float32)

    keys = iter(jax.random.split(key, 64))
    params = {
        "conv0_w": nrm(next(keys), (CONV_DIMS[0], 1, CONV_KERNELS[0])),
        "gn_g": jnp.ones((CONV_DIMS[0],), jnp.float32),
        "gn_b": jnp.zeros((CONV_DIMS[0],), jnp.float32),
        "conv1_w": nrm(next(keys), (CONV_DIMS[1], CONV_DIMS[0], CONV_KERNELS[1])),
        "fp_ln_g": jnp.ones((CONV_DIMS[1],), jnp.float32),
        "fp_ln_b": jnp.zeros((CONV_DIMS[1],), jnp.float32),
        "fp_w": nrm(next(keys), (CONV_DIMS[1], HIDDEN)),
        "fp_b": jnp.zeros((HIDDEN,), jnp.float32),
        "pos_w": nrm(next(keys), (HIDDEN, HIDDEN // POS_CONV_GROUPS, POS_CONV_KERNEL)),
        "pos_b": jnp.zeros((HIDDEN,), jnp.float32),
        "enc_ln_g": jnp.ones((HIDDEN,), jnp.float32),
        "enc_ln_b": jnp.zeros((HIDDEN,), jnp.float32),
        "layers": [],
    }
    for _ in range(NUM_LAYERS):
        lp = {
            "wq": nrm(next(keys), (HIDDEN, HIDDEN)), "bq": jnp.zeros((HIDDEN,), jnp.float32),
            "wk": nrm(next(keys), (HIDDEN, HIDDEN)), "bk": jnp.zeros((HIDDEN,), jnp.float32),
            "wv": nrm(next(keys), (HIDDEN, HIDDEN)), "bv": jnp.zeros((HIDDEN,), jnp.float32),
            "wo": nrm(next(keys), (HIDDEN, HIDDEN)), "bo": jnp.zeros((HIDDEN,), jnp.float32),
            "ln1_g": jnp.ones((HIDDEN,), jnp.float32), "ln1_b": jnp.zeros((HIDDEN,), jnp.float32),
            "w_ff1": nrm(next(keys), (HIDDEN, INTERMEDIATE)),
            "b_ff1": jnp.zeros((INTERMEDIATE,), jnp.float32),
            "w_ff2": nrm(next(keys), (INTERMEDIATE, HIDDEN)),
            "b_ff2": jnp.zeros((HIDDEN,), jnp.float32),
            "ln2_g": jnp.ones((HIDDEN,), jnp.float32), "ln2_b": jnp.zeros((HIDDEN,), jnp.float32),
        }
        params["layers"].append(lp)
    return params


def prepare_params(p):
    """One-time prep: matmul layouts, fused+scaled QKV weights, per-group pos-conv
    matrices, per-layer weight stacking (leading layer axis), bf16 weight casting
    (norm params / biases stay f32)."""
    scale = 1.0 / math.sqrt(HEAD_DIM)

    kp = {
        "conv0_w": _conv_w_mat(p["conv0_w"]).astype(_BF16),      # (10, 16)
        "gn_g": p["gn_g"].reshape(1, -1),
        "gn_b": p["gn_b"].reshape(1, -1),
        "conv1_w": _conv_w_mat(p["conv1_w"]).astype(_BF16),      # (48, 16)
        "fp_ln_g": p["fp_ln_g"].reshape(1, -1),
        "fp_ln_b": p["fp_ln_b"].reshape(1, -1),
        "fp_w": p["fp_w"].astype(_BF16),                         # (16, 32)
        "fp_b": p["fp_b"].reshape(1, -1),
        "pos_w": _grouped_pos_w(p["pos_w"]),                     # (4, 128, 8) bf16
        "pos_b": p["pos_b"].reshape(1, -1),
        "enc_ln_g": p["enc_ln_g"].reshape(1, -1),
        "enc_ln_b": p["enc_ln_b"].reshape(1, -1),
    }

    layers = p["layers"]

    def stack(name, fn=lambda a: a):
        return jnp.stack([fn(lp[name]) for lp in layers], axis=0)

    kp["stack"] = {
        # fused QKV: (L, H, 3H) bf16, attention scale folded into Q columns
        "wqkv": jnp.stack(
            [jnp.concatenate([lp["wq"] * scale, lp["wk"], lp["wv"]], axis=1)
             for lp in layers], axis=0).astype(_BF16),
        "bqkv": jnp.stack(
            [jnp.concatenate([lp["bq"] * scale, lp["bk"], lp["bv"]])[None, :]
             for lp in layers], axis=0),                                  # (L, 1, 3H)
        "wo": stack("wo").astype(_BF16),                                  # (L, H, H)
        "bo": stack("bo", lambda b: b[None, :]),                          # (L, 1, H)
        "ln1_g": stack("ln1_g", lambda b: b[None, :]),
        "ln1_b": stack("ln1_b", lambda b: b[None, :]),
        "w_ff1": stack("w_ff1").astype(_BF16),                            # (L, H, I)
        "b_ff1": stack("b_ff1", lambda b: b[None, :]),
        "w_ff2": stack("w_ff2").astype(_BF16),                            # (L, I, H)
        "b_ff2": stack("b_ff2", lambda b: b[None, :]),
        "ln2_g": stack("ln2_g", lambda b: b[None, :]),
        "ln2_b": stack("ln2_b", lambda b: b[None, :]),
    }
    return kp


# ------------------------------------ main ------------------------------------
if __name__ == "__main__":
    key = jax.random.PRNGKey(0)
    pkey, wkey = jax.random.split(key)
    params = init_params(pkey)
    kparams = prepare_params(params)

    B, S = 2, 320
    wave = jax.random.normal(wkey, (B, S), dtype=jnp.float32)
    wave_len = jnp.array([320, 256], dtype=jnp.int32)

    forward = jax.jit(hubert_encoder_forward)
    last_hidden_state, enc_len = forward(kparams, wave, wave_len)
    last_hidden_state = jax.block_until_ready(last_hidden_state)
    enc_len = jax.block_until_ready(enc_len)

    # frames: (320-10)//5+1 = 63 ; (63-3)//2+1 = 31
    assert last_hidden_state.shape == (B, 31, HIDDEN), last_hidden_state.shape
    assert last_hidden_state.dtype == jnp.float32
    assert enc_len.shape == (B,) and enc_len.dtype == jnp.int32
    assert bool(jnp.all(jnp.isfinite(last_hidden_state)))

    print("KERNEL_OK")
</pallas_src>

<mosaic_0001>
module attributes {stable_mosaic.version = 11 : i64} {
  func.func @_conv0_gn_kernel(%arg0: i32, %arg1: memref<1x63x10xf32, #tpu.memory_space<vmem>>, %arg2: memref<10x16xbf16, #tpu.memory_space<vmem>>, %arg3: memref<1x16xf32, #tpu.memory_space<vmem>>, %arg4: memref<1x16xf32, #tpu.memory_space<vmem>>, %arg5: memref<1x63x16xbf16, #tpu.memory_space<vmem>>) attributes {dimension_semantics = [#tpu.dimension_semantics<parallel>], iteration_bounds = array<i64: 2>, scalar_prefetch = 0 : i64, scratch_operands = 0 : i64, tpu.core_type = #tpu.core_type<tc>, window_params = [{transform_indices = @transform_0, window_bounds = array<i64: 1, 63, 10>}, {pipeline_mode = #tpu.pipeline_mode<synchronous>, transform_indices = @transform_1, window_bounds = array<i64: 10, 16>}, {pipeline_mode = #tpu.pipeline_mode<synchronous>, transform_indices = @transform_2, window_bounds = array<i64: 1, 16>}, {pipeline_mode = #tpu.pipeline_mode<synchronous>, transform_indices = @transform_3, window_bounds = array<i64: 1, 16>}, {transform_indices = @transform_4, window_bounds = array<i64: 1, 63, 16>}]} {
    %c0 = arith.constant 0 : index
    %c0_0 = arith.constant 0 : index
    %c0_1 = arith.constant 0 : index
    %0 = vector.load %arg1[%c0, %c0_0, %c0_1] : memref<1x63x10xf32, #tpu.memory_space<vmem>>, vector<1x63x10xf32>
    %1 = vector.shape_cast %0 : vector<1x63x10xf32> to vector<63x10xf32>
    %2 = arith.truncf %1 : vector<63x10xf32> to vector<63x10xbf16>
    %c0_2 = arith.constant 0 : index
    %c0_3 = arith.constant 0 : index
    %3 = vector.load %arg2[%c0_2, %c0_3] : memref<10x16xbf16, #tpu.memory_space<vmem>>, vector<10x16xbf16>
    %cst = arith.constant dense<0.000000e+00> : vector<63x16xf32>
    %4 = tpu.matmul %2, %3, %cst {dimension_numbers = #tpu.dot_dimension_numbers<[1], [0], [0], [1], [0, 0, 1, 1], [], []>} : vector<63x10xbf16>, vector<10x16xbf16>, vector<63x16xf32> -> vector<63x16xf32>
    %cst_4 = arith.constant dense<0.000000e+00> : vector<16xf32>
    %5 = vector.multi_reduction <add>, %4, %cst_4 [0] : vector<63x16xf32> to vector<16xf32>
    %6 = vector.shape_cast %5 : vector<16xf32> to vector<1x16xf32>
    %cst_5 = arith.constant 6.300000e+01 : f32
    %7 = vector.broadcast %cst_5 : f32 to vector<1x16xf32>
    %8 = arith.divf %6, %7 : vector<1x16xf32>
    %9 = vector.broadcast %8 : vector<1x16xf32> to vector<63x16xf32>
    %10 = arith.subf %4, %9 : vector<63x16xf32>
    %11 = arith.mulf %10, %10 : vector<63x16xf32>
    %cst_6 = arith.constant dense<0.000000e+00> : vector<16xf32>
    %12 = vector.multi_reduction <add>, %11, %cst_6 [0] : vector<63x16xf32> to vector<16xf32>
    %13 = vector.shape_cast %12 : vector<16xf32> to vector<1x16xf32>
    %cst_7 = arith.constant 6.300000e+01 : f32
    %14 = vector.broadcast %cst_7 : f32 to vector<1x16xf32>
    %15 = arith.divf %13, %14 : vector<1x16xf32>
    %16 = vector.broadcast %8 : vector<1x16xf32> to vector<63x16xf32>
    %17 = arith.subf %4, %16 : vector<63x16xf32>
    %cst_8 = arith.constant 9.99999974E-6 : f32
    %18 = vector.broadcast %cst_8 : f32 to vector<1x16xf32>
    %19 = arith.addf %15, %18 : vector<1x16xf32>
    %20 = math.rsqrt %19 : vector<1x16xf32>
    %21 = vector.broadcast %20 : vector<1x16xf32> to vector<63x16xf32>
    %22 = arith.mulf %17, %21 : vector<63x16xf32>
    %c0_9 = arith.constant 0 : index
    %c0_10 = arith.constant 0 : index
    %23 = vector.load %arg3[%c0_9, %c0_10] : memref<1x16xf32, #tpu.memory_space<vmem>>, vector<1x16xf32>
    %24 = vector.broadcast %23 : vector<1x16xf32> to vector<63x16xf32>
    %25 = arith.mulf %22, %24 : vector<63x16xf32>
    %c0_11 = arith.constant 0 : index
    %c0_12 = arith.constant 0 : index
    %26 = vector.load %arg4[%c0_11, %c0_12] : memref<1x16xf32, #tpu.memory_space<vmem>>, vector<1x16xf32>
    %27 = vector.broadcast %26 : vector<1x16xf32> to vector<63x16xf32>
    %28 = arith.addf %25, %27 : vector<63x16xf32>
    %cst_13 = arith.constant 5.000000e-01 : f32
    %29 = vector.broadcast %cst_13 : f32 to vector<63x16xf32>
    %30 = arith.mulf %29, %28 : vector<63x16xf32>
    %cst_14 = arith.constant 0.707106769 : f32
    %31 = vector.broadcast %cst_14 : f32 to vector<63x16xf32>
    %32 = arith.mulf %28, %31 : vector<63x16xf32>
    %33 = math.erf %32 : vector<63x16xf32>
    %cst_15 = arith.constant 1.000000e+00 : f32
    %34 = vector.broadcast %cst_15 : f32 to vector<63x16xf32>
    %35 = arith.addf %34, %33 : vector<63x16xf32>
    %36 = arith.mulf %30, %35 : vector<63x16xf32>
    %37 = arith.truncf %36 : vector<63x16xf32> to vector<63x16xbf16>
    %c0_16 = arith.constant 0 : index
    %c0_17 = arith.constant 0 : index
    %c0_18 = arith.constant 0 : index
    %38 = vector.load %arg5[%c0_16, %c0_17, %c0_18] : memref<1x63x16xbf16, #tpu.memory_space<vmem>>, vector<1x63x16xbf16>
    %39 = vector.shape_cast %38 : vector<1x63x16xbf16> to vector<63x16xbf16>
    %40 = vector.shape_cast %37 : vector<63x16xbf16> to vector<1x63x16xbf16>
    tpu.vector_store %arg5[%c0_16, %c0_17, %c0_18], %40 {strides = array<i32>} : memref<1x63x16xbf16, #tpu.memory_space<vmem>>, vector<1x63x16xbf16>,
    return
  }
  func.func @transform_0(%arg0: i32) -> (i32, i32, i32) {
    %c0_i32 = arith.constant 0 : i32
    %c0_i32_0 = arith.constant 0 : i32
    %c0_i32_1 = arith.constant 0 : i32
    return %arg0, %c0_i32, %c0_i32_0 : i32, i32, i32
  }
  func.func @transform_1(%arg0: i32) -> (i32, i32) {
    %c0_i32 = arith.constant 0 : i32
    %c0_i32_0 = arith.constant 0 : i32
    %c0_i32_1 = arith.constant 0 : i32
    return %c0_i32, %c0_i32_0 : i32, i32
  }
  func.func @transform_2(%arg0: i32) -> (i32, i32) {
    %c0_i32 = arith.constant 0 : i32
    %c0_i32_0 = arith.constant 0 : i32
    %c0_i32_1 = arith.constant 0 : i32
    return %c0_i32, %c0_i32_0 : i32, i32
  }
  func.func @transform_3(%arg0: i32) -> (i32, i32) {
    %c0_i32 = arith.constant 0 : i32
    %c0_i32_0 = arith.constant 0 : i32
    %c0_i32_1 = arith.constant 0 : i32
    return %c0_i32, %c0_i32_0 : i32, i32
  }
  func.func @transform_4(%arg0: i32) -> (i32, i32, i32) {
    %c0_i32 = arith.constant 0 : i32
    %c0_i32_0 = arith.constant 0 : i32
    %c0_i32_1 = arith.constant 0 : i32
    return %arg0, %c0_i32, %c0_i32_0 : i32, i32, i32
  }
}

module attributes {stable_mosaic.version = 11 : i64} {
  func.func @_conv1_featproj_kernel(%arg0: i32, %arg1: memref<1x31x48xbf16, #tpu.memory_space<vmem>>, %arg2: memref<48x16xbf16, #tpu.memory_space<vmem>>, %arg3: memref<1x16xf32, #tpu.memory_space<vmem>>, %arg4: memref<1x16xf32, #tpu.memory_space<vmem>>, %arg5: memref<16x32xbf16, #tpu.memory_space<vmem>>, %arg6: memref<1x32xf32, #tpu.memory_space<vmem>>, %arg7: memref<1x31x32xbf16, #tpu.memory_space<vmem>>) attributes {dimension_semantics = [#tpu.dimension_semantics<parallel>], iteration_bounds = array<i64: 2>, scalar_prefetch = 0 : i64, scratch_operands = 0 : i64, tpu.core_type = #tpu.core_type<tc>, window_params = [{transform_indices = @transform_0, window_bounds = array<i64: 1, 31, 48>}, {pipeline_mode = #tpu.pipeline_mode<synchronous>, transform_indices = @transform_1, window_bounds = array<i64: 48, 16>}, {pipeline_mode = #tpu.pipeline_mode<synchronous>, transform_indices = @transform_2, window_bounds = array<i64: 1, 16>}, {pipeline_mode = #tpu.pipeline_mode<synchronous>, transform_indices = @transform_3, window_bounds = array<i64: 1, 16>}, {pipeline_mode = #tpu.pipeline_mode<synchronous>, transform_indices = @transform_4, window_bounds = array<i64: 16, 32>}, {pipeline_mode = #tpu.pipeline_mode<synchronous>, transform_indices = @transform_5, window_bounds = array<i64: 1, 32>}, {transform_indices = @transform_6, window_bounds = array<i64: 1, 31, 32>}]} {
    %c0 = arith.constant 0 : index
    %c0_0 = arith.constant 0 : index
    %c0_1 = arith.constant 0 : index
    %0 = vector.load %arg1[%c0, %c0_0, %c0_1] : memref<1x31x48xbf16, #tpu.memory_space<vmem>>, vector<1x31x48xbf16>
    %1 = vector.shape_cast %0 : vector<1x31x48xbf16> to vector<31x48xbf16>
    %c0_2 = arith.constant 0 : index
    %c0_3 = arith.constant 0 : index
    %2 = vector.load %arg2[%c0_2, %c0_3] : memref<48x16xbf16, #tpu.memory_space<vmem>>, vector<48x16xbf16>
    %cst = arith.constant dense<0.000000e+00> : vector<31x16xf32>
    %3 = tpu.matmul %1, %2, %cst {dimension_numbers = #tpu.dot_dimension_numbers<[1], [0], [0], [1], [0, 0, 1, 1], [], []>} : vector<31x48xbf16>, vector<48x16xbf16>, vector<31x16xf32> -> vector<31x16xf32>
    %cst_4 = arith.constant 5.000000e-01 : f32
    %4 = vector.broadcast %cst_4 : f32 to vector<31x16xf32>
    %5 = arith.mulf %4, %3 : vector<31x16xf32>
    %cst_5 = arith.constant 0.707106769 : f32
    %6 = vector.broadcast %cst_5 : f32 to vector<31x16xf32>
    %7 = arith.mulf %3, %6 : vector<31x16xf32>
    %8 = math.erf %7 : vector<31x16xf32>
    %cst_6 = arith.constant 1.000000e+00 : f32
    %9 = vector.broadcast %cst_6 : f32 to vector<31x16xf32>
    %10 = arith.addf %9, %8 : vector<31x16xf32>
    %11 = arith.mulf %5, %10 : vector<31x16xf32>
    %c0_7 = arith.constant 0 : index
    %c0_8 = arith.constant 0 : index
    %12 = vector.load %arg3[%c0_7, %c0_8] : memref<1x16xf32, #tpu.memory_space<vmem>>, vector<1x16xf32>
    %c0_9 = arith.constant 0 : index
    %c0_10 = arith.constant 0 : index
    %13 = vector.load %arg4[%c0_9, %c0_10] : memref<1x16xf32, #tpu.memory_space<vmem>>, vector<1x16xf32>
    %cst_11 = arith.constant dense<0.000000e+00> : vector<31xf32>
    %14 = vector.multi_reduction <add>, %11, %cst_11 [1] : vector<31x16xf32> to vector<31xf32>
    %15 = vector.shape_cast %14 : vector<31xf32> to vector<31x1xf32>
    %cst_12 = arith.constant 1.600000e+01 : f32
    %16 = vector.broadcast %cst_12 : f32 to vector<31x1xf32>
    %17 = arith.divf %15, %16 : vector<31x1xf32>
    %18 = vector.broadcast %17 : vector<31x1xf32> to vector<31x16xf32>
    %19 = arith.subf %11, %18 : vector<31x16xf32>
    %20 = arith.mulf %19, %19 : vector<31x16xf32>
    %cst_13 = arith.constant dense<0.000000e+00> : vector<31xf32>
    %21 = vector.multi_reduction <add>, %20, %cst_13 [1] : vector<31x16xf32> to vector<31xf32>
    %22 = vector.shape_cast %21 : vector<31xf32> to vector<31x1xf32>
    %cst_14 = arith.constant 1.600000e+01 : f32
    %23 = vector.broadcast %cst_14 : f32 to vector<31x1xf32>
    %24 = arith.divf %22, %23 : vector<31x1xf32>
    %25 = vector.broadcast %17 : vector<31x1xf32> to vector<31x16xf32>
    %26 = arith.subf %11, %25 : vector<31x16xf32>
    %cst_15 = arith.constant 9.99999974E-6 : f32
    %27 = vector.broadcast %cst_15 : f32 to vector<31x1xf32>
    %28 = arith.addf %24, %27 : vector<31x1xf32>
    %29 = math.rsqrt %28 : vector<31x1xf32>
    %30 = vector.broadcast %29 : vector<31x1xf32> to vector<31x16xf32>
    %31 = arith.mulf %26, %30 : vector<31x16xf32>
    %32 = vector.broadcast %12 : vector<1x16xf32> to vector<31x16xf32>
    %33 = arith.mulf %31, %32 : vector<31x16xf32>
    %34 = vector.broadcast %13 : vector<1x16xf32> to vector<31x16xf32>
    %35 = arith.addf %33, %34 : vector<31x16xf32>
    %36 = arith.truncf %35 : vector<31x16xf32> to vector<31x16xbf16>
    %c0_16 = arith.constant 0 : index
    %c0_17 = arith.constant 0 : index
    %37 = vector.load %arg5[%c0_16, %c0_17] : memref<16x32xbf16, #tpu.memory_space<vmem>>, vector<16x32xbf16>
    %cst_18 = arith.constant dense<0.000000e+00> : vector<31x32xf32>
    %38 = tpu.matmul %36, %37, %cst_18 {dimension_numbers = #tpu.dot_dimension_numbers<[1], [0], [0], [1], [0, 0, 1, 1], [], []>} : vector<31x16xbf16>, vector<16x32xbf16>, vector<31x32xf32> -> vector<31x32xf32>
    %c0_19 = arith.constant 0 : index
    %c0_20 = arith.constant 0 : index
    %39 = vector.load %arg6[%c0_19, %c0_20] : memref<1x32xf32, #tpu.memory_space<vmem>>, vector<1x32xf32>
    %40 = vector.broadcast %39 : vector<1x32xf32> to vector<31x32xf32>
    %41 = arith.addf %38, %40 : vector<31x32xf32>
    %42 = arith.truncf %41 : vector<31x32xf32> to vector<31x32xbf16>
    %c0_21 = arith.constant 0 : index
    %c0_22 = arith.constant 0 : index
    %c0_23 = arith.constant 0 : index
    %43 = vector.load %arg7[%c0_21, %c0_22, %c0_23] : memref<1x31x32xbf16, #tpu.memory_space<vmem>>, vector<1x31x32xbf16>
    %44 = vector.shape_cast %43 : vector<1x31x32xbf16> to vector<31x32xbf16>
    %45 = vector.shape_cast %42 : vector<31x32xbf16> to vector<1x31x32xbf16>
    tpu.vector_store %arg7[%c0_21, %c0_22, %c0_23], %45 {strides = array<i32>} : memref<1x31x32xbf16, #tpu.memory_space<vmem>>, vector<1x31x32xbf16>,
    return
  }
  func.func @transform_0(%arg0: i32) -> (i32, i32, i32) {
    %c0_i32 = arith.constant 0 : i32
    %c0_i32_0 = arith.constant 0 : i32
    %c0_i32_1 = arith.constant 0 : i32
    return %arg0, %c0_i32, %c0_i32_0 : i32, i32, i32
  }
  func.func @transform_1(%arg0: i32) -> (i32, i32) {
    %c0_i32 = arith.constant 0 : i32
    %c0_i32_0 = arith.constant 0 : i32
    %c0_i32_1 = arith.constant 0 : i32
    return %c0_i32, %c0_i32_0 : i32, i32
  }
  func.func @transform_2(%arg0: i32) -> (i32, i32) {
    %c0_i32 = arith.constant 0 : i32
    %c0_i32_0 = arith.constant 0 : i32
    %c0_i32_1 = arith.constant 0 : i32
    return %c0_i32, %c0_i32_0 : i32, i32
  }
  func.func @transform_3(%arg0: i32) -> (i32, i32) {
    %c0_i32 = arith.constant 0 : i32
    %c0_i32_0 = arith.constant 0 : i32
    %c0_i32_1 = arith.constant 0 : i32
    return %c0_i32, %c0_i32_0 : i32, i32
  }
  func.func @transform_4(%arg0: i32) -> (i32, i32) {
    %c0_i32 = arith.constant 0 : i32
    %c0_i32_0 = arith.constant 0 : i32
    %c0_i32_1 = arith.constant 0 : i32
    return %c0_i32, %c0_i32_0 : i32, i32
  }
  func.func @transform_5(%arg0: i32) -> (i32, i32) {
    %c0_i32 = arith.constant 0 : i32
    %c0_i32_0 = arith.constant 0 : i32
    %c0_i32_1 = arith.constant 0 : i32
    return %c0_i32, %c0_i32_0 : i32, i32
  }
  func.func @transform_6(%arg0: i32) -> (i32, i32, i32) {
    %c0_i32 = arith.constant 0 : i32
    %c0_i32_0 = arith.constant 0 : i32
    %c0_i32_1 = arith.constant 0 : i32
    return %arg0, %c0_i32, %c0_i32_0 : i32, i32, i32
  }
}

module attributes {stable_mosaic.version = 11 : i64} {
  func.func @_posconv_transformer_kernel(%arg0: i32, %arg1: memref<62x32xbf16, #tpu.memory_space<vmem>>, %arg2: memref<62x512xbf16, #tpu.memory_space<vmem>>, %arg3: memref<4x128x8xbf16, #tpu.memory_space<vmem>>, %arg4: memref<1x32xf32, #tpu.memory_space<vmem>>, %arg5: memref<62x62xf32, #tpu.memory_space<vmem>>, %arg6: memref<1x32xf32, #tpu.memory_space<vmem>>, %arg7: memref<1x32xf32, #tpu.memory_space<vmem>>, %arg8: memref<1x32x96xbf16, #tpu.memory_space<vmem>>, %arg9: memref<1x1x96xf32, #tpu.memory_space<vmem>>, %arg10: memref<1x32x32xbf16, #tpu.memory_space<vmem>>, %arg11: memref<1x1x32xf32, #tpu.memory_space<vmem>>, %arg12: memref<1x1x32xf32, #tpu.memory_space<vmem>>, %arg13: memref<1x1x32xf32, #tpu.memory_space<vmem>>, %arg14: memref<1x32x64xbf16, #tpu.memory_space<vmem>>, %arg15: memref<1x1x64xf32, #tpu.memory_space<vmem>>, %arg16: memref<1x64x32xbf16, #tpu.memory_space<vmem>>, %arg17: memref<1x1x32xf32, #tpu.memory_space<vmem>>, %arg18: memref<1x1x32xf32, #tpu.memory_space<vmem>>, %arg19: memref<1x1x32xf32, #tpu.memory_space<vmem>>, %arg20: memref<62x32xf32, #tpu.memory_space<vmem>>, %arg21: memref<62x32xf32, #tpu.memory_space<vmem>>, %arg22: memref<62x32xf32, #tpu.memory_space<vmem>>) attributes {dimension_semantics = [#tpu.dimension_semantics<arbitrary>], iteration_bounds = array<i64: 2>, scalar_prefetch = 0 : i64, scratch_operands = 2 : i64, tpu.core_type = #tpu.core_type<tc>, window_params = [{pipeline_mode = #tpu.pipeline_mode<synchronous>, transform_indices = @transform_0, window_bounds = array<i64: 62, 32>}, {pipeline_mode = #tpu.pipeline_mode<synchronous>, transform_indices = @transform_1, window_bounds = array<i64: 62, 512>}, {pipeline_mode = #tpu.pipeline_mode<synchronous>, transform_indices = @transform_2, window_bounds = array<i64: 4, 128, 8>}, {pipeline_mode = #tpu.pipeline_mode<synchronous>, transform_indices = @transform_3, window_bounds = array<i64: 1, 32>}, {pipeline_mode = #tpu.pipeline_mode<synchronous>, transform_indices = @transform_4, window_bounds = array<i64: 62, 62>}, {pipeline_mode = #tpu.pipeline_mode<synchronous>, transform_indices = @transform_5, window_bounds = array<i64: 1, 32>}, {pipeline_mode = #tpu.pipeline_mode<synchronous>, transform_indices = @transform_6, window_bounds = array<i64: 1, 32>}, {transform_indices = @transform_7, window_bounds = array<i64: 1, 32, 96>}, {transform_indices = @transform_8, window_bounds = array<i64: 1, 1, 96>}, {transform_indices = @transform_9, window_bounds = array<i64: 1, 32, 32>}, {transform_indices = @transform_10, window_bounds = array<i64: 1, 1, 32>}, {transform_indices = @transform_11, window_bounds = array<i64: 1, 1, 32>}, {transform_indices = @transform_12, window_bounds = array<i64: 1, 1, 32>}, {transform_indices = @transform_13, window_bounds = array<i64: 1, 32, 64>}, {transform_indices = @transform_14, window_bounds = array<i64: 1, 1, 64>}, {transform_indices = @transform_15, window_bounds = array<i64: 1, 64, 32>}, {transform_indices = @transform_16, window_bounds = array<i64: 1, 1, 32>}, {transform_indices = @transform_17, window_bounds = array<i64: 1, 1, 32>}, {transform_indices = @transform_18, window_bounds = array<i64: 1, 1, 32>}, {pipeline_mode = #tpu.pipeline_mode<synchronous>, transform_indices = @transform_19, window_bounds = array<i64: 62, 32>}]} {
    %c0_i32 = arith.constant 0 : i32
    %0 = arith.cmpi eq, %arg0, %c0_i32 : i32
    %1 = arith.extui %0 : i1 to i32
    %c0_i32_0 = arith.constant 0 : i32
    %2 = arith.cmpi ne, %1, %c0_i32_0 : i32
    scf.if %2 {
      %c0_83 = arith.constant 0 : index
      %c0_84 = arith.constant 0 : index
      %182 = vector.load %arg1[%c0_83, %c0_84] : memref<62x32xbf16, #tpu.memory_space<vmem>>, vector<62x32xbf16>
      %183 = arith.extf %182 : vector<62x32xbf16> to vector<62x32xf32>
      %c0_85 = arith.constant 0 : index
      %c0_86 = arith.constant 0 : index
      %184 = vector.load %arg2[%c0_85, %c0_86] : memref<62x512xbf16, #tpu.memory_space<vmem>>, vector<62x128xbf16>
      %c0_87 = arith.constant 0 : index
      %c0_88 = arith.constant 0 : index
      %c0_89 = arith.constant 0 : index
      %185 = vector.load %arg3[%c0_87, %c0_88, %c0_89] : memref<4x128x8xbf16, #tpu.memory_space<vmem>>, vector<1x128x8xbf16>
      %186 = vector.shape_cast %185 : vector<1x128x8xbf16> to vector<128x8xbf16>
      %cst_90 = arith.constant dense<0.000000e+00> : vector<62x8xf32>
      %187 = tpu.matmul %184, %186, %cst_90 {dimension_numbers = #tpu.dot_dimension_numbers<[1], [0], [0], [1], [0, 0, 1, 1], [], []>} : vector<62x128xbf16>, vector<128x8xbf16>, vector<62x8xf32> -> vector<62x8xf32>
      %c0_91 = arith.constant 0 : index
      %c0_92 = arith.constant 0 : index
      %188 = vector.load %arg22[%c0_91, %c0_92] : memref<62x32xf32, #tpu.memory_space<vmem>>, vector<62x8xf32>
      tpu.vector_store %arg22[%c0_91, %c0_92], %187 {strides = array<i32>} : memref<62x32xf32, #tpu.memory_space<vmem>>, vector<62x8xf32>,
      %c0_93 = arith.constant 0 : index
      %c128 = arith.constant 128 : index
      %189 = vector.load %arg2[%c0_93, %c128] : memref<62x512xbf16, #tpu.memory_space<vmem>>, vector<62x128xbf16>
      %c1 = arith.constant 1 : index
      %c0_94 = arith.constant 0 : index
      %c0_95 = arith.constant 0 : index
      %190 = vector.load %arg3[%c1, %c0_94, %c0_95] : memref<4x128x8xbf16, #tpu.memory_space<vmem>>, vector<1x128x8xbf16>
      %191 = vector.shape_cast %190 : vector<1x128x8xbf16> to vector<128x8xbf16>
      %cst_96 = arith.constant dense<0.000000e+00> : vector<62x8xf32>
      %192 = tpu.matmul %189, %191, %cst_96 {dimension_numbers = #tpu.dot_dimension_numbers<[1], [0], [0], [1], [0, 0, 1, 1], [], []>} : vector<62x128xbf16>, vector<128x8xbf16>, vector<62x8xf32> -> vector<62x8xf32>
      %c0_97 = arith.constant 0 : index
      %c8_98 = arith.constant 8 : index
      %193 = vector.load %arg22[%c0_97, %c8_98] : memref<62x32xf32, #tpu.memory_space<vmem>>, vector<62x8xf32>
      tpu.vector_store %arg22[%c0_97, %c8_98], %192 {strides = array<i32>} : memref<62x32xf32, #tpu.memory_space<vmem>>, vector<62x8xf32>,
      %c0_99 = arith.constant 0 : index
      %c256 = arith.constant 256 : index
      %194 = vector.load %arg2[%c0_99, %c256] : memref<62x512xbf16, #tpu.memory_space<vmem>>, vector<62x128xbf16>
      %c2 = arith.constant 2 : index
      %c0_100 = arith.constant 0 : index
      %c0_101 = arith.constant 0 : index
      %195 = vector.load %arg3[%c2, %c0_100, %c0_101] : memref<4x128x8xbf16, #tpu.memory_space<vmem>>, vector<1x128x8xbf16>
      %196 = vector.shape_cast %195 : vector<1x128x8xbf16> to vector<128x8xbf16>
      %cst_102 = arith.constant dense<0.000000e+00> : vector<62x8xf32>
      %197 = tpu.matmul %194, %196, %cst_102 {dimension_numbers = #tpu.dot_dimension_numbers<[1], [0], [0], [1], [0, 0, 1, 1], [], []>} : vector<62x128xbf16>, vector<128x8xbf16>, vector<62x8xf32> -> vector<62x8xf32>
      %c0_103 = arith.constant 0 : index
      %c16_104 = arith.constant 16 : index
      %198 = vector.load %arg22[%c0_103, %c16_104] : memref<62x32xf32, #tpu.memory_space<vmem>>, vector<62x8xf32>
      tpu.vector_store %arg22[%c0_103, %c16_104], %197 {strides = array<i32>} : memref<62x32xf32, #tpu.memory_space<vmem>>, vector<62x8xf32>,
      %c0_105 = arith.constant 0 : index
      %c384 = arith.constant 384 : index
      %199 = vector.load %arg2[%c0_105, %c384] : memref<62x512xbf16, #tpu.memory_space<vmem>>, vector<62x128xbf16>
      %c3 = arith.constant 3 : index
      %c0_106 = arith.constant 0 : index
      %c0_107 = arith.constant 0 : index
      %200 = vector.load %arg3[%c3, %c0_106, %c0_107] : memref<4x128x8xbf16, #tpu.memory_space<vmem>>, vector<1x128x8xbf16>
      %201 = vector.shape_cast %200 : vector<1x128x8xbf16> to vector<128x8xbf16>
      %cst_108 = arith.constant dense<0.000000e+00> : vector<62x8xf32>
      %202 = tpu.matmul %199, %201, %cst_108 {dimension_numbers = #tpu.dot_dimension_numbers<[1], [0], [0], [1], [0, 0, 1, 1], [], []>} : vector<62x128xbf16>, vector<128x8xbf16>, vector<62x8xf32> -> vector<62x8xf32>
      %c0_109 = arith.constant 0 : index
      %c24_110 = arith.constant 24 : index
      %203 = vector.load %arg22[%c0_109, %c24_110] : memref<62x32xf32, #tpu.memory_space<vmem>>, vector<62x8xf32>
      tpu.vector_store %arg22[%c0_109, %c24_110], %202 {strides = array<i32>} : memref<62x32xf32, #tpu.memory_space<vmem>>, vector<62x8xf32>,
      %c0_111 = arith.constant 0 : index
      %c0_112 = arith.constant 0 : index
      %204 = vector.load %arg22[%c0_111, %c0_112] : memref<62x32xf32, #tpu.memory_space<vmem>>, vector<62x32xf32>
      %c0_113 = arith.constant 0 : index
      %c0_114 = arith.constant 0 : index
      %205 = vector.load %arg4[%c0_113, %c0_114] : memref<1x32xf32, #tpu.memory_space<vmem>>, vector<1x32xf32>
      %206 = vector.broadcast %205 : vector<1x32xf32> to vector<62x32xf32>
      %207 = arith.addf %204, %206 : vector<62x32xf32>
      %cst_115 = arith.constant 5.000000e-01 : f32
      %208 = vector.broadcast %cst_115 : f32 to vector<62x32xf32>
      %209 = arith.mulf %208, %207 : vector<62x32xf32>
      %cst_116 = arith.constant 0.707106769 : f32
      %210 = vector.broadcast %cst_116 : f32 to vector<62x32xf32>
      %211 = arith.mulf %207, %210 : vector<62x32xf32>
      %212 = math.erf %211 : vector<62x32xf32>
      %cst_117 = arith.constant 1.000000e+00 : f32
      %213 = vector.broadcast %cst_117 : f32 to vector<62x32xf32>
      %214 = arith.addf %213, %212 : vector<62x32xf32>
      %215 = arith.mulf %209, %214 : vector<62x32xf32>
      %216 = arith.addf %183, %215 : vector<62x32xf32>
      %c0_118 = arith.constant 0 : index
      %c0_119 = arith.constant 0 : index
      %217 = vector.load %arg6[%c0_118, %c0_119] : memref<1x32xf32, #tpu.memory_space<vmem>>, vector<1x32xf32>
      %c0_120 = arith.constant 0 : index
      %c0_121 = arith.constant 0 : index
      %218 = vector.load %arg7[%c0_120, %c0_121] : memref<1x32xf32, #tpu.memory_space<vmem>>, vector<1x32xf32>
      %cst_122 = arith.constant dense<0.000000e+00> : vector<62xf32>
      %219 = vector.multi_reduction <add>, %216, %cst_122 [1] : vector<62x32xf32> to vector<62xf32>
      %220 = vector.shape_cast %219 : vector<62xf32> to vector<62x1xf32>
      %cst_123 = arith.constant 3.200000e+01 : f32
      %221 = vector.broadcast %cst_123 : f32 to vector<62x1xf32>
      %222 = arith.divf %220, %221 : vector<62x1xf32>
      %223 = vector.broadcast %222 : vector<62x1xf32> to vector<62x32xf32>
      %224 = arith.subf %216, %223 : vector<62x32xf32>
      %225 = arith.mulf %224, %224 : vector<62x32xf32>
      %cst_124 = arith.constant dense<0.000000e+00> : vector<62xf32>
      %226 = vector.multi_reduction <add>, %225, %cst_124 [1] : vector<62x32xf32> to vector<62xf32>
      %227 = vector.shape_cast %226 : vector<62xf32> to vector<62x1xf32>
      %cst_125 = arith.constant 3.200000e+01 : f32
      %228 = vector.broadcast %cst_125 : f32 to vector<62x1xf32>
      %229 = arith.divf %227, %228 : vector<62x1xf32>
      %230 = vector.broadcast %222 : vector<62x1xf32> to vector<62x32xf32>
      %231 = arith.subf %216, %230 : vector<62x32xf32>
      %cst_126 = arith.constant 9.99999974E-6 : f32
      %232 = vector.broadcast %cst_126 : f32 to vector<62x1xf32>
      %233 = arith.addf %229, %232 : vector<62x1xf32>
      %234 = math.rsqrt %233 : vector<62x1xf32>
      %235 = vector.broadcast %234 : vector<62x1xf32> to vector<62x32xf32>
      %236 = arith.mulf %231, %235 : vector<62x32xf32>
      %237 = vector.broadcast %217 : vector<1x32xf32> to vector<62x32xf32>
      %238 = arith.mulf %236, %237 : vector<62x32xf32>
      %239 = vector.broadcast %218 : vector<1x32xf32> to vector<62x32xf32>
      %240 = arith.addf %238, %239 : vector<62x32xf32>
      %c0_127 = arith.constant 0 : index
      %c0_128 = arith.constant 0 : index
      %241 = vector.load %arg21[%c0_127, %c0_128] : memref<62x32xf32, #tpu.memory_space<vmem>>, vector<62x32xf32>
      tpu.vector_store %arg21[%c0_127, %c0_128], %240 {strides = array<i32>} : memref<62x32xf32, #tpu.memory_space<vmem>>, vector<62x32xf32>,
    } else {
    }
    %c0 = arith.constant 0 : index
    %c0_1 = arith.constant 0 : index
    %3 = vector.load %arg21[%c0, %c0_1] : memref<62x32xf32, #tpu.memory_space<vmem>>, vector<62x32xf32>
    %4 = arith.truncf %3 : vector<62x32xf32> to vector<62x32xbf16>
    %c0_2 = arith.constant 0 : index
    %c0_3 = arith.constant 0 : index
    %c0_4 = arith.constant 0 : index
    %5 = vector.load %arg8[%c0_2, %c0_3, %c0_4] : memref<1x32x96xbf16, #tpu.memory_space<vmem>>, vector<1x32x96xbf16>
    %6 = vector.shape_cast %5 : vector<1x32x96xbf16> to vector<32x96xbf16>
    %cst = arith.constant dense<0.000000e+00> : vector<62x96xf32>
    %7 = tpu.matmul %4, %6, %cst {dimension_numbers = #tpu.dot_dimension_numbers<[1], [0], [0], [1], [0, 0, 1, 1], [], []>} : vector<62x32xbf16>, vector<32x96xbf16>, vector<62x96xf32> -> vector<62x96xf32>
    %c0_5 = arith.constant 0 : index
    %c0_6 = arith.constant 0 : index
    %c0_7 = arith.constant 0 : index
    %8 = vector.load %arg9[%c0_5, %c0_6, %c0_7] : memref<1x1x96xf32, #tpu.memory_space<vmem>>, vector<1x1x96xf32>
    %9 = vector.shape_cast %8 : vector<1x1x96xf32> to vector<1x96xf32>
    %10 = vector.broadcast %9 : vector<1x96xf32> to vector<62x96xf32>
    %11 = arith.addf %7, %10 : vector<62x96xf32>
    %c0_8 = arith.constant 0 : index
    %c0_9 = arith.constant 0 : index
    %12 = vector.load %arg5[%c0_8, %c0_9] : memref<62x62xf32, #tpu.memory_space<vmem>>, vector<62x62xf32>
    %13 = vector.extract_strided_slice %11 {offsets = [0, 0], sizes = [62, 8], strides = [1, 1]} : vector<62x96xf32> to vector<62x8xf32>
    %14 = vector.extract_strided_slice %11 {offsets = [0, 32], sizes = [62, 8], strides = [1, 1]} : vector<62x96xf32> to vector<62x8xf32>
    %15 = vector.extract_strided_slice %11 {offsets = [0, 64], sizes = [62, 8], strides = [1, 1]} : vector<62x96xf32> to vector<62x8xf32>
    %16 = arith.truncf %13 : vector<62x8xf32> to vector<62x8xbf16>
    %17 = arith.truncf %14 : vector<62x8xf32> to vector<62x8xbf16>
    %cst_10 = arith.constant dense<0.000000e+00> : vector<62x62xf32>
    %18 = tpu.matmul %16, %17, %cst_10 {dimension_numbers = #tpu.dot_dimension_numbers<[1], [1], [0], [0], [0, 0, 1, 0], [], []>} : vector<62x8xbf16>, vector<62x8xbf16>, vector<62x62xf32> -> vector<62x62xf32>
    %19 = arith.addf %18, %12 : vector<62x62xf32>
    %cst_11 = arith.constant dense<0xFF800000> : vector<62xf32>
    %20 = vector.multi_reduction <maximumf>, %19, %cst_11 [1] : vector<62x62xf32> to vector<62xf32>
    %21 = vector.shape_cast %20 : vector<62xf32> to vector<62x1xf32>
    %22 = vector.broadcast %21 : vector<62x1xf32> to vector<62x62xf32>
    %23 = arith.subf %19, %22 : vector<62x62xf32>
    %24 = math.exp %23 : vector<62x62xf32>
    %cst_12 = arith.constant dense<0.000000e+00> : vector<62xf32>
    %25 = vector.multi_reduction <add>, %24, %cst_12 [1] : vector<62x62xf32> to vector<62xf32>
    %26 = vector.shape_cast %25 : vector<62xf32> to vector<62x1xf32>
    %27 = vector.broadcast %26 : vector<62x1xf32> to vector<62x62xf32>
    %28 = arith.divf %24, %27 : vector<62x62xf32>
    %29 = arith.truncf %28 : vector<62x62xf32> to vector<62x62xbf16>
    %30 = arith.truncf %15 : vector<62x8xf32> to vector<62x8xbf16>
    %cst_13 = arith.constant dense<0.000000e+00> : vector<62x8xf32>
    %31 = tpu.matmul %29, %30, %cst_13 {dimension_numbers = #tpu.dot_dimension_numbers<[1], [0], [0], [1], [0, 0, 1, 1], [], []>} : vector<62x62xbf16>, vector<62x8xbf16>, vector<62x8xf32> -> vector<62x8xf32>
    %c0_14 = arith.constant 0 : index
    %c0_15 = arith.constant 0 : index
    %32 = vector.load %arg22[%c0_14, %c0_15] : memref<62x32xf32, #tpu.memory_space<vmem>>, vector<62x8xf32>
    tpu.vector_store %arg22[%c0_14, %c0_15], %31 {strides = array<i32>} : memref<62x32xf32, #tpu.memory_space<vmem>>, vector<62x8xf32>,
    %33 = vector.extract_strided_slice %11 {offsets = [0, 8], sizes = [62, 8], strides = [1, 1]} : vector<62x96xf32> to vector<62x8xf32>
    %34 = vector.extract_strided_slice %11 {offsets = [0, 40], sizes = [62, 8], strides = [1, 1]} : vector<62x96xf32> to vector<62x8xf32>
    %35 = vector.extract_strided_slice %11 {offsets = [0, 72], sizes = [62, 8], strides = [1, 1]} : vector<62x96xf32> to vector<62x8xf32>
    %36 = arith.truncf %33 : vector<62x8xf32> to vector<62x8xbf16>
    %37 = arith.truncf %34 : vector<62x8xf32> to vector<62x8xbf16>
    %cst_16 = arith.constant dense<0.000000e+00> : vector<62x62xf32>
    %38 = tpu.matmul %36, %37, %cst_16 {dimension_numbers = #tpu.dot_dimension_numbers<[1], [1], [0], [0], [0, 0, 1, 0], [], []>} : vector<62x8xbf16>, vector<62x8xbf16>, vector<62x62xf32> -> vector<62x62xf32>
    %39 = arith.addf %38, %12 : vector<62x62xf32>
    %cst_17 = arith.constant dense<0xFF800000> : vector<62xf32>
    %40 = vector.multi_reduction <maximumf>, %39, %cst_17 [1] : vector<62x62xf32> to vector<62xf32>
    %41 = vector.shape_cast %40 : vector<62xf32> to vector<62x1xf32>
    %42 = vector.broadcast %41 : vector<62x1xf32> to vector<62x62xf32>
    %43 = arith.subf %39, %42 : vector<62x62xf32>
    %44 = math.exp %43 : vector<62x62xf32>
    %cst_18 = arith.constant dense<0.000000e+00> : vector<62xf32>
    %45 = vector.multi_reduction <add>, %44, %cst_18 [1] : vector<62x62xf32> to vector<62xf32>
    %46 = vector.shape_cast %45 : vector<62xf32> to vector<62x1xf32>
    %47 = vector.broadcast %46 : vector<62x1xf32> to vector<62x62xf32>
    %48 = arith.divf %44, %47 : vector<62x62xf32>
    %49 = arith.truncf %48 : vector<62x62xf32> to vector<62x62xbf16>
    %50 = arith.truncf %35 : vector<62x8xf32> to vector<62x8xbf16>
    %cst_19 = arith.constant dense<0.000000e+00> : vector<62x8xf32>
    %51 = tpu.matmul %49, %50, %cst_19 {dimension_numbers = #tpu.dot_dimension_numbers<[1], [0], [0], [1], [0, 0, 1, 1], [], []>} : vector<62x62xbf16>, vector<62x8xbf16>, vector<62x8xf32> -> vector<62x8xf32>
    %c0_20 = arith.constant 0 : index
    %c8 = arith.constant 8 : index
    %52 = vector.load %arg22[%c0_20, %c8] : memref<62x32xf32, #tpu.memory_space<vmem>>, vector<62x8xf32>
    tpu.vector_store %arg22[%c0_20, %c8], %51 {strides = array<i32>} : memref<62x32xf32, #tpu.memory_space<vmem>>, vector<62x8xf32>,
    %53 = vector.extract_strided_slice %11 {offsets = [0, 16], sizes = [62, 8], strides = [1, 1]} : vector<62x96xf32> to vector<62x8xf32>
    %54 = vector.extract_strided_slice %11 {offsets = [0, 48], sizes = [62, 8], strides = [1, 1]} : vector<62x96xf32> to vector<62x8xf32>
    %55 = vector.extract_strided_slice %11 {offsets = [0, 80], sizes = [62, 8], strides = [1, 1]} : vector<62x96xf32> to vector<62x8xf32>
    %56 = arith.truncf %53 : vector<62x8xf32> to vector<62x8xbf16>
    %57 = arith.truncf %54 : vector<62x8xf32> to vector<62x8xbf16>
    %cst_21 = arith.constant dense<0.000000e+00> : vector<62x62xf32>
    %58 = tpu.matmul %56, %57, %cst_21 {dimension_numbers = #tpu.dot_dimension_numbers<[1], [1], [0], [0], [0, 0, 1, 0], [], []>} : vector<62x8xbf16>, vector<62x8xbf16>, vector<62x62xf32> -> vector<62x62xf32>
    %59 = arith.addf %58, %12 : vector<62x62xf32>
    %cst_22 = arith.constant dense<0xFF800000> : vector<62xf32>
    %60 = vector.multi_reduction <maximumf>, %59, %cst_22 [1] : vector<62x62xf32> to vector<62xf32>
    %61 = vector.shape_cast %60 : vector<62xf32> to vector<62x1xf32>
    %62 = vector.broadcast %61 : vector<62x1xf32> to vector<62x62xf32>
    %63 = arith.subf %59, %62 : vector<62x62xf32>
    %64 = math.exp %63 : vector<62x62xf32>
    %cst_23 = arith.constant dense<0.000000e+00> : vector<62xf32>
    %65 = vector.multi_reduction <add>, %64, %cst_23 [1] : vector<62x62xf32> to vector<62xf32>
    %66 = vector.shape_cast %65 : vector<62xf32> to vector<62x1xf32>
    %67 = vector.broadcast %66 : vector<62x1xf32> to vector<62x62xf32>
    %68 = arith.divf %64, %67 : vector<62x62xf32>
    %69 = arith.truncf %68 : vector<62x62xf32> to vector<62x62xbf16>
    %70 = arith.truncf %55 : vector<62x8xf32> to vector<62x8xbf16>
    %cst_24 = arith.constant dense<0.000000e+00> : vector<62x8xf32>
    %71 = tpu.matmul %69, %70, %cst_24 {dimension_numbers = #tpu.dot_dimension_numbers<[1], [0], [0], [1], [0, 0, 1, 1], [], []>} : vector<62x62xbf16>, vector<62x8xbf16>, vector<62x8xf32> -> vector<62x8xf32>
    %c0_25 = arith.constant 0 : index
    %c16 = arith.constant 16 : index
    %72 = vector.load %arg22[%c0_25, %c16] : memref<62x32xf32, #tpu.memory_space<vmem>>, vector<62x8xf32>
    tpu.vector_store %arg22[%c0_25, %c16], %71 {strides = array<i32>} : memref<62x32xf32, #tpu.memory_space<vmem>>, vector<62x8xf32>,
    %73 = vector.extract_strided_slice %11 {offsets = [0, 24], sizes = [62, 8], strides = [1, 1]} : vector<62x96xf32> to vector<62x8xf32>
    %74 = vector.extract_strided_slice %11 {offsets = [0, 56], sizes = [62, 8], strides = [1, 1]} : vector<62x96xf32> to vector<62x8xf32>
    %75 = vector.extract_strided_slice %11 {offsets = [0, 88], sizes = [62, 8], strides = [1, 1]} : vector<62x96xf32> to vector<62x8xf32>
    %76 = arith.truncf %73 : vector<62x8xf32> to vector<62x8xbf16>
    %77 = arith.truncf %74 : vector<62x8xf32> to vector<62x8xbf16>
    %cst_26 = arith.constant dense<0.000000e+00> : vector<62x62xf32>
    %78 = tpu.matmul %76, %77, %cst_26 {dimension_numbers = #tpu.dot_dimension_numbers<[1], [1], [0], [0], [0, 0, 1, 0], [], []>} : vector<62x8xbf16>, vector<62x8xbf16>, vector<62x62xf32> -> vector<62x62xf32>
    %79 = arith.addf %78, %12 : vector<62x62xf32>
    %cst_27 = arith.constant dense<0xFF800000> : vector<62xf32>
    %80 = vector.multi_reduction <maximumf>, %79, %cst_27 [1] : vector<62x62xf32> to vector<62xf32>
    %81 = vector.shape_cast %80 : vector<62xf32> to vector<62x1xf32>
    %82 = vector.broadcast %81 : vector<62x1xf32> to vector<62x62xf32>
    %83 = arith.subf %79, %82 : vector<62x62xf32>
    %84 = math.exp %83 : vector<62x62xf32>
    %cst_28 = arith.constant dense<0.000000e+00> : vector<62xf32>
    %85 = vector.multi_reduction <add>, %84, %cst_28 [1] : vector<62x62xf32> to vector<62xf32>
    %86 = vector.shape_cast %85 : vector<62xf32> to vector<62x1xf32>
    %87 = vector.broadcast %86 : vector<62x1xf32> to vector<62x62xf32>
    %88 = arith.divf %84, %87 : vector<62x62xf32>
    %89 = arith.truncf %88 : vector<62x62xf32> to vector<62x62xbf16>
    %90 = arith.truncf %75 : vector<62x8xf32> to vector<62x8xbf16>
    %cst_29 = arith.constant dense<0.000000e+00> : vector<62x8xf32>
    %91 = tpu.matmul %89, %90, %cst_29 {dimension_numbers = #tpu.dot_dimension_numbers<[1], [0], [0], [1], [0, 0, 1, 1], [], []>} : vector<62x62xbf16>, vector<62x8xbf16>, vector<62x8xf32> -> vector<62x8xf32>
    %c0_30 = arith.constant 0 : index
    %c24 = arith.constant 24 : index
    %92 = vector.load %arg22[%c0_30, %c24] : memref<62x32xf32, #tpu.memory_space<vmem>>, vector<62x8xf32>
    tpu.vector_store %arg22[%c0_30, %c24], %91 {strides = array<i32>} : memref<62x32xf32, #tpu.memory_space<vmem>>, vector<62x8xf32>,
    %c0_31 = arith.constant 0 : index
    %c0_32 = arith.constant 0 : index
    %93 = vector.load %arg22[%c0_31, %c0_32] : memref<62x32xf32, #tpu.memory_space<vmem>>, vector<62x32xf32>
    %94 = arith.truncf %93 : vector<62x32xf32> to vector<62x32xbf16>
    %c0_33 = arith.constant 0 : index
    %c0_34 = arith.constant 0 : index
    %c0_35 = arith.constant 0 : index
    %95 = vector.load %arg10[%c0_33, %c0_34, %c0_35] : memref<1x32x32xbf16, #tpu.memory_space<vmem>>, vector<1x32x32xbf16>
    %96 = vector.shape_cast %95 : vector<1x32x32xbf16> to vector<32x32xbf16>
    %cst_36 = arith.constant dense<0.000000e+00> : vector<62x32xf32>
    %97 = tpu.matmul %94, %96, %cst_36 {dimension_numbers = #tpu.dot_dimension_numbers<[1], [0], [0], [1], [0, 0, 1, 1], [], []>} : vector<62x32xbf16>, vector<32x32xbf16>, vector<62x32xf32> -> vector<62x32xf32>
    %c0_37 = arith.constant 0 : index
    %c0_38 = arith.constant 0 : index
    %c0_39 = arith.constant 0 : index
    %98 = vector.load %arg11[%c0_37, %c0_38, %c0_39] : memref<1x1x32xf32, #tpu.memory_space<vmem>>, vector<1x1x32xf32>
    %99 = vector.shape_cast %98 : vector<1x1x32xf32> to vector<1x32xf32>
    %100 = vector.broadcast %99 : vector<1x32xf32> to vector<62x32xf32>
    %101 = arith.addf %97, %100 : vector<62x32xf32>
    %102 = arith.addf %3, %101 : vector<62x32xf32>
    %c0_40 = arith.constant 0 : index
    %c0_41 = arith.constant 0 : index
    %c0_42 = arith.constant 0 : index
    %103 = vector.load %arg12[%c0_40, %c0_41, %c0_42] : memref<1x1x32xf32, #tpu.memory_space<vmem>>, vector<1x1x32xf32>
    %104 = vector.shape_cast %103 : vector<1x1x32xf32> to vector<1x32xf32>
    %c0_43 = arith.constant 0 : index
    %c0_44 = arith.constant 0 : index
    %c0_45 = arith.constant 0 : index
    %105 = vector.load %arg13[%c0_43, %c0_44, %c0_45] : memref<1x1x32xf32, #tpu.memory_space<vmem>>, vector<1x1x32xf32>
    %106 = vector.shape_cast %105 : vector<1x1x32xf32> to vector<1x32xf32>
    %cst_46 = arith.constant dense<0.000000e+00> : vector<62xf32>
    %107 = vector.multi_reduction <add>, %102, %cst_46 [1] : vector<62x32xf32> to vector<62xf32>
    %108 = vector.shape_cast %107 : vector<62xf32> to vector<62x1xf32>
    %cst_47 = arith.constant 3.200000e+01 : f32
    %109 = vector.broadcast %cst_47 : f32 to vector<62x1xf32>
    %110 = arith.divf %108, %109 : vector<62x1xf32>
    %111 = vector.broadcast %110 : vector<62x1xf32> to vector<62x32xf32>
    %112 = arith.subf %102, %111 : vector<62x32xf32>
    %113 = arith.mulf %112, %112 : vector<62x32xf32>
    %cst_48 = arith.constant dense<0.000000e+00> : vector<62xf32>
    %114 = vector.multi_reduction <add>, %113, %cst_48 [1] : vector<62x32xf32> to vector<62xf32>
    %115 = vector.shape_cast %114 : vector<62xf32> to vector<62x1xf32>
    %cst_49 = arith.constant 3.200000e+01 : f32
    %116 = vector.broadcast %cst_49 : f32 to vector<62x1xf32>
    %117 = arith.divf %115, %116 : vector<62x1xf32>
    %118 = vector.broadcast %110 : vector<62x1xf32> to vector<62x32xf32>
    %119 = arith.subf %102, %118 : vector<62x32xf32>
    %cst_50 = arith.constant 9.99999974E-6 : f32
    %120 = vector.broadcast %cst_50 : f32 to vector<62x1xf32>
    %121 = arith.addf %117, %120 : vector<62x1xf32>
    %122 = math.rsqrt %121 : vector<62x1xf32>
    %123 = vector.broadcast %122 : vector<62x1xf32> to vector<62x32xf32>
    %124 = arith.mulf %119, %123 : vector<62x32xf32>
    %125 = vector.broadcast %104 : vector<1x32xf32> to vector<62x32xf32>
    %126 = arith.mulf %124, %125 : vector<62x32xf32>
    %127 = vector.broadcast %106 : vector<1x32xf32> to vector<62x32xf32>
    %128 = arith.addf %126, %127 : vector<62x32xf32>
    %129 = arith.truncf %128 : vector<62x32xf32> to vector<62x32xbf16>
    %c0_51 = arith.constant 0 : index
    %c0_52 = arith.constant 0 : index
    %c0_53 = arith.constant 0 : index
    %130 = vector.load %arg14[%c0_51, %c0_52, %c0_53] : memref<1x32x64xbf16, #tpu.memory_space<vmem>>, vector<1x32x64xbf16>
    %131 = vector.shape_cast %130 : vector<1x32x64xbf16> to vector<32x64xbf16>
    %cst_54 = arith.constant dense<0.000000e+00> : vector<62x64xf32>
    %132 = tpu.matmul %129, %131, %cst_54 {dimension_numbers = #tpu.dot_dimension_numbers<[1], [0], [0], [1], [0, 0, 1, 1], [], []>} : vector<62x32xbf16>, vector<32x64xbf16>, vector<62x64xf32> -> vector<62x64xf32>
    %c0_55 = arith.constant 0 : index
    %c0_56 = arith.constant 0 : index
    %c0_57 = arith.constant 0 : index
    %133 = vector.load %arg15[%c0_55, %c0_56, %c0_57] : memref<1x1x64xf32, #tpu.memory_space<vmem>>, vector<1x1x64xf32>
    %134 = vector.shape_cast %133 : vector<1x1x64xf32> to vector<1x64xf32>
    %135 = vector.broadcast %134 : vector<1x64xf32> to vector<62x64xf32>
    %136 = arith.addf %132, %135 : vector<62x64xf32>
    %cst_58 = arith.constant 5.000000e-01 : f32
    %137 = vector.broadcast %cst_58 : f32 to vector<62x64xf32>
    %138 = arith.mulf %137, %136 : vector<62x64xf32>
    %cst_59 = arith.constant 0.707106769 : f32
    %139 = vector.broadcast %cst_59 : f32 to vector<62x64xf32>
    %140 = arith.mulf %136, %139 : vector<62x64xf32>
    %141 = math.erf %140 : vector<62x64xf32>
    %cst_60 = arith.constant 1.000000e+00 : f32
    %142 = vector.broadcast %cst_60 : f32 to vector<62x64xf32>
    %143 = arith.addf %142, %141 : vector<62x64xf32>
    %144 = arith.mulf %138, %143 : vector<62x64xf32>
    %145 = arith.truncf %144 : vector<62x64xf32> to vector<62x64xbf16>
    %c0_61 = arith.constant 0 : index
    %c0_62 = arith.constant 0 : index
    %c0_63 = arith.constant 0 : index
    %146 = vector.load %arg16[%c0_61, %c0_62, %c0_63] : memref<1x64x32xbf16, #tpu.memory_space<vmem>>, vector<1x64x32xbf16>
    %147 = vector.shape_cast %146 : vector<1x64x32xbf16> to vector<64x32xbf16>
    %cst_64 = arith.constant dense<0.000000e+00> : vector<62x32xf32>
    %148 = tpu.matmul %145, %147, %cst_64 {dimension_numbers = #tpu.dot_dimension_numbers<[1], [0], [0], [1], [0, 0, 1, 1], [], []>} : vector<62x64xbf16>, vector<64x32xbf16>, vector<62x32xf32> -> vector<62x32xf32>
    %c0_65 = arith.constant 0 : index
    %c0_66 = arith.constant 0 : index
    %c0_67 = arith.constant 0 : index
    %149 = vector.load %arg17[%c0_65, %c0_66, %c0_67] : memref<1x1x32xf32, #tpu.memory_space<vmem>>, vector<1x1x32xf32>
    %150 = vector.shape_cast %149 : vector<1x1x32xf32> to vector<1x32xf32>
    %151 = vector.broadcast %150 : vector<1x32xf32> to vector<62x32xf32>
    %152 = arith.addf %148, %151 : vector<62x32xf32>
    %153 = arith.addf %128, %152 : vector<62x32xf32>
    %c0_68 = arith.constant 0 : index
    %c0_69 = arith.constant 0 : index
    %c0_70 = arith.constant 0 : index
    %154 = vector.load %arg18[%c0_68, %c0_69, %c0_70] : memref<1x1x32xf32, #tpu.memory_space<vmem>>, vector<1x1x32xf32>
    %155 = vector.shape_cast %154 : vector<1x1x32xf32> to vector<1x32xf32>
    %c0_71 = arith.constant 0 : index
    %c0_72 = arith.constant 0 : index
    %c0_73 = arith.constant 0 : index
    %156 = vector.load %arg19[%c0_71, %c0_72, %c0_73] : memref<1x1x32xf32, #tpu.memory_space<vmem>>, vector<1x1x32xf32>
    %157 = vector.shape_cast %156 : vector<1x1x32xf32> to vector<1x32xf32>
    %cst_74 = arith.constant dense<0.000000e+00> : vector<62xf32>
    %158 = vector.multi_reduction <add>, %153, %cst_74 [1] : vector<62x32xf32> to vector<62xf32>
    %159 = vector.shape_cast %158 : vector<62xf32> to vector<62x1xf32>
    %cst_75 = arith.constant 3.200000e+01 : f32
    %160 = vector.broadcast %cst_75 : f32 to vector<62x1xf32>
    %161 = arith.divf %159, %160 : vector<62x1xf32>
    %162 = vector.broadcast %161 : vector<62x1xf32> to vector<62x32xf32>
    %163 = arith.subf %153, %162 : vector<62x32xf32>
    %164 = arith.mulf %163, %163 : vector<62x32xf32>
    %cst_76 = arith.constant dense<0.000000e+00> : vector<62xf32>
    %165 = vector.multi_reduction <add>, %164, %cst_76 [1] : vector<62x32xf32> to vector<62xf32>
    %166 = vector.shape_cast %165 : vector<62xf32> to vector<62x1xf32>
    %cst_77 = arith.constant 3.200000e+01 : f32
    %167 = vector.broadcast %cst_77 : f32 to vector<62x1xf32>
    %168 = arith.divf %166, %167 : vector<62x1xf32>
    %169 = vector.broadcast %161 : vector<62x1xf32> to vector<62x32xf32>
    %170 = arith.subf %153, %169 : vector<62x32xf32>
    %cst_78 = arith.constant 9.99999974E-6 : f32
    %171 = vector.broadcast %cst_78 : f32 to vector<62x1xf32>
    %172 = arith.addf %168, %171 : vector<62x1xf32>
    %173 = math.rsqrt %172 : vector<62x1xf32>
    %174 = vector.broadcast %173 : vector<62x1xf32> to vector<62x32xf32>
    %175 = arith.mulf %170, %174 : vector<62x32xf32>
    %176 = vector.broadcast %155 : vector<1x32xf32> to vector<62x32xf32>
    %177 = arith.mulf %175, %176 : vector<62x32xf32>
    %178 = vector.broadcast %157 : vector<1x32xf32> to vector<62x32xf32>
    %179 = arith.addf %177, %178 : vector<62x32xf32>
    %c0_79 = arith.constant 0 : index
    %c0_80 = arith.constant 0 : index
    %180 = vector.load %arg21[%c0_79, %c0_80] : memref<62x32xf32, #tpu.memory_space<vmem>>, vector<62x32xf32>
    tpu.vector_store %arg21[%c0_79, %c0_80], %179 {strides = array<i32>} : memref<62x32xf32, #tpu.memory_space<vmem>>, vector<62x32xf32>,
    %c0_81 = arith.constant 0 : index
    %c0_82 = arith.constant 0 : index
    %181 = vector.load %arg20[%c0_81, %c0_82] : memref<62x32xf32, #tpu.memory_space<vmem>>, vector<62x32xf32>
    tpu.vector_store %arg20[%c0_81, %c0_82], %179 {strides = array<i32>} : memref<62x32xf32, #tpu.memory_space<vmem>>, vector<62x32xf32>,
    return
  }
  func.func @transform_0(%arg0: i32) -> (i32, i32) {
    %c0_i32 = arith.constant 0 : i32
    %c0_i32_0 = arith.constant 0 : i32
    %c0_i32_1 = arith.constant 0 : i32
    return %c0_i32, %c0_i32_0 : i32, i32
  }
  func.func @transform_1(%arg0: i32) -> (i32, i32) {
    %c0_i32 = arith.constant 0 : i32
    %c0_i32_0 = arith.constant 0 : i32
    %c0_i32_1 = arith.constant 0 : i32
    return %c0_i32, %c0_i32_0 : i32, i32
  }
  func.func @transform_2(%arg0: i32) -> (i32, i32, i32) {
    %c0_i32 = arith.constant 0 : i32
    %c0_i32_0 = arith.constant 0 : i32
    %c0_i32_1 = arith.constant 0 : i32
    %c0_i32_2 = arith.constant 0 : i32
    return %c0_i32, %c0_i32_0, %c0_i32_1 : i32, i32, i32
  }
  func.func @transform_3(%arg0: i32) -> (i32, i32) {
    %c0_i32 = arith.constant 0 : i32
    %c0_i32_0 = arith.constant 0 : i32
    %c0_i32_1 = arith.constant 0 : i32
    return %c0_i32, %c0_i32_0 : i32, i32
  }
  func.func @transform_4(%arg0: i32) -> (i32, i32) {
    %c0_i32 = arith.constant 0 : i32
    %c0_i32_0 = arith.constant 0 : i32
    %c0_i32_1 = arith.constant 0 : i32
    return %c0_i32, %c0_i32_0 : i32, i32
  }
  func.func @transform_5(%arg0: i32) -> (i32, i32) {
    %c0_i32 = arith.constant 0 : i32
    %c0_i32_0 = arith.constant 0 : i32
    %c0_i32_1 = arith.constant 0 : i32
    return %c0_i32, %c0_i32_0 : i32, i32
  }
  func.func @transform_6(%arg0: i32) -> (i32, i32) {
    %c0_i32 = arith.constant 0 : i32
    %c0_i32_0 = arith.constant 0 : i32
    %c0_i32_1 = arith.constant 0 : i32
    return %c0_i32, %c0_i32_0 : i32, i32
  }
  func.func @transform_7(%arg0: i32) -> (i32, i32, i32) {
    %c0_i32 = arith.constant 0 : i32
    %c0_i32_0 = arith.constant 0 : i32
    %c0_i32_1 = arith.constant 0 : i32
    return %arg0, %c0_i32, %c0_i32_0 : i32, i32, i32
  }
  func.func @transform_8(%arg0: i32) -> (i32, i32, i32) {
    %c0_i32 = arith.constant 0 : i32
    %c0_i32_0 = arith.constant 0 : i32
    %c0_i32_1 = arith.constant 0 : i32
    return %arg0, %c0_i32, %c0_i32_0 : i32, i32, i32
  }
  func.func @transform_9(%arg0: i32) -> (i32, i32, i32) {
    %c0_i32 = arith.constant 0 : i32
    %c0_i32_0 = arith.constant 0 : i32
    %c0_i32_1 = arith.constant 0 : i32
    return %arg0, %c0_i32, %c0_i32_0 : i32, i32, i32
  }
  func.func @transform_10(%arg0: i32) -> (i32, i32, i32) {
    %c0_i32 = arith.constant 0 : i32
    %c0_i32_0 = arith.constant 0 : i32
    %c0_i32_1 = arith.constant 0 : i32
    return %arg0, %c0_i32, %c0_i32_0 : i32, i32, i32
  }
  func.func @transform_11(%arg0: i32) -> (i32, i32, i32) {
    %c0_i32 = arith.constant 0 : i32
    %c0_i32_0 = arith.constant 0 : i32
    %c0_i32_1 = arith.constant 0 : i32
    return %arg0, %c0_i32, %c0_i32_0 : i32, i32, i32
  }
  func.func @transform_12(%arg0: i32) -> (i32, i32, i32) {
    %c0_i32 = arith.constant 0 : i32
    %c0_i32_0 = arith.constant 0 : i32
    %c0_i32_1 = arith.constant 0 : i32
    return %arg0, %c0_i32, %c0_i32_0 : i32, i32, i32
  }
  func.func @transform_13(%arg0: i32) -> (i32, i32, i32) {
    %c0_i32 = arith.constant 0 : i32
    %c0_i32_0 = arith.constant 0 : i32
    %c0_i32_1 = arith.constant 0 : i32
    return %arg0, %c0_i32, %c0_i32_0 : i32, i32, i32
  }
  func.func @transform_14(%arg0: i32) -> (i32, i32, i32) {
    %c0_i32 = arith.constant 0 : i32
    %c0_i32_0 = arith.constant 0 : i32
    %c0_i32_1 = arith.constant 0 : i32
    return %arg0, %c0_i32, %c0_i32_0 : i32, i32, i32
  }
  func.func @transform_15(%arg0: i32) -> (i32, i32, i32) {
    %c0_i32 = arith.constant 0 : i32
    %c0_i32_0 = arith.constant 0 : i32
    %c0_i32_1 = arith.constant 0 : i32
    return %arg0, %c0_i32, %c0_i32_0 : i32, i32, i32
  }
  func.func @transform_16(%arg0: i32) -> (i32, i32, i32) {
    %c0_i32 = arith.constant 0 : i32
    %c0_i32_0 = arith.constant 0 : i32
    %c0_i32_1 = arith.constant 0 : i32
    return %arg0, %c0_i32, %c0_i32_0 : i32, i32, i32
  }
  func.func @transform_17(%arg0: i32) -> (i32, i32, i32) {
    %c0_i32 = arith.constant 0 : i32
    %c0_i32_0 = arith.constant 0 : i32
    %c0_i32_1 = arith.constant 0 : i32
    return %arg0, %c0_i32, %c0_i32_0 : i32, i32, i32
  }
  func.func @transform_18(%arg0: i32) -> (i32, i32, i32) {
    %c0_i32 = arith.constant 0 : i32
    %c0_i32_0 = arith.constant 0 : i32
    %c0_i32_1 = arith.constant 0 : i32
    return %arg0, %c0_i32, %c0_i32_0 : i32, i32, i32
  }
  func.func @transform_19(%arg0: i32) -> (i32, i32) {
    %c0_i32 = arith.constant 0 : i32
    %c0_i32_0 = arith.constant 0 : i32
    %c0_i32_1 = arith.constant 0 : i32
    return %c0_i32, %c0_i32_0 : i32, i32
  }
}

</mosaic_0001>

<llo_original>
// kernel: hubert_encoder_forward.3
$region0: #{hubert_encoder_forward.3}
  #allocation0 [shape = 'u32[]', space=smem, size = 0x4, offset = 0x4, fixed_abs, tag = 'smem constant byte address 0x4 - core index']
  #allocation1 [shape = 'u32[144,128]{1,0:T(1,128)}', space=vmem, size = 0x12000, scoped, tag = 'internal scratch']
  %s0 = inlined_call_operand.vmem [shape: f32[2,63,10], index: 0, kind: input, shape index: {}]
  %s1 = inlined_call_operand.vmem [shape: bf16[10,16], index: 1, kind: input, shape index: {}]
  %s2 = inlined_call_operand.vmem [shape: f32[1,16], index: 2, kind: input, shape index: {}]
  %s3 = inlined_call_operand.vmem [shape: f32[1,16], index: 3, kind: input, shape index: {}]
  %s4 = inlined_call_operand.vmem [shape: bf16[2,63,16], index: 4, kind: output, shape index: {}]
  %s5 = sld [smem:[#allocation0]]
  $region49: #{hubert_encoder_forward.3} parent=0
    _
  %s7 = ssub.s32 1, %s5
  %s8 = scalar_select 0, %s7, %s5
  loop: start=0, step=1, limit=4
  $region2: #{hubert_encoder_forward.3} parent=0 // loop_pre_header
    _
  $region3: #{hubert_encoder_forward.3} parent=0 // loop_header
    %s10 = sphi 0, %s14
    %p11 = scmp.ge.s32.totalorder %s10, 4
    %s20 = sphi 0, %s22
    %s23 = sphi 0, %s20
    %s24 = sphi 0, %s23
    %s40 = sphi 0, %s24
    %s44 = sphi 0, %s44
    %s46 = sphi 0, %s44
    %s47 = sphi 0, %s46
    %s61 = sphi 0, %s47
    %s65 = sphi 0, %s65
    %s67 = sphi 0, %s65
    %s68 = sphi 0, %s67
    %s82 = sphi 0, %s68
    %s86 = sphi 0, %s86
    %s88 = sphi 0, %s86
    %s89 = sphi 0, %s88
    %s103 = sphi 0, %s89
    %s109 = sphi 0, %s111
    %s112 = sphi 0, %s109
    %s113 = sphi 0, %s112
    %s129 = sphi 0, %s113
  $region4: #{hubert_encoder_forward.3} parent=0 // loop_header_branch
    %13 = sbr.rel (%p11) target = $region8
  $region5: #{hubert_encoder_forward.3} parent=0 // loop_body
    %s15 = ssub.s32 %s10, 1
    %s16 = ssub.s32 %s10, 2
    %s17 = sadd.s32 %s10, 1
    %s18 = ssub.s32 %s10, %s17
    %p19 = scmp.eq.s32.totalorder %s18, 0
    %s21 = sadd.s32 %s20, 1
    %s22 = scalar_select %p19, %s20, %s21
    %p25 = pneg %p19
    %p26 = scmp.eq.s32.totalorder %s10, 1
    %p27 = por %p25, %p26
    %p28 = scmp.ne.s32.totalorder %s20, %s23
    %p29 = scmp.eq.s32.totalorder %s10, 0
    %p30 = por %p28, %p29
    %p31 = scmp.ne.s32.totalorder %s20, %s23
    %p32 = scmp.eq.s32.totalorder %s15, 1
    %p33 = por %p31, %p32
    %p34 = scmp.ne.s32.totalorder %s23, %s24
    %p35 = scmp.eq.s32.totalorder %s15, 0
    %p36 = por %p34, %p35
    %p37 = scmp.ne.s32.totalorder %s23, %s24
    %p38 = scmp.eq.s32.totalorder %s16, 1
    %p39 = por %p37, %p38
    %p41 = scmp.ne.s32.totalorder %s24, %s40
    %p42 = scmp.eq.s32.totalorder %s16, 0
    %p43 = por %p41, %p42
    %s45 = sadd.s32 %s44, 1
    %p48 = scmp.eq.s32.totalorder %s10, 1
    %p49 = scmp.ne.s32.totalorder %s44, %s46
    %p50 = scmp.eq.s32.totalorder %s10, 0
    %p51 = por %p49, %p50
    %p52 = scmp.ne.s32.totalorder %s44, %s46
    %p53 = scmp.eq.s32.totalorder %s15, 1
    %p54 = por %p52, %p53
    %p55 = scmp.ne.s32.totalorder %s46, %s47
    %p56 = scmp.eq.s32.totalorder %s15, 0
    %p57 = por %p55, %p56
    %p58 = scmp.ne.s32.totalorder %s46, %s47
    %p59 = scmp.eq.s32.totalorder %s16, 1
    %p60 = por %p58, %p59
    %p62 = scmp.ne.s32.totalorder %s47, %s61
    %p63 = scmp.eq.s32.totalorder %s16, 0
    %p64 = por %p62, %p63
    %s66 = sadd.s32 %s65, 1
    %p69 = scmp.eq.s32.totalorder %s10, 1
    %p70 = scmp.ne.s32.totalorder %s65, %s67
    %p71 = scmp.eq.s32.totalorder %s10, 0
    %p72 = por %p70, %p71
    %p73 = scmp.ne.s32.totalorder %s65, %s67
    %p74 = scmp.eq.s32.totalorder %s15, 1
    %p75 = por %p73, %p74
    %p76 = scmp.ne.s32.totalorder %s67, %s68
    %p77 = scmp.eq.s32.totalorder %s15, 0
    %p78 = por %p76, %p77
    %p79 = scmp.ne.s32.totalorder %s67, %s68
    %p80 = scmp.eq.s32.totalorder %s16, 1
    %p81 = por %p79, %p80
    %p83 = scmp.ne.s32.totalorder %s68, %s82
    %p84 = scmp.eq.s32.totalorder %s16, 0
    %p85 = por %p83, %p84
    %s87 = sadd.s32 %s86, 1
    %p90 = scmp.eq.s32.totalorder %s10, 1
    %p91 = scmp.ne.s32.totalorder %s86, %s88
    %p92 = scmp.eq.s32.totalorder %s10, 0
    %p93 = por %p91, %p92
    %p94 = scmp.ne.s32.totalorder %s86, %s88
    %p95 = scmp.eq.s32.totalorder %s15, 1
    %p96 = por %p94, %p95
    %p97 = scmp.ne.s32.totalorder %s88, %s89
    %p98 = scmp.eq.s32.totalorder %s15, 0
    %p99 = por %p97, %p98
    %p100 = scmp.ne.s32.totalorder %s88, %s89
    %p101 = scmp.eq.s32.totalorder %s16, 1
    %p102 = por %p100, %p101
    %p104 = scmp.ne.s32.totalorder %s89, %s103
    %p105 = scmp.eq.s32.totalorder %s16, 0
    %p106 = por %p104, %p105
    %s107 = ssub.s32 %s10, %s17
    %p108 = scmp.eq.s32.totalorder %s107, 0
    %s110 = sadd.s32 %s109, 1
    %s111 = scalar_select %p108, %s109, %s110
    %p114 = pneg %p108
    %p115 = scmp.eq.s32.totalorder %s10, 1
    %p116 = por %p114, %p115
    %p117 = scmp.ne.s32.totalorder %s109, %s112
    %p118 = scmp.eq.s32.totalorder %s10, 0
    %p119 = por %p117, %p118
    %p120 = scmp.ne.s32.totalorder %s109, %s112
    %p121 = scmp.eq.s32.totalorder %s15, 1
    %p122 = por %p120, %p121
    %p123 = scmp.ne.s32.totalorder %s112, %s113
    %p124 = scmp.eq.s32.totalorder %s15, 0
    %p125 = por %p123, %p124
    %p126 = scmp.ne.s32.totalorder %s112, %s113
    %p127 = scmp.eq.s32.totalorder %s16, 1
    %p128 = por %p126, %p127
    %p130 = scmp.ne.s32.totalorder %s113, %s129
    %p131 = scmp.eq.s32.totalorder %s16, 0
    %p132 = por %p130, %p131
    %p133 = scmp.le.s32.totalorder 1, %s10
    %p134 = scmp.lt.s32.totalorder %s10, 3
    %p135 = pnand %p133, %p134
    %p136 = pneg %p135
    // Predicated region
    $region9: #{hubert_encoder_forward.3} parent=5 // pred_check
      _
    $region10: #{hubert_encoder_forward.3} parent=5 // pred_check_branch
      %138 = sbr.rel (%p135) target = $region12
    $region11: #{hubert_encoder_forward.3} parent=5 // pred_region
      %s139 = ssub.s32 %s10, 1
      // Predicated region
      $region13: #{hubert_encoder_forward.3} parent=11 // pred_check
        %p140 = pneg %p57
      $region14: #{hubert_encoder_forward.3} parent=11 // pred_check_branch
        %142 = sbr.rel (%p140) target = $region16
      $region15: #{hubert_encoder_forward.3} parent=11 // pred_region
        _
      $region16: #{hubert_encoder_forward.3} parent=11 // pred_fallthru
        _
      // Predicated region
      $region17: #{hubert_encoder_forward.3} parent=11 // pred_check
        %p143 = pneg %p78
      $region18: #{hubert_encoder_forward.3} parent=11 // pred_check_branch
        %145 = sbr.rel (%p143) target = $region20
      $region19: #{hubert_encoder_forward.3} parent=11 // pred_region
        _
      $region20: #{hubert_encoder_forward.3} parent=11 // pred_fallthru
        _
      // Predicated region
      $region21: #{hubert_encoder_forward.3} parent=11 // pred_check
        %p146 = pneg %p99
      $region22: #{hubert_encoder_forward.3} parent=11 // pred_check_branch
        %148 = sbr.rel (%p146) target = $region24
      $region23: #{hubert_encoder_forward.3} parent=11 // pred_region
        _
      $region24: #{hubert_encoder_forward.3} parent=11 // pred_fallthru
        _
    $region12: #{hubert_encoder_forward.3} parent=5 // pred_fallthru
      _
    %p149 = scmp.lt.s32.totalorder %s10, 2
    // Predicated region
    $region25: #{hubert_encoder_forward.3} parent=5 // pred_check
      %p150 = pneg %p149
    $region26: #{hubert_encoder_forward.3} parent=5 // pred_check_branch
      %152 = sbr.rel (%p150) target = $region28
    $region27: #{hubert_encoder_forward.3} parent=5 // pred_region
      // Predicated region
      $region29: #{hubert_encoder_forward.3} parent=27 // pred_check
        %p153 = pneg %p30
      $region30: #{hubert_encoder_forward.3} parent=27 // pred_check_branch
        %155 = sbr.rel (%p153) target = $region32
      $region31: #{hubert_encoder_forward.3} parent=27 // pred_region
        %p156 = scmp.lt.s32.totalorder %s10, 1
        %s157 = scalar_select %p156, %s10, 1
        %s158 = smul.addr %s157, 8
        %s159 = smul.addr %s158, 8
        %s160 = scalar_lea.vmem %s0, %s159
      $region32: #{hubert_encoder_forward.3} parent=27 // pred_fallthru
        _
    $region28: #{hubert_encoder_forward.3} parent=5 // pred_fallthru
      _
    %p161 = scmp.le.s32.totalorder 1, %s10
    %p162 = scmp.lt.s32.totalorder %s10, 3
    %p163 = pnand %p161, %p162
    %p164 = pneg %p163
    // Predicated region
    $region33: #{hubert_encoder_forward.3} parent=5 // pred_check
      _
    $region34: #{hubert_encoder_forward.3} parent=5 // pred_check_branch
      %166 = sbr.rel (%p163) target = $region36
    $region35: #{hubert_encoder_forward.3} parent=5 // pred_region
      %s167 = ssub.s32 %s10, 1
      %p168 = scmp.lt.s32.totalorder %s15, 1
      %s169 = scalar_select %p168, %s15, 1
      %s170 = smul.addr %s169, 8
      %s171 = smul.addr %s170, 8
      %s172 = scalar_lea.vmem %s0, %s171
      %p173 = pneg %p36
      %p174 = pneg %p33
      %p175 = pneg %p57
      %p176 = pneg %p54
      %p177 = pneg %p78
      %p178 = pneg %p75
      %p179 = pneg %p99
      %p180 = pneg %p96
      %p181 = pneg %p125
      %p182 = pneg %p122
      %p183 = scmp.lt.s32.totalorder %s15, 1
      %s184 = scalar_select %p183, %s15, 1
      %s185 = smul.addr %s184, 8
      %s186 = smul.addr %s185, 4
      %s187 = scalar_lea.vmem %s4, %s186
      %p188 = scmp.lt.s32.totalorder %s15, 1
      %s189 = scalar_select %p188, %s15, 1
      %s190 = smul.addr %s189, 8
      %s191 = smul.addr %s190, 8
      %s192 = scalar_lea.vmem %s0, %s191
      %p193 = scmp.lt.s32.totalorder %s15, 1
      %s194 = scalar_select %p193, %s15, 1
      %s195 = smul.addr %s194, 8
      %s196 = smul.addr %s195, 4
      %s197 = scalar_lea.vmem %s4, %s196
      %v199 = vld [vmem:[%s192] sm:$0xff]
      %v200 = vld [vmem:[%s192 + $0x8] sm:$0xff]
      %v201 = vld [vmem:[%s192 + $0x10] sm:$0xff]
      %v202 = vld [vmem:[%s192 + $0x18] sm:$0xff]
      %v203 = vld [vmem:[%s192 + $0x20] sm:$0xff]
      %v204 = vld [vmem:[%s192 + $0x28] sm:$0xff]
      %v205 = vld [vmem:[%s192 + $0x30] sm:$0xff]
      %v206 = vld [vmem:[%s192 + $0x38] sm:$0x7f]
      %v207 = vpack.c.bf16 %v200, %v199
      %v208 = vpack.c.bf16 %v202, %v201
      %v209 = vpack.c.bf16 %v204, %v203
      %v210 = vpack.c.bf16 %v206, %v205
      %v211 = vld [vmem:[%s1] sm:$0xf]
      %v212 = vld [vmem:[%s1 + $0x4] sm:$0x1]
      %v215 = vunpack.c.l.b16 %v211
      %v216 = vunpack.c.l.b16 %v212
      %v217 = vpack.c.b16 %v216, %v215
      %vm218 = vcmask 80896
      %v220 = vsel %vm218, %v207, 0
      %v223 = vsel %vm218, %v208, 0
      %v226 = vsel %vm218, %v209, 0
      %v229 = vsel %vm218, %v210, 0
      %vm231 = vcmask 1044480
      %v233 = vsel %vm231, %v217, 0
      %235 = vmatprep.subr.bf16.mxu0 0
      %236 = vmatpush1.bf16.msra.mxu0 %v233
      %237 = vmatprep.subr.bf16.mxu0 0
      %238 = vmatpush1.bf16.msra.mxu0 0
      %239 = vmatprep.subr.bf16.mxu0 0
      %240 = vmatpush1.bf16.msra.mxu0 0
      %241 = vmatprep.subr.bf16.mxu0 0
      %242 = vmatpush1.bf16.msra.mxu0 0
      %243 = vmatprep.subr.bf16.mxu0 0
      %244 = vmatpush1.bf16.msra.mxu0 0
      %245 = vmatprep.subr.bf16.mxu0 0
      %246 = vmatpush1.bf16.msra.mxu0 0
      %247 = vmatprep.subr.bf16.mxu0 0
      %248 = vmatpush1.bf16.msra.mxu0 0
      %249 = vmatprep.subr.bf16.mxu0 0
      %250 = vmatpush1.bf16.msra.mxu0 0
      %251 = vmatprep.subr.bf16.mxu0 0
      %252 = vmatpush1.bf16.msra.mxu0 0
      %253 = vmatprep.subr.bf16.mxu0 0
      %254 = vmatpush1.bf16.msra.mxu0 0
      %255 = vmatprep.subr.bf16.mxu0 0
      %256 = vmatpush1.bf16.msra.mxu0 0
      %257 = vmatprep.subr.bf16.mxu0 0
      %258 = vmatpush1.bf16.msra.mxu0 0
      %259 = vmatprep.subr.bf16.mxu0 0
      %260 = vmatpush1.bf16.msra.mxu0 0
      %261 = vmatprep.subr.bf16.mxu0 0
      %262 = vmatpush1.bf16.msra.mxu0 0
      %263 = vmatprep.subr.bf16.mxu0 0
      %264 = vmatpush1.bf16.msra.mxu0 0
      %265 = vmatprep.subr.bf16.mxu0 0
      %266 = vmatpush1.bf16.msra.mxu0 0
      %267 = vmatprep.mubr.bf16.mxu0 0
      %268 = vmatmul.mubr.bf16.gmra.mrb[0].mxu0 %v220
      %v269 = vpop.f32.mrb[0].mxu0
      %v270 = vadd.f32 0.0, %v269
      %v271 = vpop.f32.mrb[0].mxu0
      %v272 = vpop.f32.mrb[0].mxu0
      %v273 = vadd.f32 0.0, %v272
      %v274 = vpop.f32.mrb[0].mxu0
      %275 = vmatprep.mubr.bf16.mxu0 0
      %276 = vmatmul.mubr.bf16.gmra.mrb[0].mxu0 %v223
      %v277 = vpop.f32.mrb[0].mxu0
      %v278 = vadd.f32 0.0, %v277
      %v279 = vpop.f32.mrb[0].mxu0
      %v280 = vpop.f32.mrb[0].mxu0
      %v281 = vadd.f32 0.0, %v280
      %v282 = vpop.f32.mrb[0].mxu0
      %283 = vmatprep.mubr.bf16.mxu0 0
      %284 = vmatmul.mubr.bf16.gmra.mrb[0].mxu0 %v226
      %v285 = vpop.f32.mrb[0].mxu0
      %v286 = vadd.f32 0.0, %v285
      %v287 = vpop.f32.mrb[0].mxu0
      %v288 = vpop.f32.mrb[0].mxu0
      %v289 = vadd.f32 0.0, %v288
      %v290 = vpop.f32.mrb[0].mxu0
      %291 = vmatprep.mubr.bf16.mxu0 0
      %292 = vmatmul.mubr.bf16.gmra.mrb[0].mxu0 %v229
      %v293 = vpop.f32.mrb[0].mxu0
      %v294 = vadd.f32 0.0, %v293
      %v295 = vpop.f32.mrb[0].mxu0
      %v296 = vpop.f32.mrb[0].mxu0
      %v297 = vadd.f32 0.0, %v296
      %v298 = vpop.f32.mrb[0].mxu0
      %299 = vdwg.mxu0
      %vm300 = vcmask 130048
      %v301 = vsel %vm300, %v270, 0.0
      %v302 = vsel %vm300, %v273, 0.0
      %v303 = vadd.f32 %v301, %v302
      %v304 = vsel %vm300, %v278, 0.0
      %v305 = vadd.f32 %v303, %v304
      %v306 = vsel %vm300, %v281, 0.0
      %v307 = vadd.f32 %v305, %v306
      %v308 = vsel %vm300, %v286, 0.0
      %v309 = vadd.f32 %v307, %v308
      %v310 = vsel %vm300, %v289, 0.0
      %v311 = vadd.f32 %v309, %v310
      %v312 = vsel %vm300, %v294, 0.0
      %v313 = vadd.f32 %v311, %v312
      %vm314 = vcmask 129024
      %v315 = vsel %vm314, %v297, 0.0
      %v316 = vadd.f32 %v313, %v315
      %v317 = vrot.slane %v316, 4
      %v318 = vadd.f32 %v316, %v317
      %v319 = vrot.slane %v318, 2
      %v320 = vadd.f32 %v318, %v319
      %v321 = vrot.slane %v320, 1
      %v322 = vadd.f32 %v320, %v321
      %v323 = vrcp.pop 63.0
      %v324 = vmul.f32 %v322, %v323
      %v325 = vsub.f32 %v270, %v324
      %v326 = vsub.f32 %v273, %v324
      %v327 = vsub.f32 %v278, %v324
      %v328 = vsub.f32 %v281, %v324
      %v329 = vsub.f32 %v286, %v324
      %v330 = vsub.f32 %v289, %v324
      %v331 = vsub.f32 %v294, %v324
      %v332 = vsub.f32 %v297, %v324
      %v333 = vmul.f32 %v325, %v325
      %v334 = vmul.f32 %v326, %v326
      %v335 = vmul.f32 %v327, %v327
      %v336 = vmul.f32 %v328, %v328
      %v337 = vmul.f32 %v329, %v329
      %v338 = vmul.f32 %v330, %v330
      %v339 = vmul.f32 %v331, %v331
      %v340 = vmul.f32 %v332, %v332
      %v341 = vsel %vm300, %v333, 0.0
      %v342 = vsel %vm300, %v334, 0.0
      %v343 = vadd.f32 %v341, %v342
      %v344 = vsel %vm300, %v335, 0.0
      %v345 = vadd.f32 %v343, %v344
      %v346 = vsel %vm300, %v336, 0.0
      %v347 = vadd.f32 %v345, %v346
      %v348 = vsel %vm300, %v337, 0.0
      %v349 = vadd.f32 %v347, %v348
      %v350 = vsel %vm300, %v338, 0.0
      %v351 = vadd.f32 %v349, %v350
      %v352 = vsel %vm300, %v339, 0.0
      %v353 = vadd.f32 %v351, %v352
      %v354 = vsel %vm314, %v340, 0.0
      %v355 = vadd.f32 %v353, %v354
      %v356 = vrot.slane %v355, 4
      %v357 = vadd.f32 %v355, %v356
      %v358 = vrot.slane %v357, 2
      %v359 = vadd.f32 %v357, %v358
      %v360 = vrot.slane %v359, 1
      %v361 = vadd.f32 %v359, %v360
      %v362 = vmul.f32 %v361, %v323
      %v363 = vadd.f32 %v362, 1e-05
      %v364 = vrsqrt.pop %v363
      %v365 = vmul.f32 %v325, %v364
      %v366 = vmul.f32 %v326, %v364
      %v367 = vmul.f32 %v327, %v364
      %v368 = vmul.f32 %v328, %v364
      %v369 = vmul.f32 %v329, %v364
      %v370 = vmul.f32 %v330, %v364
      %v371 = vmul.f32 %v331, %v364
      %v372 = vmul.f32 %v332, %v364
      %v373 = vld [vmem:[%s2] sm:$0x1]
      %v375 = vlaneseq
      %v376 = vshrl.u32 %v375, 7
      %v377 = vsub.s32 0, %v376
      %v378 = vrot.slane %v373, %v377
      %v380 = vmul.f32 %v365, %v378
      %v381 = vmul.f32 %v366, %v378
      %v382 = vmul.f32 %v367, %v378
      %v383 = vmul.f32 %v368, %v378
      %v384 = vmul.f32 %v369, %v378
      %v385 = vmul.f32 %v370, %v378
      %v386 = vmul.f32 %v371, %v378
      %v387 = vmul.f32 %v372, %v378
      %v388 = vld [vmem:[%s3] sm:$0x1]
      %v390 = vlaneseq
      %v391 = vshrl.u32 %v390, 7
      %v392 = vsub.s32 0, %v391
      %v393 = vrot.slane %v388, %v392
      %v395 = vadd.f32 %v380, %v393
      %v396 = vadd.f32 %v381, %v393
      %v397 = vadd.f32 %v382, %v393
      %v398 = vadd.f32 %v383, %v393
      %v399 = vadd.f32 %v384, %v393
      %v400 = vadd.f32 %v385, %v393
      %v401 = vadd.f32 %v386, %v393
      %v402 = vadd.f32 %v387, %v393
      %v403 = vmul.f32 %v395, 0.5
      %v404 = vmul.f32 %v396, 0.5
      %v405 = vmul.f32 %v397, 0.5
      %v406 = vmul.f32 %v398, 0.5
      %v407 = vmul.f32 %v399, 0.5
      %v408 = vmul.f32 %v400, 0.5
      %v409 = vmul.f32 %v401, 0.5
      %v410 = vmul.f32 %v402, 0.5
      %v411 = vmul.f32 %v395, 0.70710677
      %v412 = vmul.f32 %v396, 0.70710677
      %v413 = vmul.f32 %v397, 0.70710677
      %v414 = vmul.f32 %v398, 0.70710677
      %v415 = vmul.f32 %v399, 0.70710677
      %v416 = vmul.f32 %v400, 0.70710677
      %v417 = vmul.f32 %v401, 0.70710677
      %v418 = vmul.f32 %v402, 0.70710677
      %v419 = verf.f32.pop %v411
      %v420 = verf.f32.pop %v412
      %v421 = verf.f32.pop %v413
      %v422 = verf.f32.pop %v414
      %v423 = verf.f32.pop %v415
      %v424 = verf.f32.pop %v416
      %v425 = verf.f32.pop %v417
      %v426 = verf.f32.pop %v418
      %v427 = vadd.f32 %v419, 1.0
      %v428 = vadd.f32 %v420, 1.0
      %v429 = vadd.f32 %v421, 1.0
      %v430 = vadd.f32 %v422, 1.0
      %v431 = vadd.f32 %v423, 1.0
      %v432 = vadd.f32 %v424, 1.0
      %v433 = vadd.f32 %v425, 1.0
      %v434 = vadd.f32 %v426, 1.0
      %v435 = vmul.f32 %v403, %v427
      %v436 = vmul.f32 %v404, %v428
      %v437 = vmul.f32 %v405, %v429
      %v438 = vmul.f32 %v406, %v430
      %v439 = vmul.f32 %v407, %v431
      %v440 = vmul.f32 %v408, %v432
      %v441 = vmul.f32 %v409, %v433
      %v442 = vmul.f32 %v410, %v434
      %v443 = vpack.c.bf16 %v436, %v435
      %v444 = vpack.c.bf16 %v438, %v437
      %v445 = vpack.c.bf16 %v440, %v439
      %v446 = vpack.c.bf16 %v442, %v441
      %v451 = vunpack.c.l.b16 %v443
      %v452 = vunpack.c.h.b16 %v443
      %v453 = vunpack.c.l.b16 %v444
      %v454 = vunpack.c.h.b16 %v444
      %v455 = vunpack.c.l.b16 %v445
      %v456 = vunpack.c.h.b16 %v445
      %v457 = vunpack.c.l.b16 %v446
      %v458 = vunpack.c.h.b16 %v446
      %v459 = vpack.c.b16 %v451, %v451
      %v460 = vpack.c.b16 %v452, %v452
      %v461 = vpack.c.b16 %v453, %v453
      %v462 = vpack.c.b16 %v454, %v454
      %v463 = vpack.c.b16 %v455, %v455
      %v464 = vpack.c.b16 %v456, %v456
      %v465 = vpack.c.b16 %v457, %v457
      %v466 = vpack.c.b16 %v458, %v458
      %vm475 = vcmask 125952
      %476 = vst.msk [vmem:[%s197] sm:$0xf] %vm475, %v459
      %477 = vst.msk [vmem:[%s197 + $0x4] sm:$0xf] %vm475, %v460
      %478 = vst.msk [vmem:[%s197 + $0x8] sm:$0xf] %vm475, %v461
      %479 = vst.msk [vmem:[%s197 + $0xc] sm:$0xf] %vm475, %v462
      %480 = vst.msk [vmem:[%s197 + $0x10] sm:$0xf] %vm475, %v463
      %481 = vst.msk [vmem:[%s197 + $0x14] sm:$0xf] %vm475, %v464
      %482 = vst.msk [vmem:[%s197 + $0x18] sm:$0xf] %vm475, %v465
      %vm483 = vcmask 125952
      %vm484 = vsmask.f32 3328
      %vm485 = vmand %vm483, %vm484
      %v486 = vld [vmem:[%s197 + $0x1c] sm:$0xf]
      %v487 = vsel %vm485, %v466, %v486
      %488 = vst [vmem:[%s197 + $0x1c] sm:$0xf] %v487
      %p489 = scmp.lt.s32.totalorder %s15, 1
      %s490 = scalar_select %p489, %s15, 1
      %s491 = smul.addr %s490, 8
      %s492 = smul.addr %s491, 4
      %s493 = scalar_lea.vmem %s4, %s492
      // Predicated region
      $region37: #{hubert_encoder_forward.3} parent=35 // pred_check
        %p494 = pneg %p122
      $region38: #{hubert_encoder_forward.3} parent=35 // pred_check_branch
        %496 = sbr.rel (%p494) target = $region40
      $region39: #{hubert_encoder_forward.3} parent=35 // pred_region
        _
      $region40: #{hubert_encoder_forward.3} parent=35 // pred_fallthru
        _
    $region36: #{hubert_encoder_forward.3} parent=5 // pred_fallthru
      _
    %p497 = scmp.le.s32.totalorder 2, %s10
    // Predicated region
    $region41: #{hubert_encoder_forward.3} parent=5 // pred_check
      %p498 = pneg %p497
    $region42: #{hubert_encoder_forward.3} parent=5 // pred_check_branch
      %500 = sbr.rel (%p498) target = $region44
    $region43: #{hubert_encoder_forward.3} parent=5 // pred_region
      %s501 = ssub.s32 %s10, 2
      // Predicated region
      $region45: #{hubert_encoder_forward.3} parent=43 // pred_check
        %p502 = pneg %p128
      $region46: #{hubert_encoder_forward.3} parent=43 // pred_check_branch
        %504 = sbr.rel (%p502) target = $region48
      $region47: #{hubert_encoder_forward.3} parent=43 // pred_region
        %p505 = scmp.lt.s32.totalorder %s16, 1
        %s506 = scalar_select %p505, %s16, 1
        %s507 = smul.addr %s506, 8
        %s508 = smul.addr %s507, 4
        %s509 = scalar_lea.vmem %s4, %s508
      $region48: #{hubert_encoder_forward.3} parent=43 // pred_fallthru
        _
    $region44: #{hubert_encoder_forward.3} parent=5 // pred_fallthru
      _
  $region6: #{hubert_encoder_forward.3} parent=0 // loop_footer
    %s14 = sadd.s32 1, %s10
  $region7: #{hubert_encoder_forward.3} parent=0 // loop_footer_branch
    %9 = sbr.rel target = $region3
  $region8: #{hubert_encoder_forward.3} parent=0 // loop_exit
    _

// kernel: hubert_encoder_forward.4
$region0: #{hubert_encoder_forward.4}
  #allocation0 [shape = 'u32[]', space=smem, size = 0x4, offset = 0x4, fixed_abs, tag = 'smem constant byte address 0x4 - core index']
  #allocation1 [shape = 'u32[144,128]{1,0:T(1,128)}', space=vmem, size = 0x12000, scoped, tag = 'internal scratch']
  %s0 = inlined_call_operand.vmem [shape: bf16[2,31,48], index: 0, kind: input, shape index: {}]
  %s1 = inlined_call_operand.vmem [shape: bf16[48,16], index: 1, kind: input, shape index: {}]
  %s2 = inlined_call_operand.vmem [shape: f32[1,16], index: 2, kind: input, shape index: {}]
  %s3 = inlined_call_operand.vmem [shape: f32[1,16], index: 3, kind: input, shape index: {}]
  %s4 = inlined_call_operand.vmem [shape: bf16[16,32], index: 4, kind: input, shape index: {}]
  %s5 = inlined_call_operand.vmem [shape: f32[1,32], index: 5, kind: input, shape index: {}]
  %s6 = inlined_call_operand.vmem [shape: bf16[2,31,32], index: 6, kind: output, shape index: {}]
  %s7 = sld [smem:[#allocation0]]
  $region57: #{hubert_encoder_forward.4} parent=0
    _
  %s9 = ssub.s32 1, %s7
  %s10 = scalar_select 0, %s9, %s7
  loop: start=0, step=1, limit=4
  $region2: #{hubert_encoder_forward.4} parent=0 // loop_pre_header
    _
  $region3: #{hubert_encoder_forward.4} parent=0 // loop_header
    %s12 = sphi 0, %s16
    %p13 = scmp.ge.s32.totalorder %s12, 4
    %s22 = sphi 0, %s24
    %s25 = sphi 0, %s22
    %s26 = sphi 0, %s25
    %s42 = sphi 0, %s26
    %s46 = sphi 0, %s46
    %s48 = sphi 0, %s46
    %s49 = sphi 0, %s48
    %s63 = sphi 0, %s49
    %s67 = sphi 0, %s67
    %s69 = sphi 0, %s67
    %s70 = sphi 0, %s69
    %s84 = sphi 0, %s70
    %s88 = sphi 0, %s88
    %s90 = sphi 0, %s88
    %s91 = sphi 0, %s90
    %s105 = sphi 0, %s91
    %s109 = sphi 0, %s109
    %s111 = sphi 0, %s109
    %s112 = sphi 0, %s111
    %s126 = sphi 0, %s112
    %s130 = sphi 0, %s130
    %s132 = sphi 0, %s130
    %s133 = sphi 0, %s132
    %s147 = sphi 0, %s133
    %s153 = sphi 0, %s155
    %s156 = sphi 0, %s153
    %s157 = sphi 0, %s156
    %s173 = sphi 0, %s157
  $region4: #{hubert_encoder_forward.4} parent=0 // loop_header_branch
    %15 = sbr.rel (%p13) target = $region8
  $region5: #{hubert_encoder_forward.4} parent=0 // loop_body
    %s17 = ssub.s32 %s12, 1
    %s18 = ssub.s32 %s12, 2
    %s19 = sadd.s32 %s12, 1
    %s20 = ssub.s32 %s12, %s19
    %p21 = scmp.eq.s32.totalorder %s20, 0
    %s23 = sadd.s32 %s22, 1
    %s24 = scalar_select %p21, %s22, %s23
    %p27 = pneg %p21
    %p28 = scmp.eq.s32.totalorder %s12, 1
    %p29 = por %p27, %p28
    %p30 = scmp.ne.s32.totalorder %s22, %s25
    %p31 = scmp.eq.s32.totalorder %s12, 0
    %p32 = por %p30, %p31
    %p33 = scmp.ne.s32.totalorder %s22, %s25
    %p34 = scmp.eq.s32.totalorder %s17, 1
    %p35 = por %p33, %p34
    %p36 = scmp.ne.s32.totalorder %s25, %s26
    %p37 = scmp.eq.s32.totalorder %s17, 0
    %p38 = por %p36, %p37
    %p39 = scmp.ne.s32.totalorder %s25, %s26
    %p40 = scmp.eq.s32.totalorder %s18, 1
    %p41 = por %p39, %p40
    %p43 = scmp.ne.s32.totalorder %s26, %s42
    %p44 = scmp.eq.s32.totalorder %s18, 0
    %p45 = por %p43, %p44
    %s47 = sadd.s32 %s46, 1
    %p50 = scmp.eq.s32.totalorder %s12, 1
    %p51 = scmp.ne.s32.totalorder %s46, %s48
    %p52 = scmp.eq.s32.totalorder %s12, 0
    %p53 = por %p51, %p52
    %p54 = scmp.ne.s32.totalorder %s46, %s48
    %p55 = scmp.eq.s32.totalorder %s17, 1
    %p56 = por %p54, %p55
    %p57 = scmp.ne.s32.totalorder %s48, %s49
    %p58 = scmp.eq.s32.totalorder %s17, 0
    %p59 = por %p57, %p58
    %p60 = scmp.ne.s32.totalorder %s48, %s49
    %p61 = scmp.eq.s32.totalorder %s18, 1
    %p62 = por %p60, %p61
    %p64 = scmp.ne.s32.totalorder %s49, %s63
    %p65 = scmp.eq.s32.totalorder %s18, 0
    %p66 = por %p64, %p65
    %s68 = sadd.s32 %s67, 1
    %p71 = scmp.eq.s32.totalorder %s12, 1
    %p72 = scmp.ne.s32.totalorder %s67, %s69
    %p73 = scmp.eq.s32.totalorder %s12, 0
    %p74 = por %p72, %p73
    %p75 = scmp.ne.s32.totalorder %s67, %s69
    %p76 = scmp.eq.s32.totalorder %s17, 1
    %p77 = por %p75, %p76
    %p78 = scmp.ne.s32.totalorder %s69, %s70
    %p79 = scmp.eq.s32.totalorder %s17, 0
    %p80 = por %p78, %p79
    %p81 = scmp.ne.s32.totalorder %s69, %s70
    %p82 = scmp.eq.s32.totalorder %s18, 1
    %p83 = por %p81, %p82
    %p85 = scmp.ne.s32.totalorder %s70, %s84
    %p86 = scmp.eq.s32.totalorder %s18, 0
    %p87 = por %p85, %p86
    %s89 = sadd.s32 %s88, 1
    %p92 = scmp.eq.s32.totalorder %s12, 1
    %p93 = scmp.ne.s32.totalorder %s88, %s90
    %p94 = scmp.eq.s32.totalorder %s12, 0
    %p95 = por %p93, %p94
    %p96 = scmp.ne.s32.totalorder %s88, %s90
    %p97 = scmp.eq.s32.totalorder %s17, 1
    %p98 = por %p96, %p97
    %p99 = scmp.ne.s32.totalorder %s90, %s91
    %p100 = scmp.eq.s32.totalorder %s17, 0
    %p101 = por %p99, %p100
    %p102 = scmp.ne.s32.totalorder %s90, %s91
    %p103 = scmp.eq.s32.totalorder %s18, 1
    %p104 = por %p102, %p103
    %p106 = scmp.ne.s32.totalorder %s91, %s105
    %p107 = scmp.eq.s32.totalorder %s18, 0
    %p108 = por %p106, %p107
    %s110 = sadd.s32 %s109, 1
    %p113 = scmp.eq.s32.totalorder %s12, 1
    %p114 = scmp.ne.s32.totalorder %s109, %s111
    %p115 = scmp.eq.s32.totalorder %s12, 0
    %p116 = por %p114, %p115
    %p117 = scmp.ne.s32.totalorder %s109, %s111
    %p118 = scmp.eq.s32.totalorder %s17, 1
    %p119 = por %p117, %p118
    %p120 = scmp.ne.s32.totalorder %s111, %s112
    %p121 = scmp.eq.s32.totalorder %s17, 0
    %p122 = por %p120, %p121
    %p123 = scmp.ne.s32.totalorder %s111, %s112
    %p124 = scmp.eq.s32.totalorder %s18, 1
    %p125 = por %p123, %p124
    %p127 = scmp.ne.s32.totalorder %s112, %s126
    %p128 = scmp.eq.s32.totalorder %s18, 0
    %p129 = por %p127, %p128
    %s131 = sadd.s32 %s130, 1
    %p134 = scmp.eq.s32.totalorder %s12, 1
    %p135 = scmp.ne.s32.totalorder %s130, %s132
    %p136 = scmp.eq.s32.totalorder %s12, 0
    %p137 = por %p135, %p136
    %p138 = scmp.ne.s32.totalorder %s130, %s132
    %p139 = scmp.eq.s32.totalorder %s17, 1
    %p140 = por %p138, %p139
    %p141 = scmp.ne.s32.totalorder %s132, %s133
    %p142 = scmp.eq.s32.totalorder %s17, 0
    %p143 = por %p141, %p142
    %p144 = scmp.ne.s32.totalorder %s132, %s133
    %p145 = scmp.eq.s32.totalorder %s18, 1
    %p146 = por %p144, %p145
    %p148 = scmp.ne.s32.totalorder %s133, %s147
    %p149 = scmp.eq.s32.totalorder %s18, 0
    %p150 = por %p148, %p149
    %s151 = ssub.s32 %s12, %s19
    %p152 = scmp.eq.s32.totalorder %s151, 0
    %s154 = sadd.s32 %s153, 1
    %s155 = scalar_select %p152, %s153, %s154
    %p158 = pneg %p152
    %p159 = scmp.eq.s32.totalorder %s12, 1
    %p160 = por %p158, %p159
    %p161 = scmp.ne.s32.totalorder %s153, %s156
    %p162 = scmp.eq.s32.totalorder %s12, 0
    %p163 = por %p161, %p162
    %p164 = scmp.ne.s32.totalorder %s153, %s156
    %p165 = scmp.eq.s32.totalorder %s17, 1
    %p166 = por %p164, %p165
    %p167 = scmp.ne.s32.totalorder %s156, %s157
    %p168 = scmp.eq.s32.totalorder %s17, 0
    %p169 = por %p167, %p168
    %p170 = scmp.ne.s32.totalorder %s156, %s157
    %p171 = scmp.eq.s32.totalorder %s18, 1
    %p172 = por %p170, %p171
    %p174 = scmp.ne.s32.totalorder %s157, %s173
    %p175 = scmp.eq.s32.totalorder %s18, 0
    %p176 = por %p174, %p175
    %p177 = scmp.le.s32.totalorder 1, %s12
    %p178 = scmp.lt.s32.totalorder %s12, 3
    %p179 = pnand %p177, %p178
    %p180 = pneg %p179
    // Predicated region
    $region9: #{hubert_encoder_forward.4} parent=5 // pred_check
      _
    $region10: #{hubert_encoder_forward.4} parent=5 // pred_check_branch
      %182 = sbr.rel (%p179) target = $region12
    $region11: #{hubert_encoder_forward.4} parent=5 // pred_region
      %s183 = ssub.s32 %s12, 1
      // Predicated region
      $region13: #{hubert_encoder_forward.4} parent=11 // pred_check
        %p184 = pneg %p59
      $region14: #{hubert_encoder_forward.4} parent=11 // pred_check_branch
        %186 = sbr.rel (%p184) target = $region16
      $region15: #{hubert_encoder_forward.4} parent=11 // pred_region
        _
      $region16: #{hubert_encoder_forward.4} parent=11 // pred_fallthru
        _
      // Predicated region
      $region17: #{hubert_encoder_forward.4} parent=11 // pred_check
        %p187 = pneg %p80
      $region18: #{hubert_encoder_forward.4} parent=11 // pred_check_branch
        %189 = sbr.rel (%p187) target = $region20
      $region19: #{hubert_encoder_forward.4} parent=11 // pred_region
        _
      $region20: #{hubert_encoder_forward.4} parent=11 // pred_fallthru
        _
      // Predicated region
      $region21: #{hubert_encoder_forward.4} parent=11 // pred_check
        %p190 = pneg %p101
      $region22: #{hubert_encoder_forward.4} parent=11 // pred_check_branch
        %192 = sbr.rel (%p190) target = $region24
      $region23: #{hubert_encoder_forward.4} parent=11 // pred_region
        _
      $region24: #{hubert_encoder_forward.4} parent=11 // pred_fallthru
        _
      // Predicated region
      $region25: #{hubert_encoder_forward.4} parent=11 // pred_check
        %p193 = pneg %p122
      $region26: #{hubert_encoder_forward.4} parent=11 // pred_check_branch
        %195 = sbr.rel (%p193) target = $region28
      $region27: #{hubert_encoder_forward.4} parent=11 // pred_region
        _
      $region28: #{hubert_encoder_forward.4} parent=11 // pred_fallthru
        _
      // Predicated region
      $region29: #{hubert_encoder_forward.4} parent=11 // pred_check
        %p196 = pneg %p143
      $region30: #{hubert_encoder_forward.4} parent=11 // pred_check_branch
        %198 = sbr.rel (%p196) target = $region32
      $region31: #{hubert_encoder_forward.4} parent=11 // pred_region
        _
      $region32: #{hubert_encoder_forward.4} parent=11 // pred_fallthru
        _
    $region12: #{hubert_encoder_forward.4} parent=5 // pred_fallthru
      _
    %p199 = scmp.lt.s32.totalorder %s12, 2
    // Predicated region
    $region33: #{hubert_encoder_forward.4} parent=5 // pred_check
      %p200 = pneg %p199
    $region34: #{hubert_encoder_forward.4} parent=5 // pred_check_branch
      %202 = sbr.rel (%p200) target = $region36
    $region35: #{hubert_encoder_forward.4} parent=5 // pred_region
      // Predicated region
      $region37: #{hubert_encoder_forward.4} parent=35 // pred_check
        %p203 = pneg %p32
      $region38: #{hubert_encoder_forward.4} parent=35 // pred_check_branch
        %205 = sbr.rel (%p203) target = $region40
      $region39: #{hubert_encoder_forward.4} parent=35 // pred_region
        %p206 = scmp.lt.s32.totalorder %s12, 1
        %s207 = scalar_select %p206, %s12, 1
        %s208 = smul.addr %s207, 4
        %s209 = smul.addr %s208, 4
        %s210 = scalar_lea.vmem %s0, %s209
      $region40: #{hubert_encoder_forward.4} parent=35 // pred_fallthru
        _
    $region36: #{hubert_encoder_forward.4} parent=5 // pred_fallthru
      _
    %p211 = scmp.le.s32.totalorder 1, %s12
    %p212 = scmp.lt.s32.totalorder %s12, 3
    %p213 = pnand %p211, %p212
    %p214 = pneg %p213
    // Predicated region
    $region41: #{hubert_encoder_forward.4} parent=5 // pred_check
      _
    $region42: #{hubert_encoder_forward.4} parent=5 // pred_check_branch
      %216 = sbr.rel (%p213) target = $region44
    $region43: #{hubert_encoder_forward.4} parent=5 // pred_region
      %s217 = ssub.s32 %s12, 1
      %p218 = scmp.lt.s32.totalorder %s17, 1
      %s219 = scalar_select %p218, %s17, 1
      %s220 = smul.addr %s219, 4
      %s221 = smul.addr %s220, 4
      %s222 = scalar_lea.vmem %s0, %s221
      %p223 = pneg %p38
      %p224 = pneg %p35
      %p225 = pneg %p59
      %p226 = pneg %p56
      %p227 = pneg %p80
      %p228 = pneg %p77
      %p229 = pneg %p101
      %p230 = pneg %p98
      %p231 = pneg %p122
      %p232 = pneg %p119
      %p233 = pneg %p143
      %p234 = pneg %p140
      %p235 = pneg %p169
      %p236 = pneg %p166
      %p237 = scmp.lt.s32.totalorder %s17, 1
      %s238 = scalar_select %p237, %s17, 1
      %s239 = smul.addr %s238, 4
      %s240 = smul.addr %s239, 4
      %s241 = scalar_lea.vmem %s6, %s240
      %p242 = scmp.lt.s32.totalorder %s17, 1
      %s243 = scalar_select %p242, %s17, 1
      %s244 = smul.addr %s243, 4
      %s245 = smul.addr %s244, 4
      %s246 = scalar_lea.vmem %s0, %s245
      %p247 = scmp.lt.s32.totalorder %s17, 1
      %s248 = scalar_select %p247, %s17, 1
      %s249 = smul.addr %s248, 4
      %s250 = smul.addr %s249, 4
      %s251 = scalar_lea.vmem %s6, %s250
      %v253 = vld [vmem:[%s246] sm:$0xf]
      %v254 = vld [vmem:[%s246 + $0x4] sm:$0xf]
      %v255 = vld [vmem:[%s246 + $0x8] sm:$0xf]
      %v256 = vld [vmem:[%s246 + $0xc] sm:$0xf]
      %v257 = vld [vmem:[%s1] sm:$0xf]
      %v258 = vld [vmem:[%s1 + $0x4] sm:$0xf]
      %v259 = vld [vmem:[%s1 + $0x8] sm:$0xf]
      %v260 = vld [vmem:[%s1 + $0xc] sm:$0xf]
      %v261 = vld [vmem:[%s1 + $0x10] sm:$0xf]
      %v262 = vld [vmem:[%s1 + $0x14] sm:$0xf]
      %v267 = vunpack.c.l.b16 %v253
      %v268 = vunpack.c.l.b16 %v254
      %v269 = vunpack.c.l.b16 %v255
      %v270 = vunpack.c.l.b16 %v256
      %v271 = vpack.c.b16 %v268, %v267
      %v272 = vpack.c.b16 %v270, %v269
      %v279 = vunpack.c.l.b16 %v257
      %v280 = vunpack.c.l.b16 %v258
      %v281 = vunpack.c.l.b16 %v259
      %v282 = vunpack.c.l.b16 %v260
      %v283 = vunpack.c.l.b16 %v261
      %v284 = vunpack.c.l.b16 %v262
      %v285 = vpack.c.b16 %v280, %v279
      %v286 = vpack.c.b16 %v282, %v281
      %v287 = vpack.c.b16 %v284, %v283
      %vm291 = vcmask 392192
      %v293 = vsel %vm291, %v271, 0
      %v296 = vsel %vm291, %v272, 0
      %298 = vmatprep.subr.bf16.mxu0 0
      %299 = vmatpush1.bf16.msra.mxu0 %v285
      %300 = vmatprep.subr.bf16.mxu0 0
      %301 = vmatpush1.bf16.msra.mxu0 %v286
      %302 = vmatprep.subr.bf16.mxu0 0
      %303 = vmatpush1.bf16.msra.mxu0 %v287
      %304 = vmatprep.subr.bf16.mxu0 0
      %305 = vmatpush1.bf16.msra.mxu0 0
      %306 = vmatprep.subr.bf16.mxu0 0
      %307 = vmatpush1.bf16.msra.mxu0 0
      %308 = vmatprep.subr.bf16.mxu0 0
      %309 = vmatpush1.bf16.msra.mxu0 0
      %310 = vmatprep.subr.bf16.mxu0 0
      %311 = vmatpush1.bf16.msra.mxu0 0
      %312 = vmatprep.subr.bf16.mxu0 0
      %313 = vmatpush1.bf16.msra.mxu0 0
      %314 = vmatprep.subr.bf16.mxu0 0
      %315 = vmatpush1.bf16.msra.mxu0 0
      %316 = vmatprep.subr.bf16.mxu0 0
      %317 = vmatpush1.bf16.msra.mxu0 0
      %318 = vmatprep.subr.bf16.mxu0 0
      %319 = vmatpush1.bf16.msra.mxu0 0
      %320 = vmatprep.subr.bf16.mxu0 0
      %321 = vmatpush1.bf16.msra.mxu0 0
      %322 = vmatprep.subr.bf16.mxu0 0
      %323 = vmatpush1.bf16.msra.mxu0 0
      %324 = vmatprep.subr.bf16.mxu0 0
      %325 = vmatpush1.bf16.msra.mxu0 0
      %326 = vmatprep.subr.bf16.mxu0 0
      %327 = vmatpush1.bf16.msra.mxu0 0
      %328 = vmatprep.subr.bf16.mxu0 0
      %329 = vmatpush1.bf16.msra.mxu0 0
      %330 = vmatprep.mubr.bf16.mxu0 0
      %331 = vmatmul.mubr.bf16.gmra.mrb[0].mxu0 %v293
      %v332 = vpop.f32.mrb[0].mxu0
      %v333 = vadd.f32 0.0, %v332
      %v334 = vpop.f32.mrb[0].mxu0
      %v335 = vpop.f32.mrb[0].mxu0
      %v336 = vadd.f32 0.0, %v335
      %v337 = vpop.f32.mrb[0].mxu0
      %338 = vmatprep.mubr.bf16.mxu0 0
      %339 = vmatmul.mubr.bf16.gmra.mrb[0].mxu0 %v296
      %v340 = vpop.f32.mrb[0].mxu0
      %v341 = vadd.f32 0.0, %v340
      %v342 = vpop.f32.mrb[0].mxu0
      %v343 = vpop.f32.mrb[0].mxu0
      %v344 = vadd.f32 0.0, %v343
      %v345 = vpop.f32.mrb[0].mxu0
      %346 = vdwg.mxu0
      %v347 = vmul.f32 %v333, 0.5
      %v348 = vmul.f32 %v336, 0.5
      %v349 = vmul.f32 %v341, 0.5
      %v350 = vmul.f32 %v344, 0.5
      %v351 = vmul.f32 %v333, 0.70710677
      %v352 = vmul.f32 %v336, 0.70710677
      %v353 = vmul.f32 %v341, 0.70710677
      %v354 = vmul.f32 %v344, 0.70710677
      %v355 = verf.f32.pop %v351
      %v356 = verf.f32.pop %v352
      %v357 = verf.f32.pop %v353
      %v358 = verf.f32.pop %v354
      %v359 = vadd.f32 %v355, 1.0
      %v360 = vadd.f32 %v356, 1.0
      %v361 = vadd.f32 %v357, 1.0
      %v362 = vadd.f32 %v358, 1.0
      %v363 = vmul.f32 %v347, %v359
      %v364 = vmul.f32 %v348, %v360
      %v365 = vmul.f32 %v349, %v361
      %v366 = vmul.f32 %v350, %v362
      %v367 = vld [vmem:[%s2] sm:$0x1]
      %v368 = vld [vmem:[%s3] sm:$0x1]
      %vm369 = vcmask 130048
      %v370 = vsel %vm369, %v363, 0.0
      %371 = vadd.xlane.f32.xlu0 %v370
      %v372 = vpop.xlane.xlu0 %371
      %v373 = vsel %vm369, %v364, 0.0
      %374 = vadd.xlane.f32.xlu0 %v373
      %v375 = vpop.xlane.xlu0 %374
      %v376 = vsel %vm369, %v365, 0.0
      %377 = vadd.xlane.f32.xlu0 %v376
      %v378 = vpop.xlane.xlu0 %377
      %vm379 = vcmask 129024
      %v380 = vsel %vm379, %v366, 0.0
      %381 = vadd.xlane.f32.xlu0 %v380
      %v382 = vpop.xlane.xlu0 %381
      %v383 = vrcp.pop 16.0
      %v384 = vmul.f32 %v372, %v383
      %v385 = vmul.f32 %v375, %v383
      %v386 = vmul.f32 %v378, %v383
      %v387 = vmul.f32 %v382, %v383
      %v388 = vsub.f32 %v363, %v384
      %v389 = vsub.f32 %v364, %v385
      %v390 = vsub.f32 %v365, %v386
      %v391 = vsub.f32 %v366, %v387
      %v392 = vmul.f32 %v388, %v388
      %v393 = vmul.f32 %v389, %v389
      %v394 = vmul.f32 %v390, %v390
      %v395 = vmul.f32 %v391, %v391
      %v396 = vsel %vm369, %v392, 0.0
      %397 = vadd.xlane.f32.xlu0 %v396
      %v398 = vpop.xlane.xlu0 %397
      %v399 = vsel %vm369, %v393, 0.0
      %400 = vadd.xlane.f32.xlu0 %v399
      %v401 = vpop.xlane.xlu0 %400
      %v402 = vsel %vm369, %v394, 0.0
      %403 = vadd.xlane.f32.xlu0 %v402
      %v404 = vpop.xlane.xlu0 %403
      %v405 = vsel %vm379, %v395, 0.0
      %406 = vadd.xlane.f32.xlu0 %v405
      %v407 = vpop.xlane.xlu0 %406
      %v408 = vmul.f32 %v398, %v383
      %v409 = vmul.f32 %v401, %v383
      %v410 = vmul.f32 %v404, %v383
      %v411 = vmul.f32 %v407, %v383
      %v412 = vadd.f32 %v408, 1e-05
      %v413 = vadd.f32 %v409, 1e-05
      %v414 = vadd.f32 %v410, 1e-05
      %v415 = vadd.f32 %v411, 1e-05
      %v416 = vrsqrt.pop %v412
      %v417 = vrsqrt.pop %v413
      %v418 = vrsqrt.pop %v414
      %v419 = vrsqrt.pop %v415
      %v420 = vmul.f32 %v388, %v416
      %v421 = vmul.f32 %v389, %v417
      %v422 = vmul.f32 %v390, %v418
      %v423 = vmul.f32 %v391, %v419
      %v425 = vlaneseq
      %v426 = vshrl.u32 %v425, 7
      %v427 = vsub.s32 0, %v426
      %v428 = vrot.slane %v367, %v427
      %v430 = vmul.f32 %v420, %v428
      %v431 = vmul.f32 %v421, %v428
      %v432 = vmul.f32 %v422, %v428
      %v433 = vmul.f32 %v423, %v428
      %v435 = vlaneseq
      %v436 = vshrl.u32 %v435, 7
      %v437 = vsub.s32 0, %v436
      %v438 = vrot.slane %v368, %v437
      %v440 = vadd.f32 %v430, %v438
      %v441 = vadd.f32 %v431, %v438
      %v442 = vadd.f32 %v432, %v438
      %v443 = vadd.f32 %v433, %v438
      %v444 = vpack.c.bf16 %v441, %v440
      %v445 = vpack.c.bf16 %v443, %v442
      %v446 = vld [vmem:[%s4] sm:$0xf]
      %v447 = vld [vmem:[%s4 + $0x4] sm:$0xf]
      %v448 = vld [vmem:[%s5] sm:$0x1]
      %v450 = vlaneseq
      %v451 = vshrl.u32 %v450, 7
      %v452 = vsub.s32 0, %v451
      %v453 = vrot.slane %v448, %v452
      %v457 = vunpack.c.l.b16 %v446
      %v458 = vunpack.c.l.b16 %v447
      %v459 = vpack.c.b16 %v458, %v457
      %v462 = vsel %vm369, %v444, 0
      %v465 = vsel %vm369, %v445, 0
      %467 = vmatprep.subr.bf16.mxu0 0
      %468 = vmatpush1.bf16.msra.mxu0 %v459
      %469 = vmatprep.subr.bf16.mxu0 0
      %470 = vmatpush1.bf16.msra.mxu0 0
      %471 = vmatprep.subr.bf16.mxu0 0
      %472 = vmatpush1.bf16.msra.mxu0 0
      %473 = vmatprep.subr.bf16.mxu0 0
      %474 = vmatpush1.bf16.msra.mxu0 0
      %475 = vmatprep.subr.bf16.mxu0 0
      %476 = vmatpush1.bf16.msra.mxu0 0
      %477 = vmatprep.subr.bf16.mxu0 0
      %478 = vmatpush1.bf16.msra.mxu0 0
      %479 = vmatprep.subr.bf16.mxu0 0
      %480 = vmatpush1.bf16.msra.mxu0 0
      %481 = vmatprep.subr.bf16.mxu0 0
      %482 = vmatpush1.bf16.msra.mxu0 0
      %483 = vmatprep.subr.bf16.mxu0 0
      %484 = vmatpush1.bf16.msra.mxu0 0
      %485 = vmatprep.subr.bf16.mxu0 0
      %486 = vmatpush1.bf16.msra.mxu0 0
      %487 = vmatprep.subr.bf16.mxu0 0
      %488 = vmatpush1.bf16.msra.mxu0 0
      %489 = vmatprep.subr.bf16.mxu0 0
      %490 = vmatpush1.bf16.msra.mxu0 0
      %491 = vmatprep.subr.bf16.mxu0 0
      %492 = vmatpush1.bf16.msra.mxu0 0
      %493 = vmatprep.subr.bf16.mxu0 0
      %494 = vmatpush1.bf16.msra.mxu0 0
      %495 = vmatprep.subr.bf16.mxu0 0
      %496 = vmatpush1.bf16.msra.mxu0 0
      %497 = vmatprep.subr.bf16.mxu0 0
      %498 = vmatpush1.bf16.msra.mxu0 0
      %499 = vmatprep.mubr.bf16.mxu0 0
      %500 = vmatmul.mubr.bf16.gmra.mrb[0].mxu0 %v462
      %v501 = vpop.f32.mrb[0].mxu0
      %v502 = vadd.f32 %v453, %v501
      %v503 = vpop.f32.mrb[0].mxu0
      %v504 = vpop.f32.mrb[0].mxu0
      %v505 = vadd.f32 %v453, %v504
      %v506 = vpop.f32.mrb[0].mxu0
      %507 = vmatprep.mubr.bf16.mxu0 0
      %508 = vmatmul.mubr.bf16.gmra.mrb[0].mxu0 %v465
      %v509 = vpop.f32.mrb[0].mxu0
      %v510 = vadd.f32 %v453, %v509
      %v511 = vpop.f32.mrb[0].mxu0
      %v512 = vpop.f32.mrb[0].mxu0
      %v513 = vadd.f32 %v453, %v512
      %v514 = vpop.f32.mrb[0].mxu0
      %515 = vdwg.mxu0
      %v516 = vpack.c.bf16 %v505, %v502
      %v517 = vpack.c.bf16 %v513, %v510
      %v520 = vunpack.c.l.b16 %v516
      %v521 = vunpack.c.h.b16 %v516
      %v522 = vunpack.c.l.b16 %v517
      %v523 = vunpack.c.h.b16 %v517
      %v524 = vpack.c.b16 %v520, %v520
      %v525 = vpack.c.b16 %v521, %v521
      %v526 = vpack.c.b16 %v522, %v522
      %v527 = vpack.c.b16 %v523, %v523
      %vm532 = vcmask 257024
      %533 = vst.msk [vmem:[%s251] sm:$0xf] %vm532, %v524
      %534 = vst.msk [vmem:[%s251 + $0x4] sm:$0xf] %vm532, %v525
      %535 = vst.msk [vmem:[%s251 + $0x8] sm:$0xf] %vm532, %v526
      %vm536 = vcmask 257024
      %vm537 = vsmask.f32 3328
      %vm538 = vmand %vm536, %vm537
      %v539 = vld [vmem:[%s251 + $0xc] sm:$0xf]
      %v540 = vsel %vm538, %v527, %v539
      %541 = vst [vmem:[%s251 + $0xc] sm:$0xf] %v540
      %p542 = scmp.lt.s32.totalorder %s17, 1
      %s543 = scalar_select %p542, %s17, 1
      %s544 = smul.addr %s543, 4
      %s545 = smul.addr %s544, 4
      %s546 = scalar_lea.vmem %s6, %s545
      // Predicated region
      $region45: #{hubert_encoder_forward.4} parent=43 // pred_check
        %p547 = pneg %p166
      $region46: #{hubert_encoder_forward.4} parent=43 // pred_check_branch
        %549 = sbr.rel (%p547) target = $region48
      $region47: #{hubert_encoder_forward.4} parent=43 // pred_region
        _
      $region48: #{hubert_encoder_forward.4} parent=43 // pred_fallthru
        _
    $region44: #{hubert_encoder_forward.4} parent=5 // pred_fallthru
      _
    %p550 = scmp.le.s32.totalorder 2, %s12
    // Predicated region
    $region49: #{hubert_encoder_forward.4} parent=5 // pred_check
      %p551 = pneg %p550
    $region50: #{hubert_encoder_forward.4} parent=5 // pred_check_branch
      %553 = sbr.rel (%p551) target = $region52
    $region51: #{hubert_encoder_forward.4} parent=5 // pred_region
      %s554 = ssub.s32 %s12, 2
      // Predicated region
      $region53: #{hubert_encoder_forward.4} parent=51 // pred_check
        %p555 = pneg %p172
      $region54: #{hubert_encoder_forward.4} parent=51 // pred_check_branch
        %557 = sbr.rel (%p555) target = $region56
      $region55: #{hubert_encoder_forward.4} parent=51 // pred_region
        %p558 = scmp.lt.s32.totalorder %s18, 1
        %s559 = scalar_select %p558, %s18, 1
        %s560 = smul.addr %s559, 4
        %s561 = smul.addr %s560, 4
        %s562 = scalar_lea.vmem %s6, %s561
      $region56: #{hubert_encoder_forward.4} parent=51 // pred_fallthru
        _
    $region52: #{hubert_encoder_forward.4} parent=5 // pred_fallthru
      _
  $region6: #{hubert_encoder_forward.4} parent=0 // loop_footer
    %s16 = sadd.s32 1, %s12
  $region7: #{hubert_encoder_forward.4} parent=0 // loop_footer_branch
    %11 = sbr.rel target = $region3
  $region8: #{hubert_encoder_forward.4} parent=0 // loop_exit
    _

// kernel: hubert_encoder_forward.5
$region0: #{hubert_encoder_forward.5}
  #allocation0 [shape = 'u32[]', space=smem, size = 0x4, offset = 0x4, fixed_abs, tag = 'smem constant byte address 0x4 - core index']
  #allocation1 [shape = 'u32[144,128]{1,0:T(1,128)}', space=vmem, size = 0x12000, scoped, tag = 'internal scratch']
  #allocation2 [shape = 'f32[62,32]{1,0:T(8,128)}', space=vmem, size = 0x8000, scoped, tag = 'scratch operand']
  #allocation3 [shape = 'f32[62,32]{1,0:T(8,128)}', space=vmem, size = 0x8000, scoped, tag = 'scratch operand']
  %s0 = inlined_call_operand.vmem [shape: bf16[62,32], index: 0, kind: input, shape index: {}]
  %s1 = inlined_call_operand.vmem [shape: bf16[62,512], index: 1, kind: input, shape index: {}]
  %s2 = inlined_call_operand.vmem [shape: bf16[4,128,8], index: 2, kind: input, shape index: {}]
  %s3 = inlined_call_operand.vmem [shape: f32[1,32], index: 3, kind: input, shape index: {}]
  %s4 = inlined_call_operand.vmem [shape: f32[62,62], index: 4, kind: input, shape index: {}]
  %s5 = inlined_call_operand.vmem [shape: f32[1,32], index: 5, kind: input, shape index: {}]
  %s6 = inlined_call_operand.vmem [shape: f32[1,32], index: 6, kind: input, shape index: {}]
  %s7 = inlined_call_operand.vmem [shape: bf16[2,32,96], index: 7, kind: input, shape index: {}]
  %s8 = inlined_call_operand.vmem [shape: f32[2,1,96], index: 8, kind: input, shape index: {}]
  %s9 = inlined_call_operand.vmem [shape: bf16[2,32,32], index: 9, kind: input, shape index: {}]
  %s10 = inlined_call_operand.vmem [shape: f32[2,1,32], index: 10, kind: input, shape index: {}]
  %s11 = inlined_call_operand.vmem [shape: f32[2,1,32], index: 11, kind: input, shape index: {}]
  %s12 = inlined_call_operand.vmem [shape: f32[2,1,32], index: 12, kind: input, shape index: {}]
  %s13 = inlined_call_operand.vmem [shape: bf16[2,32,64], index: 13, kind: input, shape index: {}]
  %s14 = inlined_call_operand.vmem [shape: f32[2,1,64], index: 14, kind: input, shape index: {}]
  %s15 = inlined_call_operand.vmem [shape: bf16[2,64,32], index: 15, kind: input, shape index: {}]
  %s16 = inlined_call_operand.vmem [shape: f32[2,1,32], index: 16, kind: input, shape index: {}]
  %s17 = inlined_call_operand.vmem [shape: f32[2,1,32], index: 17, kind: input, shape index: {}]
  %s18 = inlined_call_operand.vmem [shape: f32[2,1,32], index: 18, kind: input, shape index: {}]
  %s19 = inlined_call_operand.vmem [shape: f32[62,32], index: 19, kind: output, shape index: {}]
  %s20 = sld [smem:[#allocation0]]
  $region113: #{hubert_encoder_forward.5} parent=0
    _
  %s22 = ssub.s32 1, %s20
  %s23 = scalar_select 0, %s22, %s20
  loop: start=0, step=1, limit=4
  $region2: #{hubert_encoder_forward.5} parent=0 // loop_pre_header
    _
  $region3: #{hubert_encoder_forward.5} parent=0 // loop_header
    %s25 = sphi 0, %s29
    %p26 = scmp.ge.s32.totalorder %s25, 4
    %s33 = sphi 0, %s33
    %s35 = sphi 0, %s33
    %s36 = sphi 0, %s35
    %s50 = sphi 0, %s36
    %s54 = sphi 0, %s54
    %s56 = sphi 0, %s54
    %s57 = sphi 0, %s56
    %s71 = sphi 0, %s57
    %s75 = sphi 0, %s75
    %s77 = sphi 0, %s75
    %s78 = sphi 0, %s77
    %s92 = sphi 0, %s78
    %s96 = sphi 0, %s96
    %s98 = sphi 0, %s96
    %s99 = sphi 0, %s98
    %s113 = sphi 0, %s99
    %s117 = sphi 0, %s117
    %s119 = sphi 0, %s117
    %s120 = sphi 0, %s119
    %s134 = sphi 0, %s120
    %s138 = sphi 0, %s138
    %s140 = sphi 0, %s138
    %s141 = sphi 0, %s140
    %s155 = sphi 0, %s141
    %s159 = sphi 0, %s159
    %s161 = sphi 0, %s159
    %s162 = sphi 0, %s161
    %s176 = sphi 0, %s162
    %s182 = sphi 0, %s184
    %s185 = sphi 0, %s182
    %s186 = sphi 0, %s185
    %s202 = sphi 0, %s186
    %s208 = sphi 0, %s210
    %s211 = sphi 0, %s208
    %s212 = sphi 0, %s211
    %s228 = sphi 0, %s212
    %s234 = sphi 0, %s236
    %s237 = sphi 0, %s234
    %s238 = sphi 0, %s237
    %s254 = sphi 0, %s238
    %s260 = sphi 0, %s262
    %s263 = sphi 0, %s260
    %s264 = sphi 0, %s263
    %s280 = sphi 0, %s264
    %s286 = sphi 0, %s288
    %s289 = sphi 0, %s286
    %s290 = sphi 0, %s289
    %s306 = sphi 0, %s290
    %s312 = sphi 0, %s314
    %s315 = sphi 0, %s312
    %s316 = sphi 0, %s315
    %s332 = sphi 0, %s316
    %s338 = sphi 0, %s340
    %s341 = sphi 0, %s338
    %s342 = sphi 0, %s341
    %s358 = sphi 0, %s342
    %s364 = sphi 0, %s366
    %s367 = sphi 0, %s364
    %s368 = sphi 0, %s367
    %s384 = sphi 0, %s368
    %s390 = sphi 0, %s392
    %s393 = sphi 0, %s390
    %s394 = sphi 0, %s393
    %s410 = sphi 0, %s394
    %s416 = sphi 0, %s418
    %s419 = sphi 0, %s416
    %s420 = sphi 0, %s419
    %s436 = sphi 0, %s420
    %s442 = sphi 0, %s444
    %s445 = sphi 0, %s442
    %s446 = sphi 0, %s445
    %s462 = sphi 0, %s446
    %s468 = sphi 0, %s470
    %s471 = sphi 0, %s468
    %s472 = sphi 0, %s471
    %s488 = sphi 0, %s472
    %s492 = sphi 0, %s492
    %s494 = sphi 0, %s492
    %s495 = sphi 0, %s494
    %s509 = sphi 0, %s495
  $region4: #{hubert_encoder_forward.5} parent=0 // loop_header_branch
    %28 = sbr.rel (%p26) target = $region8
  $region5: #{hubert_encoder_forward.5} parent=0 // loop_body
    %s30 = ssub.s32 %s25, 1
    %s31 = ssub.s32 %s25, 2
    %s32 = sadd.s32 %s25, 1
    %s34 = sadd.s32 %s33, 1
    %p37 = scmp.eq.s32.totalorder %s25, 1
    %p38 = scmp.ne.s32.totalorder %s33, %s35
    %p39 = scmp.eq.s32.totalorder %s25, 0
    %p40 = por %p38, %p39
    %p41 = scmp.ne.s32.totalorder %s33, %s35
    %p42 = scmp.eq.s32.totalorder %s30, 1
    %p43 = por %p41, %p42
    %p44 = scmp.ne.s32.totalorder %s35, %s36
    %p45 = scmp.eq.s32.totalorder %s30, 0
    %p46 = por %p44, %p45
    %p47 = scmp.ne.s32.totalorder %s35, %s36
    %p48 = scmp.eq.s32.totalorder %s31, 1
    %p49 = por %p47, %p48
    %p51 = scmp.ne.s32.totalorder %s36, %s50
    %p52 = scmp.eq.s32.totalorder %s31, 0
    %p53 = por %p51, %p52
    %s55 = sadd.s32 %s54, 1
    %p58 = scmp.eq.s32.totalorder %s25, 1
    %p59 = scmp.ne.s32.totalorder %s54, %s56
    %p60 = scmp.eq.s32.totalorder %s25, 0
    %p61 = por %p59, %p60
    %p62 = scmp.ne.s32.totalorder %s54, %s56
    %p63 = scmp.eq.s32.totalorder %s30, 1
    %p64 = por %p62, %p63
    %p65 = scmp.ne.s32.totalorder %s56, %s57
    %p66 = scmp.eq.s32.totalorder %s30, 0
    %p67 = por %p65, %p66
    %p68 = scmp.ne.s32.totalorder %s56, %s57
    %p69 = scmp.eq.s32.totalorder %s31, 1
    %p70 = por %p68, %p69
    %p72 = scmp.ne.s32.totalorder %s57, %s71
    %p73 = scmp.eq.s32.totalorder %s31, 0
    %p74 = por %p72, %p73
    %s76 = sadd.s32 %s75, 1
    %p79 = scmp.eq.s32.totalorder %s25, 1
    %p80 = scmp.ne.s32.totalorder %s75, %s77
    %p81 = scmp.eq.s32.totalorder %s25, 0
    %p82 = por %p80, %p81
    %p83 = scmp.ne.s32.totalorder %s75, %s77
    %p84 = scmp.eq.s32.totalorder %s30, 1
    %p85 = por %p83, %p84
    %p86 = scmp.ne.s32.totalorder %s77, %s78
    %p87 = scmp.eq.s32.totalorder %s30, 0
    %p88 = por %p86, %p87
    %p89 = scmp.ne.s32.totalorder %s77, %s78
    %p90 = scmp.eq.s32.totalorder %s31, 1
    %p91 = por %p89, %p90
    %p93 = scmp.ne.s32.totalorder %s78, %s92
    %p94 = scmp.eq.s32.totalorder %s31, 0
    %p95 = por %p93, %p94
    %s97 = sadd.s32 %s96, 1
    %p100 = scmp.eq.s32.totalorder %s25, 1
    %p101 = scmp.ne.s32.totalorder %s96, %s98
    %p102 = scmp.eq.s32.totalorder %s25, 0
    %p103 = por %p101, %p102
    %p104 = scmp.ne.s32.totalorder %s96, %s98
    %p105 = scmp.eq.s32.totalorder %s30, 1
    %p106 = por %p104, %p105
    %p107 = scmp.ne.s32.totalorder %s98, %s99
    %p108 = scmp.eq.s32.totalorder %s30, 0
    %p109 = por %p107, %p108
    %p110 = scmp.ne.s32.totalorder %s98, %s99
    %p111 = scmp.eq.s32.totalorder %s31, 1
    %p112 = por %p110, %p111
    %p114 = scmp.ne.s32.totalorder %s99, %s113
    %p115 = scmp.eq.s32.totalorder %s31, 0
    %p116 = por %p114, %p115
    %s118 = sadd.s32 %s117, 1
    %p121 = scmp.eq.s32.totalorder %s25, 1
    %p122 = scmp.ne.s32.totalorder %s117, %s119
    %p123 = scmp.eq.s32.totalorder %s25, 0
    %p124 = por %p122, %p123
    %p125 = scmp.ne.s32.totalorder %s117, %s119
    %p126 = scmp.eq.s32.totalorder %s30, 1
    %p127 = por %p125, %p126
    %p128 = scmp.ne.s32.totalorder %s119, %s120
    %p129 = scmp.eq.s32.totalorder %s30, 0
    %p130 = por %p128, %p129
    %p131 = scmp.ne.s32.totalorder %s119, %s120
    %p132 = scmp.eq.s32.totalorder %s31, 1
    %p133 = por %p131, %p132
    %p135 = scmp.ne.s32.totalorder %s120, %s134
    %p136 = scmp.eq.s32.totalorder %s31, 0
    %p137 = por %p135, %p136
    %s139 = sadd.s32 %s138, 1
    %p142 = scmp.eq.s32.totalorder %s25, 1
    %p143 = scmp.ne.s32.totalorder %s138, %s140
    %p144 = scmp.eq.s32.totalorder %s25, 0
    %p145 = por %p143, %p144
    %p146 = scmp.ne.s32.totalorder %s138, %s140
    %p147 = scmp.eq.s32.totalorder %s30, 1
    %p148 = por %p146, %p147
    %p149 = scmp.ne.s32.totalorder %s140, %s141
    %p150 = scmp.eq.s32.totalorder %s30, 0
    %p151 = por %p149, %p150
    %p152 = scmp.ne.s32.totalorder %s140, %s141
    %p153 = scmp.eq.s32.totalorder %s31, 1
    %p154 = por %p152, %p153
    %p156 = scmp.ne.s32.totalorder %s141, %s155
    %p157 = scmp.eq.s32.totalorder %s31, 0
    %p158 = por %p156, %p157
    %s160 = sadd.s32 %s159, 1
    %p163 = scmp.eq.s32.totalorder %s25, 1
    %p164 = scmp.ne.s32.totalorder %s159, %s161
    %p165 = scmp.eq.s32.totalorder %s25, 0
    %p166 = por %p164, %p165
    %p167 = scmp.ne.s32.totalorder %s159, %s161
    %p168 = scmp.eq.s32.totalorder %s30, 1
    %p169 = por %p167, %p168
    %p170 = scmp.ne.s32.totalorder %s161, %s162
    %p171 = scmp.eq.s32.totalorder %s30, 0
    %p172 = por %p170, %p171
    %p173 = scmp.ne.s32.totalorder %s161, %s162
    %p174 = scmp.eq.s32.totalorder %s31, 1
    %p175 = por %p173, %p174
    %p177 = scmp.ne.s32.totalorder %s162, %s176
    %p178 = scmp.eq.s32.totalorder %s31, 0
    %p179 = por %p177, %p178
    %s180 = ssub.s32 %s25, %s32
    %p181 = scmp.eq.s32.totalorder %s180, 0
    %s183 = sadd.s32 %s182, 1
    %s184 = scalar_select %p181, %s182, %s183
    %p187 = pneg %p181
    %p188 = scmp.eq.s32.totalorder %s25, 1
    %p189 = por %p187, %p188
    %p190 = scmp.ne.s32.totalorder %s182, %s185
    %p191 = scmp.eq.s32.totalorder %s25, 0
    %p192 = por %p190, %p191
    %p193 = scmp.ne.s32.totalorder %s182, %s185
    %p194 = scmp.eq.s32.totalorder %s30, 1
    %p195 = por %p193, %p194
    %p196 = scmp.ne.s32.totalorder %s185, %s186
    %p197 = scmp.eq.s32.totalorder %s30, 0
    %p198 = por %p196, %p197
    %p199 = scmp.ne.s32.totalorder %s185, %s186
    %p200 = scmp.eq.s32.totalorder %s31, 1
    %p201 = por %p199, %p200
    %p203 = scmp.ne.s32.totalorder %s186, %s202
    %p204 = scmp.eq.s32.totalorder %s31, 0
    %p205 = por %p203, %p204
    %s206 = ssub.s32 %s25, %s32
    %p207 = scmp.eq.s32.totalorder %s206, 0
    %s209 = sadd.s32 %s208, 1
    %s210 = scalar_select %p207, %s208, %s209
    %p213 = pneg %p207
    %p214 = scmp.eq.s32.totalorder %s25, 1
    %p215 = por %p213, %p214
    %p216 = scmp.ne.s32.totalorder %s208, %s211
    %p217 = scmp.eq.s32.totalorder %s25, 0
    %p218 = por %p216, %p217
    %p219 = scmp.ne.s32.totalorder %s208, %s211
    %p220 = scmp.eq.s32.totalorder %s30, 1
    %p221 = por %p219, %p220
    %p222 = scmp.ne.s32.totalorder %s211, %s212
    %p223 = scmp.eq.s32.totalorder %s30, 0
    %p224 = por %p222, %p223
    %p225 = scmp.ne.s32.totalorder %s211, %s212
    %p226 = scmp.eq.s32.totalorder %s31, 1
    %p227 = por %p225, %p226
    %p229 = scmp.ne.s32.totalorder %s212, %s228
    %p230 = scmp.eq.s32.totalorder %s31, 0
    %p231 = por %p229, %p230
    %s232 = ssub.s32 %s25, %s32
    %p233 = scmp.eq.s32.totalorder %s232, 0
    %s235 = sadd.s32 %s234, 1
    %s236 = scalar_select %p233, %s234, %s235
    %p239 = pneg %p233
    %p240 = scmp.eq.s32.totalorder %s25, 1
    %p241 = por %p239, %p240
    %p242 = scmp.ne.s32.totalorder %s234, %s237
    %p243 = scmp.eq.s32.totalorder %s25, 0
    %p244 = por %p242, %p243
    %p245 = scmp.ne.s32.totalorder %s234, %s237
    %p246 = scmp.eq.s32.totalorder %s30, 1
    %p247 = por %p245, %p246
    %p248 = scmp.ne.s32.totalorder %s237, %s238
    %p249 = scmp.eq.s32.totalorder %s30, 0
    %p250 = por %p248, %p249
    %p251 = scmp.ne.s32.totalorder %s237, %s238
    %p252 = scmp.eq.s32.totalorder %s31, 1
    %p253 = por %p251, %p252
    %p255 = scmp.ne.s32.totalorder %s238, %s254
    %p256 = scmp.eq.s32.totalorder %s31, 0
    %p257 = por %p255, %p256
    %s258 = ssub.s32 %s25, %s32
    %p259 = scmp.eq.s32.totalorder %s258, 0
    %s261 = sadd.s32 %s260, 1
    %s262 = scalar_select %p259, %s260, %s261
    %p265 = pneg %p259
    %p266 = scmp.eq.s32.totalorder %s25, 1
    %p267 = por %p265, %p266
    %p268 = scmp.ne.s32.totalorder %s260, %s263
    %p269 = scmp.eq.s32.totalorder %s25, 0
    %p270 = por %p268, %p269
    %p271 = scmp.ne.s32.totalorder %s260, %s263
    %p272 = scmp.eq.s32.totalorder %s30, 1
    %p273 = por %p271, %p272
    %p274 = scmp.ne.s32.totalorder %s263, %s264
    %p275 = scmp.eq.s32.totalorder %s30, 0
    %p276 = por %p274, %p275
    %p277 = scmp.ne.s32.totalorder %s263, %s264
    %p278 = scmp.eq.s32.totalorder %s31, 1
    %p279 = por %p277, %p278
    %p281 = scmp.ne.s32.totalorder %s264, %s280
    %p282 = scmp.eq.s32.totalorder %s31, 0
    %p283 = por %p281, %p282
    %s284 = ssub.s32 %s25, %s32
    %p285 = scmp.eq.s32.totalorder %s284, 0
    %s287 = sadd.s32 %s286, 1
    %s288 = scalar_select %p285, %s286, %s287
    %p291 = pneg %p285
    %p292 = scmp.eq.s32.totalorder %s25, 1
    %p293 = por %p291, %p292
    %p294 = scmp.ne.s32.totalorder %s286, %s289
    %p295 = scmp.eq.s32.totalorder %s25, 0
    %p296 = por %p294, %p295
    %p297 = scmp.ne.s32.totalorder %s286, %s289
    %p298 = scmp.eq.s32.totalorder %s30, 1
    %p299 = por %p297, %p298
    %p300 = scmp.ne.s32.totalorder %s289, %s290
    %p301 = scmp.eq.s32.totalorder %s30, 0
    %p302 = por %p300, %p301
    %p303 = scmp.ne.s32.totalorder %s289, %s290
    %p304 = scmp.eq.s32.totalorder %s31, 1
    %p305 = por %p303, %p304
    %p307 = scmp.ne.s32.totalorder %s290, %s306
    %p308 = scmp.eq.s32.totalorder %s31, 0
    %p309 = por %p307, %p308
    %s310 = ssub.s32 %s25, %s32
    %p311 = scmp.eq.s32.totalorder %s310, 0
    %s313 = sadd.s32 %s312, 1
    %s314 = scalar_select %p311, %s312, %s313
    %p317 = pneg %p311
    %p318 = scmp.eq.s32.totalorder %s25, 1
    %p319 = por %p317, %p318
    %p320 = scmp.ne.s32.totalorder %s312, %s315
    %p321 = scmp.eq.s32.totalorder %s25, 0
    %p322 = por %p320, %p321
    %p323 = scmp.ne.s32.totalorder %s312, %s315
    %p324 = scmp.eq.s32.totalorder %s30, 1
    %p325 = por %p323, %p324
    %p326 = scmp.ne.s32.totalorder %s315, %s316
    %p327 = scmp.eq.s32.totalorder %s30, 0
    %p328 = por %p326, %p327
    %p329 = scmp.ne.s32.totalorder %s315, %s316
    %p330 = scmp.eq.s32.totalorder %s31, 1
    %p331 = por %p329, %p330
    %p333 = scmp.ne.s32.totalorder %s316, %s332
    %p334 = scmp.eq.s32.totalorder %s31, 0
    %p335 = por %p333, %p334
    %s336 = ssub.s32 %s25, %s32
    %p337 = scmp.eq.s32.totalorder %s336, 0
    %s339 = sadd.s32 %s338, 1
    %s340 = scalar_select %p337, %s338, %s339
    %p343 = pneg %p337
    %p344 = scmp.eq.s32.totalorder %s25, 1
    %p345 = por %p343, %p344
    %p346 = scmp.ne.s32.totalorder %s338, %s341
    %p347 = scmp.eq.s32.totalorder %s25, 0
    %p348 = por %p346, %p347
    %p349 = scmp.ne.s32.totalorder %s338, %s341
    %p350 = scmp.eq.s32.totalorder %s30, 1
    %p351 = por %p349, %p350
    %p352 = scmp.ne.s32.totalorder %s341, %s342
    %p353 = scmp.eq.s32.totalorder %s30, 0
    %p354 = por %p352, %p353
    %p355 = scmp.ne.s32.totalorder %s341, %s342
    %p356 = scmp.eq.s32.totalorder %s31, 1
    %p357 = por %p355, %p356
    %p359 = scmp.ne.s32.totalorder %s342, %s358
    %p360 = scmp.eq.s32.totalorder %s31, 0
    %p361 = por %p359, %p360
    %s362 = ssub.s32 %s25, %s32
    %p363 = scmp.eq.s32.totalorder %s362, 0
    %s365 = sadd.s32 %s364, 1
    %s366 = scalar_select %p363, %s364, %s365
    %p369 = pneg %p363
    %p370 = scmp.eq.s32.totalorder %s25, 1
    %p371 = por %p369, %p370
    %p372 = scmp.ne.s32.totalorder %s364, %s367
    %p373 = scmp.eq.s32.totalorder %s25, 0
    %p374 = por %p372, %p373
    %p375 = scmp.ne.s32.totalorder %s364, %s367
    %p376 = scmp.eq.s32.totalorder %s30, 1
    %p377 = por %p375, %p376
    %p378 = scmp.ne.s32.totalorder %s367, %s368
    %p379 = scmp.eq.s32.totalorder %s30, 0
    %p380 = por %p378, %p379
    %p381 = scmp.ne.s32.totalorder %s367, %s368
    %p382 = scmp.eq.s32.totalorder %s31, 1
    %p383 = por %p381, %p382
    %p385 = scmp.ne.s32.totalorder %s368, %s384
    %p386 = scmp.eq.s32.totalorder %s31, 0
    %p387 = por %p385, %p386
    %s388 = ssub.s32 %s25, %s32
    %p389 = scmp.eq.s32.totalorder %s388, 0
    %s391 = sadd.s32 %s390, 1
    %s392 = scalar_select %p389, %s390, %s391
    %p395 = pneg %p389
    %p396 = scmp.eq.s32.totalorder %s25, 1
    %p397 = por %p395, %p396
    %p398 = scmp.ne.s32.totalorder %s390, %s393
    %p399 = scmp.eq.s32.totalorder %s25, 0
    %p400 = por %p398, %p399
    %p401 = scmp.ne.s32.totalorder %s390, %s393
    %p402 = scmp.eq.s32.totalorder %s30, 1
    %p403 = por %p401, %p402
    %p404 = scmp.ne.s32.totalorder %s393, %s394
    %p405 = scmp.eq.s32.totalorder %s30, 0
    %p406 = por %p404, %p405
    %p407 = scmp.ne.s32.totalorder %s393, %s394
    %p408 = scmp.eq.s32.totalorder %s31, 1
    %p409 = por %p407, %p408
    %p411 = scmp.ne.s32.totalorder %s394, %s410
    %p412 = scmp.eq.s32.totalorder %s31, 0
    %p413 = por %p411, %p412
    %s414 = ssub.s32 %s25, %s32
    %p415 = scmp.eq.s32.totalorder %s414, 0
    %s417 = sadd.s32 %s416, 1
    %s418 = scalar_select %p415, %s416, %s417
    %p421 = pneg %p415
    %p422 = scmp.eq.s32.totalorder %s25, 1
    %p423 = por %p421, %p422
    %p424 = scmp.ne.s32.totalorder %s416, %s419
    %p425 = scmp.eq.s32.totalorder %s25, 0
    %p426 = por %p424, %p425
    %p427 = scmp.ne.s32.totalorder %s416, %s419
    %p428 = scmp.eq.s32.totalorder %s30, 1
    %p429 = por %p427, %p428
    %p430 = scmp.ne.s32.totalorder %s419, %s420
    %p431 = scmp.eq.s32.totalorder %s30, 0
    %p432 = por %p430, %p431
    %p433 = scmp.ne.s32.totalorder %s419, %s420
    %p434 = scmp.eq.s32.totalorder %s31, 1
    %p435 = por %p433, %p434
    %p437 = scmp.ne.s32.totalorder %s420, %s436
    %p438 = scmp.eq.s32.totalorder %s31, 0
    %p439 = por %p437, %p438
    %s440 = ssub.s32 %s25, %s32
    %p441 = scmp.eq.s32.totalorder %s440, 0
    %s443 = sadd.s32 %s442, 1
    %s444 = scalar_select %p441, %s442, %s443
    %p447 = pneg %p441
    %p448 = scmp.eq.s32.totalorder %s25, 1
    %p449 = por %p447, %p448
    %p450 = scmp.ne.s32.totalorder %s442, %s445
    %p451 = scmp.eq.s32.totalorder %s25, 0
    %p452 = por %p450, %p451
    %p453 = scmp.ne.s32.totalorder %s442, %s445
    %p454 = scmp.eq.s32.totalorder %s30, 1
    %p455 = por %p453, %p454
    %p456 = scmp.ne.s32.totalorder %s445, %s446
    %p457 = scmp.eq.s32.totalorder %s30, 0
    %p458 = por %p456, %p457
    %p459 = scmp.ne.s32.totalorder %s445, %s446
    %p460 = scmp.eq.s32.totalorder %s31, 1
    %p461 = por %p459, %p460
    %p463 = scmp.ne.s32.totalorder %s446, %s462
    %p464 = scmp.eq.s32.totalorder %s31, 0
    %p465 = por %p463, %p464
    %s466 = ssub.s32 %s25, %s32
    %p467 = scmp.eq.s32.totalorder %s466, 0
    %s469 = sadd.s32 %s468, 1
    %s470 = scalar_select %p467, %s468, %s469
    %p473 = pneg %p467
    %p474 = scmp.eq.s32.totalorder %s25, 1
    %p475 = por %p473, %p474
    %p476 = scmp.ne.s32.totalorder %s468, %s471
    %p477 = scmp.eq.s32.totalorder %s25, 0
    %p478 = por %p476, %p477
    %p479 = scmp.ne.s32.totalorder %s468, %s471
    %p480 = scmp.eq.s32.totalorder %s30, 1
    %p481 = por %p479, %p480
    %p482 = scmp.ne.s32.totalorder %s471, %s472
    %p483 = scmp.eq.s32.totalorder %s30, 0
    %p484 = por %p482, %p483
    %p485 = scmp.ne.s32.totalorder %s471, %s472
    %p486 = scmp.eq.s32.totalorder %s31, 1
    %p487 = por %p485, %p486
    %p489 = scmp.ne.s32.totalorder %s472, %s488
    %p490 = scmp.eq.s32.totalorder %s31, 0
    %p491 = por %p489, %p490
    %s493 = sadd.s32 %s492, 1
    %p496 = scmp.eq.s32.totalorder %s25, 1
    %p497 = scmp.ne.s32.totalorder %s492, %s494
    %p498 = scmp.eq.s32.totalorder %s25, 0
    %p499 = por %p497, %p498
    %p500 = scmp.ne.s32.totalorder %s492, %s494
    %p501 = scmp.eq.s32.totalorder %s30, 1
    %p502 = por %p500, %p501
    %p503 = scmp.ne.s32.totalorder %s494, %s495
    %p504 = scmp.eq.s32.totalorder %s30, 0
    %p505 = por %p503, %p504
    %p506 = scmp.ne.s32.totalorder %s494, %s495
    %p507 = scmp.eq.s32.totalorder %s31, 1
    %p508 = por %p506, %p507
    %p510 = scmp.ne.s32.totalorder %s495, %s509
    %p511 = scmp.eq.s32.totalorder %s31, 0
    %p512 = por %p510, %p511
    %p513 = scmp.le.s32.totalorder 1, %s25
    %p514 = scmp.lt.s32.totalorder %s25, 3
    %p515 = pnand %p513, %p514
    %p516 = pneg %p515
    // Predicated region
    $region9: #{hubert_encoder_forward.5} parent=5 // pred_check
      _
    $region10: #{hubert_encoder_forward.5} parent=5 // pred_check_branch
      %518 = sbr.rel (%p515) target = $region12
    $region11: #{hubert_encoder_forward.5} parent=5 // pred_region
      %s519 = ssub.s32 %s25, 1
      // Predicated region
      $region13: #{hubert_encoder_forward.5} parent=11 // pred_check
        %p520 = pneg %p46
      $region14: #{hubert_encoder_forward.5} parent=11 // pred_check_branch
        %522 = sbr.rel (%p520) target = $region16
      $region15: #{hubert_encoder_forward.5} parent=11 // pred_region
        _
      $region16: #{hubert_encoder_forward.5} parent=11 // pred_fallthru
        _
      // Predicated region
      $region17: #{hubert_encoder_forward.5} parent=11 // pred_check
        %p523 = pneg %p67
      $region18: #{hubert_encoder_forward.5} parent=11 // pred_check_branch
        %525 = sbr.rel (%p523) target = $region20
      $region19: #{hubert_encoder_forward.5} parent=11 // pred_region
        _
      $region20: #{hubert_encoder_forward.5} parent=11 // pred_fallthru
        _
      // Predicated region
      $region21: #{hubert_encoder_forward.5} parent=11 // pred_check
        %p526 = pneg %p88
      $region22: #{hubert_encoder_forward.5} parent=11 // pred_check_branch
        %528 = sbr.rel (%p526) target = $region24
      $region23: #{hubert_encoder_forward.5} parent=11 // pred_region
        _
      $region24: #{hubert_encoder_forward.5} parent=11 // pred_fallthru
        _
      // Predicated region
      $region25: #{hubert_encoder_forward.5} parent=11 // pred_check
        %p529 = pneg %p109
      $region26: #{hubert_encoder_forward.5} parent=11 // pred_check_branch
        %531 = sbr.rel (%p529) target = $region28
      $region27: #{hubert_encoder_forward.5} parent=11 // pred_region
        _
      $region28: #{hubert_encoder_forward.5} parent=11 // pred_fallthru
        _
      // Predicated region
      $region29: #{hubert_encoder_forward.5} parent=11 // pred_check
        %p532 = pneg %p130
      $region30: #{hubert_encoder_forward.5} parent=11 // pred_check_branch
        %534 = sbr.rel (%p532) target = $region32
      $region31: #{hubert_encoder_forward.5} parent=11 // pred_region
        _
      $region32: #{hubert_encoder_forward.5} parent=11 // pred_fallthru
        _
      // Predicated region
      $region33: #{hubert_encoder_forward.5} parent=11 // pred_check
        %p535 = pneg %p151
      $region34: #{hubert_encoder_forward.5} parent=11 // pred_check_branch
        %537 = sbr.rel (%p535) target = $region36
      $region35: #{hubert_encoder_forward.5} parent=11 // pred_region
        _
      $region36: #{hubert_encoder_forward.5} parent=11 // pred_fallthru
        _
      // Predicated region
      $region37: #{hubert_encoder_forward.5} parent=11 // pred_check
        %p538 = pneg %p172
      $region38: #{hubert_encoder_forward.5} parent=11 // pred_check_branch
        %540 = sbr.rel (%p538) target = $region40
      $region39: #{hubert_encoder_forward.5} parent=11 // pred_region
        _
      $region40: #{hubert_encoder_forward.5} parent=11 // pred_fallthru
        _
    $region12: #{hubert_encoder_forward.5} parent=5 // pred_fallthru
      _
    %p541 = scmp.lt.s32.totalorder %s25, 2
    // Predicated region
    $region41: #{hubert_encoder_forward.5} parent=5 // pred_check
      %p542 = pneg %p541
    $region42: #{hubert_encoder_forward.5} parent=5 // pred_check_branch
      %544 = sbr.rel (%p542) target = $region44
    $region43: #{hubert_encoder_forward.5} parent=5 // pred_region
      // Predicated region
      $region45: #{hubert_encoder_forward.5} parent=43 // pred_check
        %p545 = pneg %p192
      $region46: #{hubert_encoder_forward.5} parent=43 // pred_check_branch
        %547 = sbr.rel (%p545) target = $region48
      $region47: #{hubert_encoder_forward.5} parent=43 // pred_region
        %p548 = scmp.lt.s32.totalorder %s25, 1
        %s549 = scalar_select %p548, %s25, 1
        %s550 = smul.addr %s549, 4
        %s551 = smul.addr %s550, 4
        %s552 = scalar_lea.vmem %s7, %s551
      $region48: #{hubert_encoder_forward.5} parent=43 // pred_fallthru
        _
      // Predicated region
      $region49: #{hubert_encoder_forward.5} parent=43 // pred_check
        %p553 = pneg %p218
      $region50: #{hubert_encoder_forward.5} parent=43 // pred_check_branch
        %555 = sbr.rel (%p553) target = $region52
      $region51: #{hubert_encoder_forward.5} parent=43 // pred_region
        %p556 = scmp.lt.s32.totalorder %s25, 1
        %s557 = scalar_select %p556, %s25, 1
        %s558 = scalar_lea.vmem %s8, %s557
      $region52: #{hubert_encoder_forward.5} parent=43 // pred_fallthru
        _
      // Predicated region
      $region53: #{hubert_encoder_forward.5} parent=43 // pred_check
        %p559 = pneg %p244
      $region54: #{hubert_encoder_forward.5} parent=43 // pred_check_branch
        %561 = sbr.rel (%p559) target = $region56
      $region55: #{hubert_encoder_forward.5} parent=43 // pred_region
        %p562 = scmp.lt.s32.totalorder %s25, 1
        %s563 = scalar_select %p562, %s25, 1
        %s564 = smul.addr %s563, 4
        %s565 = smul.addr %s564, 4
        %s566 = scalar_lea.vmem %s9, %s565
      $region56: #{hubert_encoder_forward.5} parent=43 // pred_fallthru
        _
      // Predicated region
      $region57: #{hubert_encoder_forward.5} parent=43 // pred_check
        %p567 = pneg %p270
      $region58: #{hubert_encoder_forward.5} parent=43 // pred_check_branch
        %569 = sbr.rel (%p567) target = $region60
      $region59: #{hubert_encoder_forward.5} parent=43 // pred_region
        %p570 = scmp.lt.s32.totalorder %s25, 1
        %s571 = scalar_select %p570, %s25, 1
        %s572 = scalar_lea.vmem %s10, %s571
      $region60: #{hubert_encoder_forward.5} parent=43 // pred_fallthru
        _
      // Predicated region
      $region61: #{hubert_encoder_forward.5} parent=43 // pred_check
        %p573 = pneg %p296
      $region62: #{hubert_encoder_forward.5} parent=43 // pred_check_branch
        %575 = sbr.rel (%p573) target = $region64
      $region63: #{hubert_encoder_forward.5} parent=43 // pred_region
        %p576 = scmp.lt.s32.totalorder %s25, 1
        %s577 = scalar_select %p576, %s25, 1
        %s578 = scalar_lea.vmem %s11, %s577
      $region64: #{hubert_encoder_forward.5} parent=43 // pred_fallthru
        _
      // Predicated region
      $region65: #{hubert_encoder_forward.5} parent=43 // pred_check
        %p579 = pneg %p322
      $region66: #{hubert_encoder_forward.5} parent=43 // pred_check_branch
        %581 = sbr.rel (%p579) target = $region68
      $region67: #{hubert_encoder_forward.5} parent=43 // pred_region
        %p582 = scmp.lt.s32.totalorder %s25, 1
        %s583 = scalar_select %p582, %s25, 1
        %s584 = scalar_lea.vmem %s12, %s583
      $region68: #{hubert_encoder_forward.5} parent=43 // pred_fallthru
        _
      // Predicated region
      $region69: #{hubert_encoder_forward.5} parent=43 // pred_check
        %p585 = pneg %p348
      $region70: #{hubert_encoder_forward.5} parent=43 // pred_check_branch
        %587 = sbr.rel (%p585) target = $region72
      $region71: #{hubert_encoder_forward.5} parent=43 // pred_region
        %p588 = scmp.lt.s32.totalorder %s25, 1
        %s589 = scalar_select %p588, %s25, 1
        %s590 = smul.addr %s589, 4
        %s591 = smul.addr %s590, 4
        %s592 = scalar_lea.vmem %s13, %s591
      $region72: #{hubert_encoder_forward.5} parent=43 // pred_fallthru
        _
      // Predicated region
      $region73: #{hubert_encoder_forward.5} parent=43 // pred_check
        %p593 = pneg %p374
      $region74: #{hubert_encoder_forward.5} parent=43 // pred_check_branch
        %595 = sbr.rel (%p593) target = $region76
      $region75: #{hubert_encoder_forward.5} parent=43 // pred_region
        %p596 = scmp.lt.s32.totalorder %s25, 1
        %s597 = scalar_select %p596, %s25, 1
        %s598 = scalar_lea.vmem %s14, %s597
      $region76: #{hubert_encoder_forward.5} parent=43 // pred_fallthru
        _
      // Predicated region
      $region77: #{hubert_encoder_forward.5} parent=43 // pred_check
        %p599 = pneg %p400
      $region78: #{hubert_encoder_forward.5} parent=43 // pred_check_branch
        %601 = sbr.rel (%p599) target = $region80
      $region79: #{hubert_encoder_forward.5} parent=43 // pred_region
        %p602 = scmp.lt.s32.totalorder %s25, 1
        %s603 = scalar_select %p602, %s25, 1
        %s604 = smul.addr %s603, 8
        %s605 = smul.addr %s604, 4
        %s606 = scalar_lea.vmem %s15, %s605
      $region80: #{hubert_encoder_forward.5} parent=43 // pred_fallthru
        _
      // Predicated region
      $region81: #{hubert_encoder_forward.5} parent=43 // pred_check
        %p607 = pneg %p426
      $region82: #{hubert_encoder_forward.5} parent=43 // pred_check_branch
        %609 = sbr.rel (%p607) target = $region84
      $region83: #{hubert_encoder_forward.5} parent=43 // pred_region
        %p610 = scmp.lt.s32.totalorder %s25, 1
        %s611 = scalar_select %p610, %s25, 1
        %s612 = scalar_lea.vmem %s16, %s611
      $region84: #{hubert_encoder_forward.5} parent=43 // pred_fallthru
        _
      // Predicated region
      $region85: #{hubert_encoder_forward.5} parent=43 // pred_check
        %p613 = pneg %p452
      $region86: #{hubert_encoder_forward.5} parent=43 // pred_check_branch
        %615 = sbr.rel (%p613) target = $region88
      $region87: #{hubert_encoder_forward.5} parent=43 // pred_region
        %p616 = scmp.lt.s32.totalorder %s25, 1
        %s617 = scalar_select %p616, %s25, 1
        %s618 = scalar_lea.vmem %s17, %s617
      $region88: #{hubert_encoder_forward.5} parent=43 // pred_fallthru
        _
      // Predicated region
      $region89: #{hubert_encoder_forward.5} parent=43 // pred_check
        %p619 = pneg %p478
      $region90: #{hubert_encoder_forward.5} parent=43 // pred_check_branch
        %621 = sbr.rel (%p619) target = $region92
      $region91: #{hubert_encoder_forward.5} parent=43 // pred_region
        %p622 = scmp.lt.s32.totalorder %s25, 1
        %s623 = scalar_select %p622, %s25, 1
        %s624 = scalar_lea.vmem %s18, %s623
      $region92: #{hubert_encoder_forward.5} parent=43 // pred_fallthru
        _
    $region44: #{hubert_encoder_forward.5} parent=5 // pred_fallthru
      _
    %p625 = scmp.le.s32.totalorder 1, %s25
    %p626 = scmp.lt.s32.totalorder %s25, 3
    %p627 = pnand %p625, %p626
    %p628 = pneg %p627
    // Predicated region
    $region93: #{hubert_encoder_forward.5} parent=5 // pred_check
      _
    $region94: #{hubert_encoder_forward.5} parent=5 // pred_check_branch
      %630 = sbr.rel (%p627) target = $region96
    $region95: #{hubert_encoder_forward.5} parent=5 // pred_region
      %s631 = ssub.s32 %s25, 1
      %p632 = pneg %p46
      %p633 = pneg %p43
      %p634 = pneg %p67
      %p635 = pneg %p64
      %p636 = pneg %p88
      %p637 = pneg %p85
      %p638 = pneg %p109
      %p639 = pneg %p106
      %p640 = pneg %p130
      %p641 = pneg %p127
      %p642 = pneg %p151
      %p643 = pneg %p148
      %p644 = pneg %p172
      %p645 = pneg %p169
      %p646 = scmp.lt.s32.totalorder %s30, 1
      %s647 = scalar_select %p646, %s30, 1
      %s648 = smul.addr %s647, 4
      %s649 = smul.addr %s648, 4
      %s650 = scalar_lea.vmem %s7, %s649
      %p651 = pneg %p198
      %p652 = pneg %p195
      %p653 = scmp.lt.s32.totalorder %s30, 1
      %s654 = scalar_select %p653, %s30, 1
      %s655 = scalar_lea.vmem %s8, %s654
      %p656 = pneg %p224
      %p657 = pneg %p221
      %p658 = scmp.lt.s32.totalorder %s30, 1
      %s659 = scalar_select %p658, %s30, 1
      %s660 = smul.addr %s659, 4
      %s661 = smul.addr %s660, 4
      %s662 = scalar_lea.vmem %s9, %s661
      %p663 = pneg %p250
      %p664 = pneg %p247
      %p665 = scmp.lt.s32.totalorder %s30, 1
      %s666 = scalar_select %p665, %s30, 1
      %s667 = scalar_lea.vmem %s10, %s666
      %p668 = pneg %p276
      %p669 = pneg %p273
      %p670 = scmp.lt.s32.totalorder %s30, 1
      %s671 = scalar_select %p670, %s30, 1
      %s672 = scalar_lea.vmem %s11, %s671
      %p673 = pneg %p302
      %p674 = pneg %p299
      %p675 = scmp.lt.s32.totalorder %s30, 1
      %s676 = scalar_select %p675, %s30, 1
      %s677 = scalar_lea.vmem %s12, %s676
      %p678 = pneg %p328
      %p679 = pneg %p325
      %p680 = scmp.lt.s32.totalorder %s30, 1
      %s681 = scalar_select %p680, %s30, 1
      %s682 = smul.addr %s681, 4
      %s683 = smul.addr %s682, 4
      %s684 = scalar_lea.vmem %s13, %s683
      %p685 = pneg %p354
      %p686 = pneg %p351
      %p687 = scmp.lt.s32.totalorder %s30, 1
      %s688 = scalar_select %p687, %s30, 1
      %s689 = scalar_lea.vmem %s14, %s688
      %p690 = pneg %p380
      %p691 = pneg %p377
      %p692 = scmp.lt.s32.totalorder %s30, 1
      %s693 = scalar_select %p692, %s30, 1
      %s694 = smul.addr %s693, 8
      %s695 = smul.addr %s694, 4
      %s696 = scalar_lea.vmem %s15, %s695
      %p697 = pneg %p406
      %p698 = pneg %p403
      %p699 = scmp.lt.s32.totalorder %s30, 1
      %s700 = scalar_select %p699, %s30, 1
      %s701 = scalar_lea.vmem %s16, %s700
      %p702 = pneg %p432
      %p703 = pneg %p429
      %p704 = scmp.lt.s32.totalorder %s30, 1
      %s705 = scalar_select %p704, %s30, 1
      %s706 = scalar_lea.vmem %s17, %s705
      %p707 = pneg %p458
      %p708 = pneg %p455
      %p709 = scmp.lt.s32.totalorder %s30, 1
      %s710 = scalar_select %p709, %s30, 1
      %s711 = scalar_lea.vmem %s18, %s710
      %p712 = pneg %p484
      %p713 = pneg %p481
      %p714 = pneg %p505
      %p715 = pneg %p502
      %p716 = scmp.lt.s32.totalorder %s30, 1
      %s717 = scalar_select %p716, %s30, 1
      %s718 = smul.addr %s717, 4
      %s719 = smul.addr %s718, 4
      %s720 = scalar_lea.vmem %s7, %s719
      %p721 = scmp.lt.s32.totalorder %s30, 1
      %s722 = scalar_select %p721, %s30, 1
      %s723 = scalar_lea.vmem %s8, %s722
      %p724 = scmp.lt.s32.totalorder %s30, 1
      %s725 = scalar_select %p724, %s30, 1
      %s726 = smul.addr %s725, 4
      %s727 = smul.addr %s726, 4
      %s728 = scalar_lea.vmem %s9, %s727
      %p729 = scmp.lt.s32.totalorder %s30, 1
      %s730 = scalar_select %p729, %s30, 1
      %s731 = scalar_lea.vmem %s10, %s730
      %p732 = scmp.lt.s32.totalorder %s30, 1
      %s733 = scalar_select %p732, %s30, 1
      %s734 = scalar_lea.vmem %s11, %s733
      %p735 = scmp.lt.s32.totalorder %s30, 1
      %s736 = scalar_select %p735, %s30, 1
      %s737 = scalar_lea.vmem %s12, %s736
      %p738 = scmp.lt.s32.totalorder %s30, 1
      %s739 = scalar_select %p738, %s30, 1
      %s740 = smul.addr %s739, 4
      %s741 = smul.addr %s740, 4
      %s742 = scalar_lea.vmem %s13, %s741
      %p743 = scmp.lt.s32.totalorder %s30, 1
      %s744 = scalar_select %p743, %s30, 1
      %s745 = scalar_lea.vmem %s14, %s744
      %p746 = scmp.lt.s32.totalorder %s30, 1
      %s747 = scalar_select %p746, %s30, 1
      %s748 = smul.addr %s747, 8
      %s749 = smul.addr %s748, 4
      %s750 = scalar_lea.vmem %s15, %s749
      %p751 = scmp.lt.s32.totalorder %s30, 1
      %s752 = scalar_select %p751, %s30, 1
      %s753 = scalar_lea.vmem %s16, %s752
      %p754 = scmp.lt.s32.totalorder %s30, 1
      %s755 = scalar_select %p754, %s30, 1
      %s756 = scalar_lea.vmem %s17, %s755
      %p757 = scmp.lt.s32.totalorder %s30, 1
      %s758 = scalar_select %p757, %s30, 1
      %s759 = scalar_lea.vmem %s18, %s758
      %p761 = scmp.eq.s32.totalorder %s30, 0
      // Predicated region
      $region97: #{hubert_encoder_forward.5} parent=95 // pred_check
        %p762 = pneg %p761
      $region98: #{hubert_encoder_forward.5} parent=95 // pred_check_branch
        %764 = sbr.rel (%p762) target = $region100
      $region99: #{hubert_encoder_forward.5} parent=95 // pred_region
        %v765 = vld [vmem:[%s0] sm:$0xf]
        %v766 = vld [vmem:[%s0 + $0x4] sm:$0xf]
        %v767 = vld [vmem:[%s0 + $0x8] sm:$0xf]
        %v768 = vld [vmem:[%s0 + $0xc] sm:$0xf]
        %v769 = vld [vmem:[%s0 + $0x10] sm:$0xf]
        %v770 = vld [vmem:[%s0 + $0x14] sm:$0xf]
        %v771 = vld [vmem:[%s0 + $0x18] sm:$0xf]
        %v772 = vld [vmem:[%s0 + $0x1c] sm:$0x7]
        %v773 = vunpack.c.l.bf16 %v765
        %v774 = vunpack.c.l.bf16 %v766
        %v775 = vunpack.c.l.bf16 %v767
        %v776 = vunpack.c.l.bf16 %v768
        %v777 = vunpack.c.l.bf16 %v769
        %v778 = vunpack.c.l.bf16 %v770
        %v779 = vunpack.c.l.bf16 %v771
        %v780 = vunpack.c.l.bf16 %v772
        %v781 = vld [vmem:[%s1] sm:$0xf]
        %v782 = vld [vmem:[%s1 + $0x10] sm:$0xf]
        %v783 = vld [vmem:[%s1 + $0x20] sm:$0xf]
        %v784 = vld [vmem:[%s1 + $0x30] sm:$0xf]
        %v785 = vld [vmem:[%s1 + $0x40] sm:$0xf]
        %v786 = vld [vmem:[%s1 + $0x50] sm:$0xf]
        %v787 = vld [vmem:[%s1 + $0x60] sm:$0xf]
        %v788 = vld [vmem:[%s1 + $0x70] sm:$0x7]
        %v789 = vld [vmem:[%s2] sm:$0xf]
        %v790 = vld [vmem:[%s2 + $0x4] sm:$0xf]
        %v791 = vld [vmem:[%s2 + $0x8] sm:$0xf]
        %v792 = vld [vmem:[%s2 + $0xc] sm:$0xf]
        %v793 = vld [vmem:[%s2 + $0x10] sm:$0xf]
        %v794 = vld [vmem:[%s2 + $0x14] sm:$0xf]
        %v795 = vld [vmem:[%s2 + $0x18] sm:$0xf]
        %v796 = vld [vmem:[%s2 + $0x1c] sm:$0xf]
        %v797 = vld [vmem:[%s2 + $0x20] sm:$0xf]
        %v798 = vld [vmem:[%s2 + $0x24] sm:$0xf]
        %v799 = vld [vmem:[%s2 + $0x28] sm:$0xf]
        %v800 = vld [vmem:[%s2 + $0x2c] sm:$0xf]
        %v801 = vld [vmem:[%s2 + $0x30] sm:$0xf]
        %v802 = vld [vmem:[%s2 + $0x34] sm:$0xf]
        %v803 = vld [vmem:[%s2 + $0x38] sm:$0xf]
        %v804 = vld [vmem:[%s2 + $0x3c] sm:$0xf]
        %v813 = vunpack.c.l.b16 %v781
        %v814 = vunpack.c.l.b16 %v782
        %v815 = vunpack.c.l.b16 %v783
        %v816 = vunpack.c.l.b16 %v784
        %v817 = vunpack.c.l.b16 %v785
        %v818 = vunpack.c.l.b16 %v786
        %v819 = vunpack.c.l.b16 %v787
        %v820 = vunpack.c.l.b16 %v788
        %v821 = vpack.c.b16 %v814, %v813
        %v822 = vpack.c.b16 %v816, %v815
        %v823 = vpack.c.b16 %v818, %v817
        %v824 = vpack.c.b16 %v820, %v819
        %v845 = vunpack.c.l.b16 %v789
        %v846 = vunpack.c.l.b16 %v790
        %v847 = vunpack.c.l.b16 %v791
        %v848 = vunpack.c.l.b16 %v792
        %v849 = vunpack.c.l.b16 %v793
        %v850 = vunpack.c.l.b16 %v794
        %v851 = vunpack.c.l.b16 %v795
        %v852 = vunpack.c.l.b16 %v796
        %v853 = vunpack.c.l.b16 %v797
        %v854 = vunpack.c.l.b16 %v798
        %v855 = vunpack.c.l.b16 %v799
        %v856 = vunpack.c.l.b16 %v800
        %v857 = vunpack.c.l.b16 %v801
        %v858 = vunpack.c.l.b16 %v802
        %v859 = vunpack.c.l.b16 %v803
        %v860 = vunpack.c.l.b16 %v804
        %v861 = vpack.c.b16 %v846, %v845
        %v862 = vpack.c.b16 %v848, %v847
        %v863 = vpack.c.b16 %v850, %v849
        %v864 = vpack.c.b16 %v852, %v851
        %v865 = vpack.c.b16 %v854, %v853
        %v866 = vpack.c.b16 %v856, %v855
        %v867 = vpack.c.b16 %v858, %v857
        %v868 = vpack.c.b16 %v860, %v859
        %877 = vmatprep.subr.bf16.mxu0 0
        %878 = vmatpush1.bf16.msra.mxu0 %v861
        %879 = vmatprep.subr.bf16.mxu0 0
        %880 = vmatpush1.bf16.msra.mxu0 %v862
        %881 = vmatprep.subr.bf16.mxu0 0
        %882 = vmatpush1.bf16.msra.mxu0 %v863
        %883 = vmatprep.subr.bf16.mxu0 0
        %884 = vmatpush1.bf16.msra.mxu0 %v864
        %885 = vmatprep.subr.bf16.mxu0 0
        %886 = vmatpush1.bf16.msra.mxu0 %v865
        %887 = vmatprep.subr.bf16.mxu0 0
        %888 = vmatpush1.bf16.msra.mxu0 %v866
        %889 = vmatprep.subr.bf16.mxu0 0
        %890 = vmatpush1.bf16.msra.mxu0 %v867
        %891 = vmatprep.subr.bf16.mxu0 0
        %892 = vmatpush1.bf16.msra.mxu0 %v868
        %893 = vmatprep.subr.bf16.mxu0 0
        %894 = vmatpush1.bf16.msra.mxu0 0
        %895 = vmatprep.subr.bf16.mxu0 0
        %896 = vmatpush1.bf16.msra.mxu0 0
        %897 = vmatprep.subr.bf16.mxu0 0
        %898 = vmatpush1.bf16.msra.mxu0 0
        %899 = vmatprep.subr.bf16.mxu0 0
        %900 = vmatpush1.bf16.msra.mxu0 0
        %901 = vmatprep.subr.bf16.mxu0 0
        %902 = vmatpush1.bf16.msra.mxu0 0
        %903 = vmatprep.subr.bf16.mxu0 0
        %904 = vmatpush1.bf16.msra.mxu0 0
        %905 = vmatprep.subr.bf16.mxu0 0
        %906 = vmatpush1.bf16.msra.mxu0 0
        %907 = vmatprep.subr.bf16.mxu0 0
        %908 = vmatpush1.bf16.msra.mxu0 0
        %909 = vmatprep.mubr.bf16.mxu0 0
        %910 = vmatmul.mubr.bf16.gmra.mrb[0].mxu0 %v821
        %v911 = vpop.f32.mrb[0].mxu0
        %v912 = vadd.f32 0.0, %v911
        %v913 = vpop.f32.mrb[0].mxu0
        %v914 = vpop.f32.mrb[0].mxu0
        %v915 = vadd.f32 0.0, %v914
        %v916 = vpop.f32.mrb[0].mxu0
        %917 = vmatprep.mubr.bf16.mxu0 0
        %918 = vmatmul.mubr.bf16.gmra.mrb[0].mxu0 %v822
        %v919 = vpop.f32.mrb[0].mxu0
        %v920 = vadd.f32 0.0, %v919
        %v921 = vpop.f32.mrb[0].mxu0
        %v922 = vpop.f32.mrb[0].mxu0
        %v923 = vadd.f32 0.0, %v922
        %v924 = vpop.f32.mrb[0].mxu0
        %925 = vmatprep.mubr.bf16.mxu0 0
        %926 = vmatmul.mubr.bf16.gmra.mrb[0].mxu0 %v823
        %v927 = vpop.f32.mrb[0].mxu0
        %v928 = vadd.f32 0.0, %v927
        %v929 = vpop.f32.mrb[0].mxu0
        %v930 = vpop.f32.mrb[0].mxu0
        %v931 = vadd.f32 0.0, %v930
        %v932 = vpop.f32.mrb[0].mxu0
        %933 = vmatprep.mubr.bf16.mxu0 0
        %934 = vmatmul.mubr.bf16.gmra.mrb[0].mxu0 %v824
        %v935 = vpop.f32.mrb[0].mxu0
        %v936 = vadd.f32 0.0, %v935
        %v937 = vpop.f32.mrb[0].mxu0
        %v938 = vpop.f32.mrb[0].mxu0
        %v939 = vadd.f32 0.0, %v938
        %v940 = vpop.f32.mrb[0].mxu0
        %941 = vdwg.mxu0
        %vm942 = vcmask 64512
        %943 = vst.msk [vmem:[#allocation3] sm:$0xff] %vm942, %v912
        %944 = vst.msk [vmem:[#allocation3 + $0x8] sm:$0xff] %vm942, %v915
        %945 = vst.msk [vmem:[#allocation3 + $0x10] sm:$0xff] %vm942, %v920
        %946 = vst.msk [vmem:[#allocation3 + $0x18] sm:$0xff] %vm942, %v923
        %947 = vst.msk [vmem:[#allocation3 + $0x20] sm:$0xff] %vm942, %v928
        %948 = vst.msk [vmem:[#allocation3 + $0x28] sm:$0xff] %vm942, %v931
        %949 = vst.msk [vmem:[#allocation3 + $0x30] sm:$0xff] %vm942, %v936
        %vm950 = vcmask 62464
        %951 = vst.msk [vmem:[#allocation3 + $0x38] sm:$0x3f] %vm950, %v939
        %v952 = vld [vmem:[%s1 + $0x4] sm:$0xf]
        %v953 = vld [vmem:[%s1 + $0x14] sm:$0xf]
        %v954 = vld [vmem:[%s1 + $0x24] sm:$0xf]
        %v955 = vld [vmem:[%s1 + $0x34] sm:$0xf]
        %v956 = vld [vmem:[%s1 + $0x44] sm:$0xf]
        %v957 = vld [vmem:[%s1 + $0x54] sm:$0xf]
        %v958 = vld [vmem:[%s1 + $0x64] sm:$0xf]
        %v959 = vld [vmem:[%s1 + $0x74] sm:$0x7]
        %s960 = scalar_lea.vmem %s2, 64
        %v961 = vld [vmem:[%s960] sm:$0xf]
        %v962 = vld [vmem:[%s960 + $0x4] sm:$0xf]
        %v963 = vld [vmem:[%s960 + $0x8] sm:$0xf]
        %v964 = vld [vmem:[%s960 + $0xc] sm:$0xf]
        %v965 = vld [vmem:[%s960 + $0x10] sm:$0xf]
        %v966 = vld [vmem:[%s960 + $0x14] sm:$0xf]
        %v967 = vld [vmem:[%s960 + $0x18] sm:$0xf]
        %v968 = vld [vmem:[%s960 + $0x1c] sm:$0xf]
        %v969 = vld [vmem:[%s960 + $0x20] sm:$0xf]
        %v970 = vld [vmem:[%s960 + $0x24] sm:$0xf]
        %v971 = vld [vmem:[%s960 + $0x28] sm:$0xf]
        %v972 = vld [vmem:[%s960 + $0x2c] sm:$0xf]
        %v973 = vld [vmem:[%s960 + $0x30] sm:$0xf]
        %v974 = vld [vmem:[%s960 + $0x34] sm:$0xf]
        %v975 = vld [vmem:[%s960 + $0x38] sm:$0xf]
        %v976 = vld [vmem:[%s960 + $0x3c] sm:$0xf]
        %v985 = vunpack.c.l.b16 %v952
        %v986 = vunpack.c.l.b16 %v953
        %v987 = vunpack.c.l.b16 %v954
        %v988 = vunpack.c.l.b16 %v955
        %v989 = vunpack.c.l.b16 %v956
        %v990 = vunpack.c.l.b16 %v957
        %v991 = vunpack.c.l.b16 %v958
        %v992 = vunpack.c.l.b16 %v959
        %v993 = vpack.c.b16 %v986, %v985
        %v994 = vpack.c.b16 %v988, %v987
        %v995 = vpack.c.b16 %v990, %v989
        %v996 = vpack.c.b16 %v992, %v991
        %v1017 = vunpack.c.l.b16 %v961
        %v1018 = vunpack.c.l.b16 %v962
        %v1019 = vunpack.c.l.b16 %v963
        %v1020 = vunpack.c.l.b16 %v964
        %v1021 = vunpack.c.l.b16 %v965
        %v1022 = vunpack.c.l.b16 %v966
        %v1023 = vunpack.c.l.b16 %v967
        %v1024 = vunpack.c.l.b16 %v968
        %v1025 = vunpack.c.l.b16 %v969
        %v1026 = vunpack.c.l.b16 %v970
        %v1027 = vunpack.c.l.b16 %v971
        %v1028 = vunpack.c.l.b16 %v972
        %v1029 = vunpack.c.l.b16 %v973
        %v1030 = vunpack.c.l.b16 %v974
        %v1031 = vunpack.c.l.b16 %v975
        %v1032 = vunpack.c.l.b16 %v976
        %v1033 = vpack.c.b16 %v1018, %v1017
        %v1034 = vpack.c.b16 %v1020, %v1019
        %v1035 = vpack.c.b16 %v1022, %v1021
        %v1036 = vpack.c.b16 %v1024, %v1023
        %v1037 = vpack.c.b16 %v1026, %v1025
        %v1038 = vpack.c.b16 %v1028, %v1027
        %v1039 = vpack.c.b16 %v1030, %v1029
        %v1040 = vpack.c.b16 %v1032, %v1031
        %1049 = vmatprep.subr.bf16.mxu0 0
        %1050 = vmatpush1.bf16.msra.mxu0 %v1033
        %1051 = vmatprep.subr.bf16.mxu0 0
        %1052 = vmatpush1.bf16.msra.mxu0 %v1034
        %1053 = vmatprep.subr.bf16.mxu0 0
        %1054 = vmatpush1.bf16.msra.mxu0 %v1035
        %1055 = vmatprep.subr.bf16.mxu0 0
        %1056 = vmatpush1.bf16.msra.mxu0 %v1036
        %1057 = vmatprep.subr.bf16.mxu0 0
        %1058 = vmatpush1.bf16.msra.mxu0 %v1037
        %1059 = vmatprep.subr.bf16.mxu0 0
        %1060 = vmatpush1.bf16.msra.mxu0 %v1038
        %1061 = vmatprep.subr.bf16.mxu0 0
        %1062 = vmatpush1.bf16.msra.mxu0 %v1039
        %1063 = vmatprep.subr.bf16.mxu0 0
        %1064 = vmatpush1.bf16.msra.mxu0 %v1040
        %1065 = vmatprep.subr.bf16.mxu0 0
        %1066 = vmatpush1.bf16.msra.mxu0 0
        %1067 = vmatprep.subr.bf16.mxu0 0
        %1068 = vmatpush1.bf16.msra.mxu0 0
        %1069 = vmatprep.subr.bf16.mxu0 0
        %1070 = vmatpush1.bf16.msra.mxu0 0
        %1071 = vmatprep.subr.bf16.mxu0 0
        %1072 = vmatpush1.bf16.msra.mxu0 0
        %1073 = vmatprep.subr.bf16.mxu0 0
        %1074 = vmatpush1.bf16.msra.mxu0 0
        %1075 = vmatprep.subr.bf16.mxu0 0
        %1076 = vmatpush1.bf16.msra.mxu0 0
        %1077 = vmatprep.subr.bf16.mxu0 0
        %1078 = vmatpush1.bf16.msra.mxu0 0
        %1079 = vmatprep.subr.bf16.mxu0 0
        %1080 = vmatpush1.bf16.msra.mxu0 0
        %1081 = vmatprep.mubr.bf16.mxu0 0
        %1082 = vmatmul.mubr.bf16.gmra.mrb[0].mxu0 %v993
        %v1083 = vpop.f32.mrb[0].mxu0
        %v1084 = vadd.f32 0.0, %v1083
        %v1085 = vpop.f32.mrb[0].mxu0
        %v1086 = vpop.f32.mrb[0].mxu0
        %v1087 = vadd.f32 0.0, %v1086
        %v1088 = vpop.f32.mrb[0].mxu0
        %1089 = vmatprep.mubr.bf16.mxu0 0
        %1090 = vmatmul.mubr.bf16.gmra.mrb[0].mxu0 %v994
        %v1091 = vpop.f32.mrb[0].mxu0
        %v1092 = vadd.f32 0.0, %v1091
        %v1093 = vpop.f32.mrb[0].mxu0
        %v1094 = vpop.f32.mrb[0].mxu0
        %v1095 = vadd.f32 0.0, %v1094
        %v1096 = vpop.f32.mrb[0].mxu0
        %1097 = vmatprep.mubr.bf16.mxu0 0
        %1098 = vmatmul.mubr.bf16.gmra.mrb[0].mxu0 %v995
        %v1099 = vpop.f32.mrb[0].mxu0
        %v1100 = vadd.f32 0.0, %v1099
        %v1101 = vpop.f32.mrb[0].mxu0
        %v1102 = vpop.f32.mrb[0].mxu0
        %v1103 = vadd.f32 0.0, %v1102
        %v1104 = vpop.f32.mrb[0].mxu0
        %1105 = vmatprep.mubr.bf16.mxu0 0
        %1106 = vmatmul.mubr.bf16.gmra.mrb[0].mxu0 %v996
        %v1107 = vpop.f32.mrb[0].mxu0
        %v1108 = vadd.f32 0.0, %v1107
        %v1109 = vpop.f32.mrb[0].mxu0
        %v1110 = vpop.f32.mrb[0].mxu0
        %v1111 = vadd.f32 0.0, %v1110
        %v1112 = vpop.f32.mrb[0].mxu0
        %1113 = vdwg.mxu0
        %1122 = vrot.lane.b32.xlu0 %v1084, 8
        %v1123 = vpop.permute.xlu0 %1122
        %1124 = vrot.lane.b32.xlu0 %v1087, 8
        %v1125 = vpop.permute.xlu0 %1124
        %1126 = vrot.lane.b32.xlu0 %v1092, 8
        %v1127 = vpop.permute.xlu0 %1126
        %1128 = vrot.lane.b32.xlu0 %v1095, 8
        %v1129 = vpop.permute.xlu0 %1128
        %1130 = vrot.lane.b32.xlu0 %v1100, 8
        %v1131 = vpop.permute.xlu0 %1130
        %1132 = vrot.lane.b32.xlu0 %v1103, 8
        %v1133 = vpop.permute.xlu0 %1132
        %1134 = vrot.lane.b32.xlu0 %v1108, 8
        %v1135 = vpop.permute.xlu0 %1134
        %1136 = vrot.lane.b32.xlu0 %v1111, 8
        %v1137 = vpop.permute.xlu0 %1136
        %vm1146 = vcmask 130112
        %1147 = vst.msk [vmem:[#allocation3] sm:$0xff] %vm1146, %v1123
        %1148 = vst.msk [vmem:[#allocation3 + $0x8] sm:$0xff] %vm1146, %v1125
        %1149 = vst.msk [vmem:[#allocation3 + $0x10] sm:$0xff] %vm1146, %v1127
        %1150 = vst.msk [vmem:[#allocation3 + $0x18] sm:$0xff] %vm1146, %v1129
        %1151 = vst.msk [vmem:[#allocation3 + $0x20] sm:$0xff] %vm1146, %v1131
        %1152 = vst.msk [vmem:[#allocation3 + $0x28] sm:$0xff] %vm1146, %v1133
        %1153 = vst.msk [vmem:[#allocation3 + $0x30] sm:$0xff] %vm1146, %v1135
        %vm1154 = vcmask 128064
        %1155 = vst.msk [vmem:[#allocation3 + $0x38] sm:$0x3f] %vm1154, %v1137
        %v1156 = vld [vmem:[%s1 + $0x8] sm:$0xf]
        %v1157 = vld [vmem:[%s1 + $0x18] sm:$0xf]
        %v1158 = vld [vmem:[%s1 + $0x28] sm:$0xf]
        %v1159 = vld [vmem:[%s1 + $0x38] sm:$0xf]
        %v1160 = vld [vmem:[%s1 + $0x48] sm:$0xf]
        %v1161 = vld [vmem:[%s1 + $0x58] sm:$0xf]
        %v1162 = vld [vmem:[%s1 + $0x68] sm:$0xf]
        %v1163 = vld [vmem:[%s1 + $0x78] sm:$0x7]
        %s1164 = scalar_lea.vmem %s2, 128
        %v1165 = vld [vmem:[%s1164] sm:$0xf]
        %v1166 = vld [vmem:[%s1164 + $0x4] sm:$0xf]
        %v1167 = vld [vmem:[%s1164 + $0x8] sm:$0xf]
        %v1168 = vld [vmem:[%s1164 + $0xc] sm:$0xf]
        %v1169 = vld [vmem:[%s1164 + $0x10] sm:$0xf]
        %v1170 = vld [vmem:[%s1164 + $0x14] sm:$0xf]
        %v1171 = vld [vmem:[%s1164 + $0x18] sm:$0xf]
        %v1172 = vld [vmem:[%s1164 + $0x1c] sm:$0xf]
        %v1173 = vld [vmem:[%s1164 + $0x20] sm:$0xf]
        %v1174 = vld [vmem:[%s1164 + $0x24] sm:$0xf]
        %v1175 = vld [vmem:[%s1164 + $0x28] sm:$0xf]
        %v1176 = vld [vmem:[%s1164 + $0x2c] sm:$0xf]
        %v1177 = vld [vmem:[%s1164 + $0x30] sm:$0xf]
        %v1178 = vld [vmem:[%s1164 + $0x34] sm:$0xf]
        %v1179 = vld [vmem:[%s1164 + $0x38] sm:$0xf]
        %v1180 = vld [vmem:[%s1164 + $0x3c] sm:$0xf]
        %v1189 = vunpack.c.l.b16 %v1156
        %v1190 = vunpack.c.l.b16 %v1157
        %v1191 = vunpack.c.l.b16 %v1158
        %v1192 = vunpack.c.l.b16 %v1159
        %v1193 = vunpack.c.l.b16 %v1160
        %v1194 = vunpack.c.l.b16 %v1161
        %v1195 = vunpack.c.l.b16 %v1162
        %v1196 = vunpack.c.l.b16 %v1163
        %v1197 = vpack.c.b16 %v1190, %v1189
        %v1198 = vpack.c.b16 %v1192, %v1191
        %v1199 = vpack.c.b16 %v1194, %v1193
        %v1200 = vpack.c.b16 %v1196, %v1195
        %v1221 = vunpack.c.l.b16 %v1165
        %v1222 = vunpack.c.l.b16 %v1166
        %v1223 = vunpack.c.l.b16 %v1167
        %v1224 = vunpack.c.l.b16 %v1168
        %v1225 = vunpack.c.l.b16 %v1169
        %v1226 = vunpack.c.l.b16 %v1170
        %v1227 = vunpack.c.l.b16 %v1171
        %v1228 = vunpack.c.l.b16 %v1172
        %v1229 = vunpack.c.l.b16 %v1173
        %v1230 = vunpack.c.l.b16 %v1174
        %v1231 = vunpack.c.l.b16 %v1175
        %v1232 = vunpack.c.l.b16 %v1176
        %v1233 = vunpack.c.l.b16 %v1177
        %v1234 = vunpack.c.l.b16 %v1178
        %v1235 = vunpack.c.l.b16 %v1179
        %v1236 = vunpack.c.l.b16 %v1180
        %v1237 = vpack.c.b16 %v1222, %v1221
        %v1238 = vpack.c.b16 %v1224, %v1223
        %v1239 = vpack.c.b16 %v1226, %v1225
        %v1240 = vpack.c.b16 %v1228, %v1227
        %v1241 = vpack.c.b16 %v1230, %v1229
        %v1242 = vpack.c.b16 %v1232, %v1231
        %v1243 = vpack.c.b16 %v1234, %v1233
        %v1244 = vpack.c.b16 %v1236, %v1235
        %1253 = vmatprep.subr.bf16.mxu0 0
        %1254 = vmatpush1.bf16.msra.mxu0 %v1237
        %1255 = vmatprep.subr.bf16.mxu0 0
        %1256 = vmatpush1.bf16.msra.mxu0 %v1238
        %1257 = vmatprep.subr.bf16.mxu0 0
        %1258 = vmatpush1.bf16.msra.mxu0 %v1239
        %1259 = vmatprep.subr.bf16.mxu0 0
        %1260 = vmatpush1.bf16.msra.mxu0 %v1240
        %1261 = vmatprep.subr.bf16.mxu0 0
        %1262 = vmatpush1.bf16.msra.mxu0 %v1241
        %1263 = vmatprep.subr.bf16.mxu0 0
        %1264 = vmatpush1.bf16.msra.mxu0 %v1242
        %1265 = vmatprep.subr.bf16.mxu0 0
        %1266 = vmatpush1.bf16.msra.mxu0 %v1243
        %1267 = vmatprep.subr.bf16.mxu0 0
        %1268 = vmatpush1.bf16.msra.mxu0 %v1244
        %1269 = vmatprep.subr.bf16.mxu0 0
        %1270 = vmatpush1.bf16.msra.mxu0 0
        %1271 = vmatprep.subr.bf16.mxu0 0
        %1272 = vmatpush1.bf16.msra.mxu0 0
        %1273 = vmatprep.subr.bf16.mxu0 0
        %1274 = vmatpush1.bf16.msra.mxu0 0
        %1275 = vmatprep.subr.bf16.mxu0 0
        %1276 = vmatpush1.bf16.msra.mxu0 0
        %1277 = vmatprep.subr.bf16.mxu0 0
        %1278 = vmatpush1.bf16.msra.mxu0 0
        %1279 = vmatprep.subr.bf16.mxu0 0
        %1280 = vmatpush1.bf16.msra.mxu0 0
        %1281 = vmatprep.subr.bf16.mxu0 0
        %1282 = vmatpush1.bf16.msra.mxu0 0
        %1283 = vmatprep.subr.bf16.mxu0 0
        %1284 = vmatpush1.bf16.msra.mxu0 0
        %1285 = vmatprep.mubr.bf16.mxu0 0
        %1286 = vmatmul.mubr.bf16.gmra.mrb[0].mxu0 %v1197
        %v1287 = vpop.f32.mrb[0].mxu0
        %v1288 = vadd.f32 0.0, %v1287
        %v1289 = vpop.f32.mrb[0].mxu0
        %v1290 = vpop.f32.mrb[0].mxu0
        %v1291 = vadd.f32 0.0, %v1290
        %v1292 = vpop.f32.mrb[0].mxu0
        %1293 = vmatprep.mubr.bf16.mxu0 0
        %1294 = vmatmul.mubr.bf16.gmra.mrb[0].mxu0 %v1198
        %v1295 = vpop.f32.mrb[0].mxu0
        %v1296 = vadd.f32 0.0, %v1295
        %v1297 = vpop.f32.mrb[0].mxu0
        %v1298 = vpop.f32.mrb[0].mxu0
        %v1299 = vadd.f32 0.0, %v1298
        %v1300 = vpop.f32.mrb[0].mxu0
        %1301 = vmatprep.mubr.bf16.mxu0 0
        %1302 = vmatmul.mubr.bf16.gmra.mrb[0].mxu0 %v1199
        %v1303 = vpop.f32.mrb[0].mxu0
        %v1304 = vadd.f32 0.0, %v1303
        %v1305 = vpop.f32.mrb[0].mxu0
        %v1306 = vpop.f32.mrb[0].mxu0
        %v1307 = vadd.f32 0.0, %v1306
        %v1308 = vpop.f32.mrb[0].mxu0
        %1309 = vmatprep.mubr.bf16.mxu0 0
        %1310 = vmatmul.mubr.bf16.gmra.mrb[0].mxu0 %v1200
        %v1311 = vpop.f32.mrb[0].mxu0
        %v1312 = vadd.f32 0.0, %v1311
        %v1313 = vpop.f32.mrb[0].mxu0
        %v1314 = vpop.f32.mrb[0].mxu0
        %v1315 = vadd.f32 0.0, %v1314
        %v1316 = vpop.f32.mrb[0].mxu0
        %1317 = vdwg.mxu0
        %1326 = vrot.lane.b32.xlu0 %v1288, 16
        %v1327 = vpop.permute.xlu0 %1326
        %1328 = vrot.lane.b32.xlu0 %v1291, 16
        %v1329 = vpop.permute.xlu0 %1328
        %1330 = vrot.lane.b32.xlu0 %v1296, 16
        %v1331 = vpop.permute.xlu0 %1330
        %1332 = vrot.lane.b32.xlu0 %v1299, 16
        %v1333 = vpop.permute.xlu0 %1332
        %1334 = vrot.lane.b32.xlu0 %v1304, 16
        %v1335 = vpop.permute.xlu0 %1334
        %1336 = vrot.lane.b32.xlu0 %v1307, 16
        %v1337 = vpop.permute.xlu0 %1336
        %1338 = vrot.lane.b32.xlu0 %v1312, 16
        %v1339 = vpop.permute.xlu0 %1338
        %1340 = vrot.lane.b32.xlu0 %v1315, 16
        %v1341 = vpop.permute.xlu0 %1340
        %vm1350 = vcmask 195712
        %1351 = vst.msk [vmem:[#allocation3] sm:$0xff] %vm1350, %v1327
        %1352 = vst.msk [vmem:[#allocation3 + $0x8] sm:$0xff] %vm1350, %v1329
        %1353 = vst.msk [vmem:[#allocation3 + $0x10] sm:$0xff] %vm1350, %v1331
        %1354 = vst.msk [vmem:[#allocation3 + $0x18] sm:$0xff] %vm1350, %v1333
        %1355 = vst.msk [vmem:[#allocation3 + $0x20] sm:$0xff] %vm1350, %v1335
        %1356 = vst.msk [vmem:[#allocation3 + $0x28] sm:$0xff] %vm1350, %v1337
        %1357 = vst.msk [vmem:[#allocation3 + $0x30] sm:$0xff] %vm1350, %v1339
        %vm1358 = vcmask 193664
        %1359 = vst.msk [vmem:[#allocation3 + $0x38] sm:$0x3f] %vm1358, %v1341
        %v1360 = vld [vmem:[%s1 + $0xc] sm:$0xf]
        %v1361 = vld [vmem:[%s1 + $0x1c] sm:$0xf]
        %v1362 = vld [vmem:[%s1 + $0x2c] sm:$0xf]
        %v1363 = vld [vmem:[%s1 + $0x3c] sm:$0xf]
        %v1364 = vld [vmem:[%s1 + $0x4c] sm:$0xf]
        %v1365 = vld [vmem:[%s1 + $0x5c] sm:$0xf]
        %v1366 = vld [vmem:[%s1 + $0x6c] sm:$0xf]
        %v1367 = vld [vmem:[%s1 + $0x7c] sm:$0x7]
        %s1368 = scalar_lea.vmem %s2, 192
        %v1369 = vld [vmem:[%s1368] sm:$0xf]
        %v1370 = vld [vmem:[%s1368 + $0x4] sm:$0xf]
        %v1371 = vld [vmem:[%s1368 + $0x8] sm:$0xf]
        %v1372 = vld [vmem:[%s1368 + $0xc] sm:$0xf]
        %v1373 = vld [vmem:[%s1368 + $0x10] sm:$0xf]
        %v1374 = vld [vmem:[%s1368 + $0x14] sm:$0xf]
        %v1375 = vld [vmem:[%s1368 + $0x18] sm:$0xf]
        %v1376 = vld [vmem:[%s1368 + $0x1c] sm:$0xf]
        %v1377 = vld [vmem:[%s1368 + $0x20] sm:$0xf]
        %v1378 = vld [vmem:[%s1368 + $0x24] sm:$0xf]
        %v1379 = vld [vmem:[%s1368 + $0x28] sm:$0xf]
        %v1380 = vld [vmem:[%s1368 + $0x2c] sm:$0xf]
        %v1381 = vld [vmem:[%s1368 + $0x30] sm:$0xf]
        %v1382 = vld [vmem:[%s1368 + $0x34] sm:$0xf]
        %v1383 = vld [vmem:[%s1368 + $0x38] sm:$0xf]
        %v1384 = vld [vmem:[%s1368 + $0x3c] sm:$0xf]
        %v1393 = vunpack.c.l.b16 %v1360
        %v1394 = vunpack.c.l.b16 %v1361
        %v1395 = vunpack.c.l.b16 %v1362
        %v1396 = vunpack.c.l.b16 %v1363
        %v1397 = vunpack.c.l.b16 %v1364
        %v1398 = vunpack.c.l.b16 %v1365
        %v1399 = vunpack.c.l.b16 %v1366
        %v1400 = vunpack.c.l.b16 %v1367
        %v1401 = vpack.c.b16 %v1394, %v1393
        %v1402 = vpack.c.b16 %v1396, %v1395
        %v1403 = vpack.c.b16 %v1398, %v1397
        %v1404 = vpack.c.b16 %v1400, %v1399
        %v1425 = vunpack.c.l.b16 %v1369
        %v1426 = vunpack.c.l.b16 %v1370
        %v1427 = vunpack.c.l.b16 %v1371
        %v1428 = vunpack.c.l.b16 %v1372
        %v1429 = vunpack.c.l.b16 %v1373
        %v1430 = vunpack.c.l.b16 %v1374
        %v1431 = vunpack.c.l.b16 %v1375
        %v1432 = vunpack.c.l.b16 %v1376
        %v1433 = vunpack.c.l.b16 %v1377
        %v1434 = vunpack.c.l.b16 %v1378
        %v1435 = vunpack.c.l.b16 %v1379
        %v1436 = vunpack.c.l.b16 %v1380
        %v1437 = vunpack.c.l.b16 %v1381
        %v1438 = vunpack.c.l.b16 %v1382
        %v1439 = vunpack.c.l.b16 %v1383
        %v1440 = vunpack.c.l.b16 %v1384
        %v1441 = vpack.c.b16 %v1426, %v1425
        %v1442 = vpack.c.b16 %v1428, %v1427
        %v1443 = vpack.c.b16 %v1430, %v1429
        %v1444 = vpack.c.b16 %v1432, %v1431
        %v1445 = vpack.c.b16 %v1434, %v1433
        %v1446 = vpack.c.b16 %v1436, %v1435
        %v1447 = vpack.c.b16 %v1438, %v1437
        %v1448 = vpack.c.b16 %v1440, %v1439
        %1457 = vmatprep.subr.bf16.mxu0 0
        %1458 = vmatpush1.bf16.msra.mxu0 %v1441
        %1459 = vmatprep.subr.bf16.mxu0 0
        %1460 = vmatpush1.bf16.msra.mxu0 %v1442
        %1461 = vmatprep.subr.bf16.mxu0 0
        %1462 = vmatpush1.bf16.msra.mxu0 %v1443
        %1463 = vmatprep.subr.bf16.mxu0 0
        %1464 = vmatpush1.bf16.msra.mxu0 %v1444
        %1465 = vmatprep.subr.bf16.mxu0 0
        %1466 = vmatpush1.bf16.msra.mxu0 %v1445
        %1467 = vmatprep.subr.bf16.mxu0 0
        %1468 = vmatpush1.bf16.msra.mxu0 %v1446
        %1469 = vmatprep.subr.bf16.mxu0 0
        %1470 = vmatpush1.bf16.msra.mxu0 %v1447
        %1471 = vmatprep.subr.bf16.mxu0 0
        %1472 = vmatpush1.bf16.msra.mxu0 %v1448
        %1473 = vmatprep.subr.bf16.mxu0 0
        %1474 = vmatpush1.bf16.msra.mxu0 0
        %1475 = vmatprep.subr.bf16.mxu0 0
        %1476 = vmatpush1.bf16.msra.mxu0 0
        %1477 = vmatprep.subr.bf16.mxu0 0
        %1478 = vmatpush1.bf16.msra.mxu0 0
        %1479 = vmatprep.subr.bf16.mxu0 0
        %1480 = vmatpush1.bf16.msra.mxu0 0
        %1481 = vmatprep.subr.bf16.mxu0 0
        %1482 = vmatpush1.bf16.msra.mxu0 0
        %1483 = vmatprep.subr.bf16.mxu0 0
        %1484 = vmatpush1.bf16.msra.mxu0 0
        %1485 = vmatprep.subr.bf16.mxu0 0
        %1486 = vmatpush1.bf16.msra.mxu0 0
        %1487 = vmatprep.subr.bf16.mxu0 0
        %1488 = vmatpush1.bf16.msra.mxu0 0
        %1489 = vmatprep.mubr.bf16.mxu0 0
        %1490 = vmatmul.mubr.bf16.gmra.mrb[0].mxu0 %v1401
        %v1491 = vpop.f32.mrb[0].mxu0
        %v1492 = vadd.f32 0.0, %v1491
        %v1493 = vpop.f32.mrb[0].mxu0
        %v1494 = vpop.f32.mrb[0].mxu0
        %v1495 = vadd.f32 0.0, %v1494
        %v1496 = vpop.f32.mrb[0].mxu0
        %1497 = vmatprep.mubr.bf16.mxu0 0
        %1498 = vmatmul.mubr.bf16.gmra.mrb[0].mxu0 %v1402
        %v1499 = vpop.f32.mrb[0].mxu0
        %v1500 = vadd.f32 0.0, %v1499
        %v1501 = vpop.f32.mrb[0].mxu0
        %v1502 = vpop.f32.mrb[0].mxu0
        %v1503 = vadd.f32 0.0, %v1502
        %v1504 = vpop.f32.mrb[0].mxu0
        %1505 = vmatprep.mubr.bf16.mxu0 0
        %1506 = vmatmul.mubr.bf16.gmra.mrb[0].mxu0 %v1403
        %v1507 = vpop.f32.mrb[0].mxu0
        %v1508 = vadd.f32 0.0, %v1507
        %v1509 = vpop.f32.mrb[0].mxu0
        %v1510 = vpop.f32.mrb[0].mxu0
        %v1511 = vadd.f32 0.0, %v1510
        %v1512 = vpop.f32.mrb[0].mxu0
        %1513 = vmatprep.mubr.bf16.mxu0 0
        %1514 = vmatmul.mubr.bf16.gmra.mrb[0].mxu0 %v1404
        %v1515 = vpop.f32.mrb[0].mxu0
        %v1516 = vadd.f32 0.0, %v1515
        %v1517 = vpop.f32.mrb[0].mxu0
        %v1518 = vpop.f32.mrb[0].mxu0
        %v1519 = vadd.f32 0.0, %v1518
        %v1520 = vpop.f32.mrb[0].mxu0
        %1521 = vdwg.mxu0
        %1530 = vrot.lane.b32.xlu0 %v1492, 24
        %v1531 = vpop.permute.xlu0 %1530
        %1532 = vrot.lane.b32.xlu0 %v1495, 24
        %v1533 = vpop.permute.xlu0 %1532
        %1534 = vrot.lane.b32.xlu0 %v1500, 24
        %v1535 = vpop.permute.xlu0 %1534
        %1536 = vrot.lane.b32.xlu0 %v1503, 24
        %v1537 = vpop.permute.xlu0 %1536
        %1538 = vrot.lane.b32.xlu0 %v1508, 24
        %v1539 = vpop.permute.xlu0 %1538
        %1540 = vrot.lane.b32.xlu0 %v1511, 24
        %v1541 = vpop.permute.xlu0 %1540
        %1542 = vrot.lane.b32.xlu0 %v1516, 24
        %v1543 = vpop.permute.xlu0 %1542
        %1544 = vrot.lane.b32.xlu0 %v1519, 24
        %v1545 = vpop.permute.xlu0 %1544
        %vm1554 = vcmask 261312
        %1555 = vst.msk [vmem:[#allocation3] sm:$0xff] %vm1554, %v1531
        %1556 = vst.msk [vmem:[#allocation3 + $0x8] sm:$0xff] %vm1554, %v1533
        %1557 = vst.msk [vmem:[#allocation3 + $0x10] sm:$0xff] %vm1554, %v1535
        %1558 = vst.msk [vmem:[#allocation3 + $0x18] sm:$0xff] %vm1554, %v1537
        %1559 = vst.msk [vmem:[#allocation3 + $0x20] sm:$0xff] %vm1554, %v1539
        %1560 = vst.msk [vmem:[#allocation3 + $0x28] sm:$0xff] %vm1554, %v1541
        %1561 = vst.msk [vmem:[#allocation3 + $0x30] sm:$0xff] %vm1554, %v1543
        %vm1562 = vcmask 259264
        %1563 = vst.msk [vmem:[#allocation3 + $0x38] sm:$0x3f] %vm1562, %v1545
        %v1564 = vld [vmem:[#allocation3] sm:$0xff]
        %v1565 = vld [vmem:[#allocation3 + $0x8] sm:$0xff]
        %v1566 = vld [vmem:[#allocation3 + $0x10] sm:$0xff]
        %v1567 = vld [vmem:[#allocation3 + $0x18] sm:$0xff]
        %v1568 = vld [vmem:[#allocation3 + $0x20] sm:$0xff]
        %v1569 = vld [vmem:[#allocation3 + $0x28] sm:$0xff]
        %v1570 = vld [vmem:[#allocation3 + $0x30] sm:$0xff]
        %v1571 = vld [vmem:[#allocation3 + $0x38] sm:$0x3f]
        %v1572 = vld [vmem:[%s3] sm:$0x1]
        %v1574 = vlaneseq
        %v1575 = vshrl.u32 %v1574, 7
        %v1576 = vsub.s32 0, %v1575
        %v1577 = vrot.slane %v1572, %v1576
        %v1579 = vadd.f32 %v1564, %v1577
        %v1580 = vadd.f32 %v1565, %v1577
        %v1581 = vadd.f32 %v1566, %v1577
        %v1582 = vadd.f32 %v1567, %v1577
        %v1583 = vadd.f32 %v1568, %v1577
        %v1584 = vadd.f32 %v1569, %v1577
        %v1585 = vadd.f32 %v1570, %v1577
        %v1586 = vadd.f32 %v1571, %v1577
        %v1587 = vmul.f32 %v1579, 0.5
        %v1588 = vmul.f32 %v1580, 0.5
        %v1589 = vmul.f32 %v1581, 0.5
        %v1590 = vmul.f32 %v1582, 0.5
        %v1591 = vmul.f32 %v1583, 0.5
        %v1592 = vmul.f32 %v1584, 0.5
        %v1593 = vmul.f32 %v1585, 0.5
        %v1594 = vmul.f32 %v1586, 0.5
        %v1595 = vmul.f32 %v1579, 0.70710677
        %v1596 = vmul.f32 %v1580, 0.70710677
        %v1597 = vmul.f32 %v1581, 0.70710677
        %v1598 = vmul.f32 %v1582, 0.70710677
        %v1599 = vmul.f32 %v1583, 0.70710677
        %v1600 = vmul.f32 %v1584, 0.70710677
        %v1601 = vmul.f32 %v1585, 0.70710677
        %v1602 = vmul.f32 %v1586, 0.70710677
        %v1603 = verf.f32.pop %v1595
        %v1604 = verf.f32.pop %v1596
        %v1605 = verf.f32.pop %v1597
        %v1606 = verf.f32.pop %v1598
        %v1607 = verf.f32.pop %v1599
        %v1608 = verf.f32.pop %v1600
        %v1609 = verf.f32.pop %v1601
        %v1610 = verf.f32.pop %v1602
        %v1611 = vadd.f32 %v1603, 1.0
        %v1612 = vadd.f32 %v1604, 1.0
        %v1613 = vadd.f32 %v1605, 1.0
        %v1614 = vadd.f32 %v1606, 1.0
        %v1615 = vadd.f32 %v1607, 1.0
        %v1616 = vadd.f32 %v1608, 1.0
        %v1617 = vadd.f32 %v1609, 1.0
        %v1618 = vadd.f32 %v1610, 1.0
        %v1619 = vmul.f32 %v1587, %v1611
        %v1620 = vmul.f32 %v1588, %v1612
        %v1621 = vmul.f32 %v1589, %v1613
        %v1622 = vmul.f32 %v1590, %v1614
        %v1623 = vmul.f32 %v1591, %v1615
        %v1624 = vmul.f32 %v1592, %v1616
        %v1625 = vmul.f32 %v1593, %v1617
        %v1626 = vmul.f32 %v1594, %v1618
        %v1627 = vadd.f32 %v773, %v1619
        %v1628 = vadd.f32 %v774, %v1620
        %v1629 = vadd.f32 %v775, %v1621
        %v1630 = vadd.f32 %v776, %v1622
        %v1631 = vadd.f32 %v777, %v1623
        %v1632 = vadd.f32 %v778, %v1624
        %v1633 = vadd.f32 %v779, %v1625
        %v1634 = vadd.f32 %v780, %v1626
        %v1635 = vld [vmem:[%s5] sm:$0x1]
        %v1636 = vld [vmem:[%s6] sm:$0x1]
        %vm1637 = vcmask 261120
        %v1638 = vsel %vm1637, %v1627, 0.0
        %1639 = vadd.xlane.f32.xlu0 %v1638
        %v1640 = vpop.xlane.xlu0 %1639
        %v1641 = vsel %vm1637, %v1628, 0.0
        %1642 = vadd.xlane.f32.xlu0 %v1641
        %v1643 = vpop.xlane.xlu0 %1642
        %v1644 = vsel %vm1637, %v1629, 0.0
        %1645 = vadd.xlane.f32.xlu0 %v1644
        %v1646 = vpop.xlane.xlu0 %1645
        %v1647 = vsel %vm1637, %v1630, 0.0
        %1648 = vadd.xlane.f32.xlu0 %v1647
        %v1649 = vpop.xlane.xlu0 %1648
        %v1650 = vsel %vm1637, %v1631, 0.0
        %1651 = vadd.xlane.f32.xlu0 %v1650
        %v1652 = vpop.xlane.xlu0 %1651
        %v1653 = vsel %vm1637, %v1632, 0.0
        %1654 = vadd.xlane.f32.xlu0 %v1653
        %v1655 = vpop.xlane.xlu0 %1654
        %v1656 = vsel %vm1637, %v1633, 0.0
        %1657 = vadd.xlane.f32.xlu0 %v1656
        %v1658 = vpop.xlane.xlu0 %1657
        %vm1659 = vcmask 259072
        %v1660 = vsel %vm1659, %v1634, 0.0
        %1661 = vadd.xlane.f32.xlu0 %v1660
        %v1662 = vpop.xlane.xlu0 %1661
        %v1663 = vrcp.pop 32.0
        %v1664 = vmul.f32 %v1640, %v1663
        %v1665 = vmul.f32 %v1643, %v1663
        %v1666 = vmul.f32 %v1646, %v1663
        %v1667 = vmul.f32 %v1649, %v1663
        %v1668 = vmul.f32 %v1652, %v1663
        %v1669 = vmul.f32 %v1655, %v1663
        %v1670 = vmul.f32 %v1658, %v1663
        %v1671 = vmul.f32 %v1662, %v1663
        %v1672 = vsub.f32 %v1627, %v1664
        %v1673 = vsub.f32 %v1628, %v1665
        %v1674 = vsub.f32 %v1629, %v1666
        %v1675 = vsub.f32 %v1630, %v1667
        %v1676 = vsub.f32 %v1631, %v1668
        %v1677 = vsub.f32 %v1632, %v1669
        %v1678 = vsub.f32 %v1633, %v1670
        %v1679 = vsub.f32 %v1634, %v1671
        %v1680 = vmul.f32 %v1672, %v1672
        %v1681 = vmul.f32 %v1673, %v1673
        %v1682 = vmul.f32 %v1674, %v1674
        %v1683 = vmul.f32 %v1675, %v1675
        %v1684 = vmul.f32 %v1676, %v1676
        %v1685 = vmul.f32 %v1677, %v1677
        %v1686 = vmul.f32 %v1678, %v1678
        %v1687 = vmul.f32 %v1679, %v1679
        %v1688 = vsel %vm1637, %v1680, 0.0
        %1689 = vadd.xlane.f32.xlu0 %v1688
        %v1690 = vpop.xlane.xlu0 %1689
        %v1691 = vsel %vm1637, %v1681, 0.0
        %1692 = vadd.xlane.f32.xlu0 %v1691
        %v1693 = vpop.xlane.xlu0 %1692
        %v1694 = vsel %vm1637, %v1682, 0.0
        %1695 = vadd.xlane.f32.xlu0 %v1694
        %v1696 = vpop.xlane.xlu0 %1695
        %v1697 = vsel %vm1637, %v1683, 0.0
        %1698 = vadd.xlane.f32.xlu0 %v1697
        %v1699 = vpop.xlane.xlu0 %1698
        %v1700 = vsel %vm1637, %v1684, 0.0
        %1701 = vadd.xlane.f32.xlu0 %v1700
        %v1702 = vpop.xlane.xlu0 %1701
        %v1703 = vsel %vm1637, %v1685, 0.0
        %1704 = vadd.xlane.f32.xlu0 %v1703
        %v1705 = vpop.xlane.xlu0 %1704
        %v1706 = vsel %vm1637, %v1686, 0.0
        %1707 = vadd.xlane.f32.xlu0 %v1706
        %v1708 = vpop.xlane.xlu0 %1707
        %v1709 = vsel %vm1659, %v1687, 0.0
        %1710 = vadd.xlane.f32.xlu0 %v1709
        %v1711 = vpop.xlane.xlu0 %1710
        %v1712 = vmul.f32 %v1690, %v1663
        %v1713 = vmul.f32 %v1693, %v1663
        %v1714 = vmul.f32 %v1696, %v1663
        %v1715 = vmul.f32 %v1699, %v1663
        %v1716 = vmul.f32 %v1702, %v1663
        %v1717 = vmul.f32 %v1705, %v1663
        %v1718 = vmul.f32 %v1708, %v1663
        %v1719 = vmul.f32 %v1711, %v1663
        %v1720 = vadd.f32 %v1712, 1e-05
        %v1721 = vadd.f32 %v1713, 1e-05
        %v1722 = vadd.f32 %v1714, 1e-05
        %v1723 = vadd.f32 %v1715, 1e-05
        %v1724 = vadd.f32 %v1716, 1e-05
        %v1725 = vadd.f32 %v1717, 1e-05
        %v1726 = vadd.f32 %v1718, 1e-05
        %v1727 = vadd.f32 %v1719, 1e-05
        %v1728 = vrsqrt.pop %v1720
        %v1729 = vrsqrt.pop %v1721
        %v1730 = vrsqrt.pop %v1722
        %v1731 = vrsqrt.pop %v1723
        %v1732 = vrsqrt.pop %v1724
        %v1733 = vrsqrt.pop %v1725
        %v1734 = vrsqrt.pop %v1726
        %v1735 = vrsqrt.pop %v1727
        %v1736 = vmul.f32 %v1672, %v1728
        %v1737 = vmul.f32 %v1673, %v1729
        %v1738 = vmul.f32 %v1674, %v1730
        %v1739 = vmul.f32 %v1675, %v1731
        %v1740 = vmul.f32 %v1676, %v1732
        %v1741 = vmul.f32 %v1677, %v1733
        %v1742 = vmul.f32 %v1678, %v1734
        %v1743 = vmul.f32 %v1679, %v1735
        %v1745 = vlaneseq
        %v1746 = vshrl.u32 %v1745, 7
        %v1747 = vsub.s32 0, %v1746
        %v1748 = vrot.slane %v1635, %v1747
        %v1750 = vmul.f32 %v1736, %v1748
        %v1751 = vmul.f32 %v1737, %v1748
        %v1752 = vmul.f32 %v1738, %v1748
        %v1753 = vmul.f32 %v1739, %v1748
        %v1754 = vmul.f32 %v1740, %v1748
        %v1755 = vmul.f32 %v1741, %v1748
        %v1756 = vmul.f32 %v1742, %v1748
        %v1757 = vmul.f32 %v1743, %v1748
        %v1759 = vlaneseq
        %v1760 = vshrl.u32 %v1759, 7
        %v1761 = vsub.s32 0, %v1760
        %v1762 = vrot.slane %v1636, %v1761
        %v1764 = vadd.f32 %v1750, %v1762
        %v1765 = vadd.f32 %v1751, %v1762
        %v1766 = vadd.f32 %v1752, %v1762
        %v1767 = vadd.f32 %v1753, %v1762
        %v1768 = vadd.f32 %v1754, %v1762
        %v1769 = vadd.f32 %v1755, %v1762
        %v1770 = vadd.f32 %v1756, %v1762
        %v1771 = vadd.f32 %v1757, %v1762
        %1772 = vst.msk [vmem:[#allocation2] sm:$0xff] %vm1637, %v1764
        %1773 = vst.msk [vmem:[#allocation2 + $0x8] sm:$0xff] %vm1637, %v1765
        %1774 = vst.msk [vmem:[#allocation2 + $0x10] sm:$0xff] %vm1637, %v1766
        %1775 = vst.msk [vmem:[#allocation2 + $0x18] sm:$0xff] %vm1637, %v1767
        %1776 = vst.msk [vmem:[#allocation2 + $0x20] sm:$0xff] %vm1637, %v1768
        %1777 = vst.msk [vmem:[#allocation2 + $0x28] sm:$0xff] %vm1637, %v1769
        %1778 = vst.msk [vmem:[#allocation2 + $0x30] sm:$0xff] %vm1637, %v1770
        %1779 = vst.msk [vmem:[#allocation2 + $0x38] sm:$0x3f] %vm1659, %v1771
      $region100: #{hubert_encoder_forward.5} parent=95 // pred_fallthru
        _
      %v1780 = vld [vmem:[#allocation2] sm:$0xff]
      %v1781 = vld [vmem:[#allocation2 + $0x8] sm:$0xff]
      %v1782 = vld [vmem:[#allocation2 + $0x10] sm:$0xff]
      %v1783 = vld [vmem:[#allocation2 + $0x18] sm:$0xff]
      %v1784 = vld [vmem:[#allocation2 + $0x20] sm:$0xff]
      %v1785 = vld [vmem:[#allocation2 + $0x28] sm:$0xff]
      %v1786 = vld [vmem:[#allocation2 + $0x30] sm:$0xff]
      %v1787 = vld [vmem:[#allocation2 + $0x38] sm:$0x3f]
      %v1788 = vpack.c.bf16 %v1781, %v1780
      %v1789 = vpack.c.bf16 %v1783, %v1782
      %v1790 = vpack.c.bf16 %v1785, %v1784
      %v1791 = vpack.c.bf16 %v1787, %v1786
      %v1792 = vld [vmem:[%s720] sm:$0xf]
      %v1793 = vld [vmem:[%s720 + $0x4] sm:$0xf]
      %v1794 = vld [vmem:[%s720 + $0x8] sm:$0xf]
      %v1795 = vld [vmem:[%s720 + $0xc] sm:$0xf]
      %v1796 = vld [vmem:[%s723] sm:$0x1]
      %v1798 = vlaneseq
      %v1799 = vshrl.u32 %v1798, 7
      %v1800 = vsub.s32 0, %v1799
      %v1801 = vrot.slane %v1796, %v1800
      %v1807 = vunpack.c.l.b16 %v1792
      %v1808 = vunpack.c.l.b16 %v1793
      %v1809 = vunpack.c.l.b16 %v1794
      %v1810 = vunpack.c.l.b16 %v1795
      %v1811 = vpack.c.b16 %v1808, %v1807
      %v1812 = vpack.c.b16 %v1810, %v1809
      %vm1815 = vcmask 261120
      %v1817 = vsel %vm1815, %v1788, 0
      %v1820 = vsel %vm1815, %v1789, 0
      %v1823 = vsel %vm1815, %v1790, 0
      %v1826 = vsel %vm1815, %v1791, 0
      %1828 = vmatprep.subr.bf16.mxu0 0
      %1829 = vmatpush1.bf16.msra.mxu0 %v1811
      %1830 = vmatprep.subr.bf16.mxu0 0
      %1831 = vmatpush1.bf16.msra.mxu0 %v1812
      %1832 = vmatprep.subr.bf16.mxu0 0
      %1833 = vmatpush1.bf16.msra.mxu0 0
      %1834 = vmatprep.subr.bf16.mxu0 0
      %1835 = vmatpush1.bf16.msra.mxu0 0
      %1836 = vmatprep.subr.bf16.mxu0 0
      %1837 = vmatpush1.bf16.msra.mxu0 0
      %1838 = vmatprep.subr.bf16.mxu0 0
      %1839 = vmatpush1.bf16.msra.mxu0 0
      %1840 = vmatprep.subr.bf16.mxu0 0
      %1841 = vmatpush1.bf16.msra.mxu0 0
      %1842 = vmatprep.subr.bf16.mxu0 0
      %1843 = vmatpush1.bf16.msra.mxu0 0
      %1844 = vmatprep.subr.bf16.mxu0 0
      %1845 = vmatpush1.bf16.msra.mxu0 0
      %1846 = vmatprep.subr.bf16.mxu0 0
      %1847 = vmatpush1.bf16.msra.mxu0 0
      %1848 = vmatprep.subr.bf16.mxu0 0
      %1849 = vmatpush1.bf16.msra.mxu0 0
      %1850 = vmatprep.subr.bf16.mxu0 0
      %1851 = vmatpush1.bf16.msra.mxu0 0
      %1852 = vmatprep.subr.bf16.mxu0 0
      %1853 = vmatpush1.bf16.msra.mxu0 0
      %1854 = vmatprep.subr.bf16.mxu0 0
      %1855 = vmatpush1.bf16.msra.mxu0 0
      %1856 = vmatprep.subr.bf16.mxu0 0
      %1857 = vmatpush1.bf16.msra.mxu0 0
      %1858 = vmatprep.subr.bf16.mxu0 0
      %1859 = vmatpush1.bf16.msra.mxu0 0
      %1860 = vmatprep.mubr.bf16.mxu0 0
      %1861 = vmatmul.mubr.bf16.gmra.mrb[0].mxu0 %v1817
      %v1862 = vpop.f32.mrb[0].mxu0
      %v1863 = vadd.f32 %v1801, %v1862
      %v1864 = vpop.f32.mrb[0].mxu0
      %v1865 = vpop.f32.mrb[0].mxu0
      %v1866 = vadd.f32 %v1801, %v1865
      %v1867 = vpop.f32.mrb[0].mxu0
      %1868 = vmatprep.mubr.bf16.mxu0 0
      %1869 = vmatmul.mubr.bf16.gmra.mrb[0].mxu0 %v1820
      %v1870 = vpop.f32.mrb[0].mxu0
      %v1871 = vadd.f32 %v1801, %v1870
      %v1872 = vpop.f32.mrb[0].mxu0
      %v1873 = vpop.f32.mrb[0].mxu0
      %v1874 = vadd.f32 %v1801, %v1873
      %v1875 = vpop.f32.mrb[0].mxu0
      %1876 = vmatprep.mubr.bf16.mxu0 0
      %1877 = vmatmul.mubr.bf16.gmra.mrb[0].mxu0 %v1823
      %v1878 = vpop.f32.mrb[0].mxu0
      %v1879 = vadd.f32 %v1801, %v1878
      %v1880 = vpop.f32.mrb[0].mxu0
      %v1881 = vpop.f32.mrb[0].mxu0
      %v1882 = vadd.f32 %v1801, %v1881
      %v1883 = vpop.f32.mrb[0].mxu0
      %1884 = vmatprep.mubr.bf16.mxu0 0
      %1885 = vmatmul.mubr.bf16.gmra.mrb[0].mxu0 %v1826
      %v1886 = vpop.f32.mrb[0].mxu0
      %v1887 = vadd.f32 %v1801, %v1886
      %v1888 = vpop.f32.mrb[0].mxu0
      %v1889 = vpop.f32.mrb[0].mxu0
      %v1890 = vadd.f32 %v1801, %v1889
      %v1891 = vpop.f32.mrb[0].mxu0
      %1892 = vdwg.mxu0
      %v1893 = vld [vmem:[%s4] sm:$0xff]
      %v1894 = vld [vmem:[%s4 + $0x8] sm:$0xff]
      %v1895 = vld [vmem:[%s4 + $0x10] sm:$0xff]
      %v1896 = vld [vmem:[%s4 + $0x18] sm:$0xff]
      %v1897 = vld [vmem:[%s4 + $0x20] sm:$0xff]
      %v1898 = vld [vmem:[%s4 + $0x28] sm:$0xff]
      %v1899 = vld [vmem:[%s4 + $0x30] sm:$0xff]
      %v1900 = vld [vmem:[%s4 + $0x38] sm:$0x3f]
      %v1901 = vpack.c.bf16 %v1866, %v1863
      %v1902 = vpack.c.bf16 %v1874, %v1871
      %v1903 = vpack.c.bf16 %v1882, %v1879
      %v1904 = vpack.c.bf16 %v1890, %v1887
      %1909 = vrot.lane.b32.xlu0 %v1901, 96
      %v1910 = vpop.permute.xlu0 %1909
      %1911 = vrot.lane.b32.xlu0 %v1902, 96
      %v1912 = vpop.permute.xlu0 %1911
      %1913 = vrot.lane.b32.xlu0 %v1903, 96
      %v1914 = vpop.permute.xlu0 %1913
      %1915 = vrot.lane.b32.xlu0 %v1904, 96
      %v1916 = vpop.permute.xlu0 %1915
      %vm1917 = vcmask 64512
      %v1919 = vsel %vm1917, %v1901, 0
      %v1922 = vsel %vm1917, %v1902, 0
      %v1925 = vsel %vm1917, %v1903, 0
      %v1928 = vsel %vm1917, %v1904, 0
      %v1931 = vsel %vm1917, %v1910, 0
      %v1934 = vsel %vm1917, %v1912, 0
      %v1937 = vsel %vm1917, %v1914, 0
      %v1940 = vsel %vm1917, %v1916, 0
      %1942 = vmatprep.subr.bf16.mxu0 0
      %1943 = vmatpush1.bf16.xpose.msra.mxu0 %v1931
      %1944 = vmatprep.subr.bf16.mxu0 0
      %1945 = vmatpush1.bf16.xpose.msra.mxu0 %v1934
      %1946 = vmatprep.subr.bf16.mxu0 0
      %1947 = vmatpush1.bf16.xpose.msra.mxu0 %v1937
      %1948 = vmatprep.subr.bf16.mxu0 0
      %1949 = vmatpush1.bf16.xpose.msra.mxu0 %v1940
      %1950 = vmatprep.subr.bf16.mxu0 0
      %1951 = vmatpush1.bf16.xpose.msra.mxu0 0
      %1952 = vmatprep.subr.bf16.mxu0 0
      %1953 = vmatpush1.bf16.xpose.msra.mxu0 0
      %1954 = vmatprep.subr.bf16.mxu0 0
      %1955 = vmatpush1.bf16.xpose.msra.mxu0 0
      %1956 = vmatprep.subr.bf16.mxu0 0
      %1957 = vmatpush1.bf16.xpose.msra.mxu0 0
      %1958 = vmatprep.subr.bf16.mxu0 0
      %1959 = vmatpush1.bf16.xpose.msra.mxu0 0
      %1960 = vmatprep.subr.bf16.mxu0 0
      %1961 = vmatpush1.bf16.xpose.msra.mxu0 0
      %1962 = vmatprep.subr.bf16.mxu0 0
      %1963 = vmatpush1.bf16.xpose.msra.mxu0 0
      %1964 = vmatprep.subr.bf16.mxu0 0
      %1965 = vmatpush1.bf16.xpose.msra.mxu0 0
      %1966 = vmatprep.subr.bf16.mxu0 0
      %1967 = vmatpush1.bf16.xpose.msra.mxu0 0
      %1968 = vmatprep.subr.bf16.mxu0 0
      %1969 = vmatpush1.bf16.xpose.msra.mxu0 0
      %1970 = vmatprep.subr.bf16.mxu0 0
      %1971 = vmatpush1.bf16.xpose.msra.mxu0 0
      %1972 = vmatprep.subr.bf16.mxu0 0
      %1973 = vmatpush1.bf16.xpose.msra.mxu0 0
      %1974 = vmatprep.mubr.bf16.mxu0 0
      %1975 = vmatmul.mubr.bf16.gmra.mrb[0].mxu0 %v1919
      %v1976 = vpop.f32.mrb[0].mxu0
      %v1977 = vadd.f32 %v1893, %v1976
      %v1978 = vpop.f32.mrb[0].mxu0
      %v1979 = vpop.f32.mrb[0].mxu0
      %v1980 = vadd.f32 %v1894, %v1979
      %v1981 = vpop.f32.mrb[0].mxu0
      %1982 = vmatprep.mubr.bf16.mxu0 0
      %1983 = vmatmul.mubr.bf16.gmra.mrb[0].mxu0 %v1922
      %v1984 = vpop.f32.mrb[0].mxu0
      %v1985 = vadd.f32 %v1895, %v1984
      %v1986 = vpop.f32.mrb[0].mxu0
      %v1987 = vpop.f32.mrb[0].mxu0
      %v1988 = vadd.f32 %v1896, %v1987
      %v1989 = vpop.f32.mrb[0].mxu0
      %1990 = vmatprep.mubr.bf16.mxu0 0
      %1991 = vmatmul.mubr.bf16.gmra.mrb[0].mxu0 %v1925
      %v1992 = vpop.f32.mrb[0].mxu0
      %v1993 = vadd.f32 %v1897, %v1992
      %v1994 = vpop.f32.mrb[0].mxu0
      %v1995 = vpop.f32.mrb[0].mxu0
      %v1996 = vadd.f32 %v1898, %v1995
      %v1997 = vpop.f32.mrb[0].mxu0
      %1998 = vmatprep.mubr.bf16.mxu0 0
      %1999 = vmatmul.mubr.bf16.gmra.mrb[0].mxu0 %v1928
      %v2000 = vpop.f32.mrb[0].mxu0
      %v2001 = vadd.f32 %v1899, %v2000
      %v2002 = vpop.f32.mrb[0].mxu0
      %v2003 = vpop.f32.mrb[0].mxu0
      %v2004 = vadd.f32 %v1900, %v2003
      %v2005 = vpop.f32.mrb[0].mxu0
      %2006 = vdwg.mxu0
      %vm2007 = vcmask 506880
      %v2008 = vsel %vm2007, %v1977, -inf
      %2009 = vmax.xlane.f32.xlu0 %v2008
      %v2010 = vpop.xlane.xlu0 %2009
      %v2011 = vsel %vm2007, %v1980, -inf
      %2012 = vmax.xlane.f32.xlu0 %v2011
      %v2013 = vpop.xlane.xlu0 %2012
      %v2014 = vsel %vm2007, %v1985, -inf
      %2015 = vmax.xlane.f32.xlu0 %v2014
      %v2016 = vpop.xlane.xlu0 %2015
      %v2017 = vsel %vm2007, %v1988, -inf
      %2018 = vmax.xlane.f32.xlu0 %v2017
      %v2019 = vpop.xlane.xlu0 %2018
      %v2020 = vsel %vm2007, %v1993, -inf
      %2021 = vmax.xlane.f32.xlu0 %v2020
      %v2022 = vpop.xlane.xlu0 %2021
      %v2023 = vsel %vm2007, %v1996, -inf
      %2024 = vmax.xlane.f32.xlu0 %v2023
      %v2025 = vpop.xlane.xlu0 %2024
      %v2026 = vsel %vm2007, %v2001, -inf
      %2027 = vmax.xlane.f32.xlu0 %v2026
      %v2028 = vpop.xlane.xlu0 %2027
      %vm2029 = vcmask 504832
      %v2030 = vsel %vm2029, %v2004, -inf
      %2031 = vmax.xlane.f32.xlu0 %v2030
      %v2032 = vpop.xlane.xlu0 %2031
      %v2033 = vsub.f32 %v1977, %v2010
      %v2034 = vsub.f32 %v1980, %v2013
      %v2035 = vsub.f32 %v1985, %v2016
      %v2036 = vsub.f32 %v1988, %v2019
      %v2037 = vsub.f32 %v1993, %v2022
      %v2038 = vsub.f32 %v1996, %v2025
      %v2039 = vsub.f32 %v2001, %v2028
      %v2040 = vsub.f32 %v2004, %v2032
      %v2041 = vmul.f32 %v2033, 1.442695
      %v2042 = vpow.pop %v2041
      %v2043 = vmul.f32 %v2034, 1.442695
      %v2044 = vpow.pop %v2043
      %v2045 = vmul.f32 %v2035, 1.442695
      %v2046 = vpow.pop %v2045
      %v2047 = vmul.f32 %v2036, 1.442695
      %v2048 = vpow.pop %v2047
      %v2049 = vmul.f32 %v2037, 1.442695
      %v2050 = vpow.pop %v2049
      %v2051 = vmul.f32 %v2038, 1.442695
      %v2052 = vpow.pop %v2051
      %v2053 = vmul.f32 %v2039, 1.442695
      %v2054 = vpow.pop %v2053
      %v2055 = vmul.f32 %v2040, 1.442695
      %v2056 = vpow.pop %v2055
      %v2057 = vsel %vm2007, %v2042, 0.0
      %2058 = vadd.xlane.f32.xlu0 %v2057
      %v2059 = vpop.xlane.xlu0 %2058
      %v2060 = vsel %vm2007, %v2044, 0.0
      %2061 = vadd.xlane.f32.xlu0 %v2060
      %v2062 = vpop.xlane.xlu0 %2061
      %v2063 = vsel %vm2007, %v2046, 0.0
      %2064 = vadd.xlane.f32.xlu0 %v2063
      %v2065 = vpop.xlane.xlu0 %2064
      %v2066 = vsel %vm2007, %v2048, 0.0
      %2067 = vadd.xlane.f32.xlu0 %v2066
      %v2068 = vpop.xlane.xlu0 %2067
      %v2069 = vsel %vm2007, %v2050, 0.0
      %2070 = vadd.xlane.f32.xlu0 %v2069
      %v2071 = vpop.xlane.xlu0 %2070
      %v2072 = vsel %vm2007, %v2052, 0.0
      %2073 = vadd.xlane.f32.xlu0 %v2072
      %v2074 = vpop.xlane.xlu0 %2073
      %v2075 = vsel %vm2007, %v2054, 0.0
      %2076 = vadd.xlane.f32.xlu0 %v2075
      %v2077 = vpop.xlane.xlu0 %2076
      %v2078 = vsel %vm2029, %v2056, 0.0
      %2079 = vadd.xlane.f32.xlu0 %v2078
      %v2080 = vpop.xlane.xlu0 %2079
      %v2081 = vrcp.pop %v2059
      %v2082 = vmul.f32 %v2042, %v2081
      %v2083 = vrcp.pop %v2062
      %v2084 = vmul.f32 %v2044, %v2083
      %v2085 = vrcp.pop %v2065
      %v2086 = vmul.f32 %v2046, %v2085
      %v2087 = vrcp.pop %v2068
      %v2088 = vmul.f32 %v2048, %v2087
      %v2089 = vrcp.pop %v2071
      %v2090 = vmul.f32 %v2050, %v2089
      %v2091 = vrcp.pop %v2074
      %v2092 = vmul.f32 %v2052, %v2091
      %v2093 = vrcp.pop %v2077
      %v2094 = vmul.f32 %v2054, %v2093
      %v2095 = vrcp.pop %v2080
      %v2096 = vmul.f32 %v2056, %v2095
      %v2097 = vpack.c.bf16 %v2084, %v2082
      %v2098 = vpack.c.bf16 %v2088, %v2086
      %v2099 = vpack.c.bf16 %v2092, %v2090
      %v2100 = vpack.c.bf16 %v2096, %v2094
      %2101 = vrot.lane.b32.xlu0 %v1901, 64
      %v2102 = vpop.permute.xlu0 %2101
      %2103 = vrot.lane.b32.xlu0 %v1902, 64
      %v2104 = vpop.permute.xlu0 %2103
      %2105 = vrot.lane.b32.xlu0 %v1903, 64
      %v2106 = vpop.permute.xlu0 %2105
      %2107 = vrot.lane.b32.xlu0 %v1904, 64
      %v2108 = vpop.permute.xlu0 %2107
      %v2113 = vsel %vm2007, %v2097, 0
      %v2116 = vsel %vm2007, %v2098, 0
      %v2119 = vsel %vm2007, %v2099, 0
      %v2122 = vsel %vm2007, %v2100, 0
      %vm2124 = vcmask 1046528
      %v2126 = vsel %vm2124, %v2108, 0
      %2128 = vmatprep.subr.bf16.mxu0 0
      %2129 = vmatpush1.bf16.msra.mxu0 %v2102
      %2130 = vmatprep.subr.bf16.mxu0 0
      %2131 = vmatpush1.bf16.msra.mxu0 %v2104
      %2132 = vmatprep.subr.bf16.mxu0 0
      %2133 = vmatpush1.bf16.msra.mxu0 %v2106
      %2134 = vmatprep.subr.bf16.mxu0 0
      %2135 = vmatpush1.bf16.msra.mxu0 %v2126
      %2136 = vmatprep.subr.bf16.mxu0 0
      %2137 = vmatpush1.bf16.msra.mxu0 0
      %2138 = vmatprep.subr.bf16.mxu0 0
      %2139 = vmatpush1.bf16.msra.mxu0 0
      %2140 = vmatprep.subr.bf16.mxu0 0
      %2141 = vmatpush1.bf16.msra.mxu0 0
      %2142 = vmatprep.subr.bf16.mxu0 0
      %2143 = vmatpush1.bf16.msra.mxu0 0
      %2144 = vmatprep.subr.bf16.mxu0 0
      %2145 = vmatpush1.bf16.msra.mxu0 0
      %2146 = vmatprep.subr.bf16.mxu0 0
      %2147 = vmatpush1.bf16.msra.mxu0 0
      %2148 = vmatprep.subr.bf16.mxu0 0
      %2149 = vmatpush1.bf16.msra.mxu0 0
      %2150 = vmatprep.subr.bf16.mxu0 0
      %2151 = vmatpush1.bf16.msra.mxu0 0
      %2152 = vmatprep.subr.bf16.mxu0 0
      %2153 = vmatpush1.bf16.msra.mxu0 0
      %2154 = vmatprep.subr.bf16.mxu0 0
      %2155 = vmatpush1.bf16.msra.mxu0 0
      %2156 = vmatprep.subr.bf16.mxu0 0
      %2157 = vmatpush1.bf16.msra.mxu0 0
      %2158 = vmatprep.subr.bf16.mxu0 0
      %2159 = vmatpush1.bf16.msra.mxu0 0
      %2160 = vmatprep.mubr.bf16.mxu0 0
      %2161 = vmatmul.mubr.bf16.gmra.mrb[0].mxu0 %v2113
      %v2162 = vpop.f32.mrb[0].mxu0
      %v2163 = vadd.f32 0.0, %v2162
      %v2164 = vpop.f32.mrb[0].mxu0
      %v2165 = vpop.f32.mrb[0].mxu0
      %v2166 = vadd.f32 0.0, %v2165
      %v2167 = vpop.f32.mrb[0].mxu0
      %2168 = vmatprep.mubr.bf16.mxu0 0
      %2169 = vmatmul.mubr.bf16.gmra.mrb[0].mxu0 %v2116
      %v2170 = vpop.f32.mrb[0].mxu0
      %v2171 = vadd.f32 0.0, %v2170
      %v2172 = vpop.f32.mrb[0].mxu0
      %v2173 = vpop.f32.mrb[0].mxu0
      %v2174 = vadd.f32 0.0, %v2173
      %v2175 = vpop.f32.mrb[0].mxu0
      %2176 = vmatprep.mubr.bf16.mxu0 0
      %2177 = vmatmul.mubr.bf16.gmra.mrb[0].mxu0 %v2119
      %v2178 = vpop.f32.mrb[0].mxu0
      %v2179 = vadd.f32 0.0, %v2178
      %v2180 = vpop.f32.mrb[0].mxu0
      %v2181 = vpop.f32.mrb[0].mxu0
      %v2182 = vadd.f32 0.0, %v2181
      %v2183 = vpop.f32.mrb[0].mxu0
      %2184 = vmatprep.mubr.bf16.mxu0 0
      %2185 = vmatmul.mubr.bf16.gmra.mrb[0].mxu0 %v2122
      %v2186 = vpop.f32.mrb[0].mxu0
      %v2187 = vadd.f32 0.0, %v2186
      %v2188 = vpop.f32.mrb[0].mxu0
      %v2189 = vpop.f32.mrb[0].mxu0
      %v2190 = vadd.f32 0.0, %v2189
      %v2191 = vpop.f32.mrb[0].mxu0
      %2192 = vdwg.mxu0
      %2193 = vst.msk [vmem:[#allocation3] sm:$0xff] %vm1917, %v2163
      %2194 = vst.msk [vmem:[#allocation3 + $0x8] sm:$0xff] %vm1917, %v2166
      %2195 = vst.msk [vmem:[#allocation3 + $0x10] sm:$0xff] %vm1917, %v2171
      %2196 = vst.msk [vmem:[#allocation3 + $0x18] sm:$0xff] %vm1917, %v2174
      %2197 = vst.msk [vmem:[#allocation3 + $0x20] sm:$0xff] %vm1917, %v2179
      %2198 = vst.msk [vmem:[#allocation3 + $0x28] sm:$0xff] %vm1917, %v2182
      %2199 = vst.msk [vmem:[#allocation3 + $0x30] sm:$0xff] %vm1917, %v2187
      %vm2200 = vcmask 62464
      %2201 = vst.msk [vmem:[#allocation3 + $0x38] sm:$0x3f] %vm2200, %v2190
      %2202 = vrot.lane.b32.xlu0 %v1901, 120
      %v2203 = vpop.permute.xlu0 %2202
      %2204 = vrot.lane.b32.xlu0 %v1902, 120
      %v2205 = vpop.permute.xlu0 %2204
      %2206 = vrot.lane.b32.xlu0 %v1903, 120
      %v2207 = vpop.permute.xlu0 %2206
      %2208 = vrot.lane.b32.xlu0 %v1904, 120
      %v2209 = vpop.permute.xlu0 %2208
      %2210 = vrot.lane.b32.xlu0 %v1901, 88
      %v2211 = vpop.permute.xlu0 %2210
      %2212 = vrot.lane.b32.xlu0 %v1902, 88
      %v2213 = vpop.permute.xlu0 %2212
      %2214 = vrot.lane.b32.xlu0 %v1903, 88
      %v2215 = vpop.permute.xlu0 %2214
      %2216 = vrot.lane.b32.xlu0 %v1904, 88
      %v2217 = vpop.permute.xlu0 %2216
      %v2219 = vsel %vm1917, %v2203, 0
      %v2222 = vsel %vm1917, %v2205, 0
      %v2225 = vsel %vm1917, %v2207, 0
      %v2228 = vsel %vm1917, %v2209, 0
      %v2231 = vsel %vm1917, %v2211, 0
      %v2234 = vsel %vm1917, %v2213, 0
      %v2237 = vsel %vm1917, %v2215, 0
      %v2240 = vsel %vm1917, %v2217, 0
      %2242 = vmatprep.subr.bf16.mxu0 0
      %2243 = vmatpush1.bf16.xpose.msra.mxu0 %v2231
      %2244 = vmatprep.subr.bf16.mxu0 0
      %2245 = vmatpush1.bf16.xpose.msra.mxu0 %v2234
      %2246 = vmatprep.subr.bf16.mxu0 0
      %2247 = vmatpush1.bf16.xpose.msra.mxu0 %v2237
      %2248 = vmatprep.subr.bf16.mxu0 0
      %2249 = vmatpush1.bf16.xpose.msra.mxu0 %v2240
      %2250 = vmatprep.subr.bf16.mxu0 0
      %2251 = vmatpush1.bf16.xpose.msra.mxu0 0
      %2252 = vmatprep.subr.bf16.mxu0 0
      %2253 = vmatpush1.bf16.xpose.msra.mxu0 0
      %2254 = vmatprep.subr.bf16.mxu0 0
      %2255 = vmatpush1.bf16.xpose.msra.mxu0 0
      %2256 = vmatprep.subr.bf16.mxu0 0
      %2257 = vmatpush1.bf16.xpose.msra.mxu0 0
      %2258 = vmatprep.subr.bf16.mxu0 0
      %2259 = vmatpush1.bf16.xpose.msra.mxu0 0
      %2260 = vmatprep.subr.bf16.mxu0 0
      %2261 = vmatpush1.bf16.xpose.msra.mxu0 0
      %2262 = vmatprep.subr.bf16.mxu0 0
      %2263 = vmatpush1.bf16.xpose.msra.mxu0 0
      %2264 = vmatprep.subr.bf16.mxu0 0
      %2265 = vmatpush1.bf16.xpose.msra.mxu0 0
      %2266 = vmatprep.subr.bf16.mxu0 0
      %2267 = vmatpush1.bf16.xpose.msra.mxu0 0
      %2268 = vmatprep.subr.bf16.mxu0 0
      %2269 = vmatpush1.bf16.xpose.msra.mxu0 0
      %2270 = vmatprep.subr.bf16.mxu0 0
      %2271 = vmatpush1.bf16.xpose.msra.mxu0 0
      %2272 = vmatprep.subr.bf16.mxu0 0
      %2273 = vmatpush1.bf16.xpose.msra.mxu0 0
      %2274 = vmatprep.mubr.bf16.mxu0 0
      %2275 = vmatmul.mubr.bf16.gmra.mrb[0].mxu0 %v2219
      %v2276 = vpop.f32.mrb[0].mxu0
      %v2277 = vadd.f32 %v1893, %v2276
      %v2278 = vpop.f32.mrb[0].mxu0
      %v2279 = vpop.f32.mrb[0].mxu0
      %v2280 = vadd.f32 %v1894, %v2279
      %v2281 = vpop.f32.mrb[0].mxu0
      %2282 = vmatprep.mubr.bf16.mxu0 0
      %2283 = vmatmul.mubr.bf16.gmra.mrb[0].mxu0 %v2222
      %v2284 = vpop.f32.mrb[0].mxu0
      %v2285 = vadd.f32 %v1895, %v2284
      %v2286 = vpop.f32.mrb[0].mxu0
      %v2287 = vpop.f32.mrb[0].mxu0
      %v2288 = vadd.f32 %v1896, %v2287
      %v2289 = vpop.f32.mrb[0].mxu0
      %2290 = vmatprep.mubr.bf16.mxu0 0
      %2291 = vmatmul.mubr.bf16.gmra.mrb[0].mxu0 %v2225
      %v2292 = vpop.f32.mrb[0].mxu0
      %v2293 = vadd.f32 %v1897, %v2292
      %v2294 = vpop.f32.mrb[0].mxu0
      %v2295 = vpop.f32.mrb[0].mxu0
      %v2296 = vadd.f32 %v1898, %v2295
      %v2297 = vpop.f32.mrb[0].mxu0
      %2298 = vmatprep.mubr.bf16.mxu0 0
      %2299 = vmatmul.mubr.bf16.gmra.mrb[0].mxu0 %v2228
      %v2300 = vpop.f32.mrb[0].mxu0
      %v2301 = vadd.f32 %v1899, %v2300
      %v2302 = vpop.f32.mrb[0].mxu0
      %v2303 = vpop.f32.mrb[0].mxu0
      %v2304 = vadd.f32 %v1900, %v2303
      %v2305 = vpop.f32.mrb[0].mxu0
      %2306 = vdwg.mxu0
      %v2307 = vsel %vm2007, %v2277, -inf
      %2308 = vmax.xlane.f32.xlu0 %v2307
      %v2309 = vpop.xlane.xlu0 %2308
      %v2310 = vsel %vm2007, %v2280, -inf
      %2311 = vmax.xlane.f32.xlu0 %v2310
      %v2312 = vpop.xlane.xlu0 %2311
      %v2313 = vsel %vm2007, %v2285, -inf
      %2314 = vmax.xlane.f32.xlu0 %v2313
      %v2315 = vpop.xlane.xlu0 %2314
      %v2316 = vsel %vm2007, %v2288, -inf
      %2317 = vmax.xlane.f32.xlu0 %v2316
      %v2318 = vpop.xlane.xlu0 %2317
      %v2319 = vsel %vm2007, %v2293, -inf
      %2320 = vmax.xlane.f32.xlu0 %v2319
      %v2321 = vpop.xlane.xlu0 %2320
      %v2322 = vsel %vm2007, %v2296, -inf
      %2323 = vmax.xlane.f32.xlu0 %v2322
      %v2324 = vpop.xlane.xlu0 %2323
      %v2325 = vsel %vm2007, %v2301, -inf
      %2326 = vmax.xlane.f32.xlu0 %v2325
      %v2327 = vpop.xlane.xlu0 %2326
      %v2328 = vsel %vm2029, %v2304, -inf
      %2329 = vmax.xlane.f32.xlu0 %v2328
      %v2330 = vpop.xlane.xlu0 %2329
      %v2331 = vsub.f32 %v2277, %v2309
      %v2332 = vsub.f32 %v2280, %v2312
      %v2333 = vsub.f32 %v2285, %v2315
      %v2334 = vsub.f32 %v2288, %v2318
      %v2335 = vsub.f32 %v2293, %v2321
      %v2336 = vsub.f32 %v2296, %v2324
      %v2337 = vsub.f32 %v2301, %v2327
      %v2338 = vsub.f32 %v2304, %v2330
      %v2339 = vmul.f32 %v2331, 1.442695
      %v2340 = vpow.pop %v2339
      %v2341 = vmul.f32 %v2332, 1.442695
      %v2342 = vpow.pop %v2341
      %v2343 = vmul.f32 %v2333, 1.442695
      %v2344 = vpow.pop %v2343
      %v2345 = vmul.f32 %v2334, 1.442695
      %v2346 = vpow.pop %v2345
      %v2347 = vmul.f32 %v2335, 1.442695
      %v2348 = vpow.pop %v2347
      %v2349 = vmul.f32 %v2336, 1.442695
      %v2350 = vpow.pop %v2349
      %v2351 = vmul.f32 %v2337, 1.442695
      %v2352 = vpow.pop %v2351
      %v2353 = vmul.f32 %v2338, 1.442695
      %v2354 = vpow.pop %v2353
      %v2355 = vsel %vm2007, %v2340, 0.0
      %2356 = vadd.xlane.f32.xlu0 %v2355
      %v2357 = vpop.xlane.xlu0 %2356
      %v2358 = vsel %vm2007, %v2342, 0.0
      %2359 = vadd.xlane.f32.xlu0 %v2358
      %v2360 = vpop.xlane.xlu0 %2359
      %v2361 = vsel %vm2007, %v2344, 0.0
      %2362 = vadd.xlane.f32.xlu0 %v2361
      %v2363 = vpop.xlane.xlu0 %2362
      %v2364 = vsel %vm2007, %v2346, 0.0
      %2365 = vadd.xlane.f32.xlu0 %v2364
      %v2366 = vpop.xlane.xlu0 %2365
      %v2367 = vsel %vm2007, %v2348, 0.0
      %2368 = vadd.xlane.f32.xlu0 %v2367
      %v2369 = vpop.xlane.xlu0 %2368
      %v2370 = vsel %vm2007, %v2350, 0.0
      %2371 = vadd.xlane.f32.xlu0 %v2370
      %v2372 = vpop.xlane.xlu0 %2371
      %v2373 = vsel %vm2007, %v2352, 0.0
      %2374 = vadd.xlane.f32.xlu0 %v2373
      %v2375 = vpop.xlane.xlu0 %2374
      %v2376 = vsel %vm2029, %v2354, 0.0
      %2377 = vadd.xlane.f32.xlu0 %v2376
      %v2378 = vpop.xlane.xlu0 %2377
      %v2379 = vrcp.pop %v2357
      %v2380 = vmul.f32 %v2340, %v2379
      %v2381 = vrcp.pop %v2360
      %v2382 = vmul.f32 %v2342, %v2381
      %v2383 = vrcp.pop %v2363
      %v2384 = vmul.f32 %v2344, %v2383
      %v2385 = vrcp.pop %v2366
      %v2386 = vmul.f32 %v2346, %v2385
      %v2387 = vrcp.pop %v2369
      %v2388 = vmul.f32 %v2348, %v2387
      %v2389 = vrcp.pop %v2372
      %v2390 = vmul.f32 %v2350, %v2389
      %v2391 = vrcp.pop %v2375
      %v2392 = vmul.f32 %v2352, %v2391
      %v2393 = vrcp.pop %v2378
      %v2394 = vmul.f32 %v2354, %v2393
      %v2395 = vpack.c.bf16 %v2382, %v2380
      %v2396 = vpack.c.bf16 %v2386, %v2384
      %v2397 = vpack.c.bf16 %v2390, %v2388
      %v2398 = vpack.c.bf16 %v2394, %v2392
      %2399 = vrot.lane.b32.xlu0 %v1901, 56
      %v2400 = vpop.permute.xlu0 %2399
      %2401 = vrot.lane.b32.xlu0 %v1902, 56
      %v2402 = vpop.permute.xlu0 %2401
      %2403 = vrot.lane.b32.xlu0 %v1903, 56
      %v2404 = vpop.permute.xlu0 %2403
      %2405 = vrot.lane.b32.xlu0 %v1904, 56
      %v2406 = vpop.permute.xlu0 %2405
      %v2411 = vsel %vm2007, %v2395, 0
      %v2414 = vsel %vm2007, %v2396, 0
      %v2417 = vsel %vm2007, %v2397, 0
      %v2420 = vsel %vm2007, %v2398, 0
      %v2423 = vsel %vm2124, %v2406, 0
      %2425 = vmatprep.subr.bf16.mxu0 0
      %2426 = vmatpush1.bf16.msra.mxu0 %v2400
      %2427 = vmatprep.subr.bf16.mxu0 0
      %2428 = vmatpush1.bf16.msra.mxu0 %v2402
      %2429 = vmatprep.subr.bf16.mxu0 0
      %2430 = vmatpush1.bf16.msra.mxu0 %v2404
      %2431 = vmatprep.subr.bf16.mxu0 0
      %2432 = vmatpush1.bf16.msra.mxu0 %v2423
      %2433 = vmatprep.subr.bf16.mxu0 0
      %2434 = vmatpush1.bf16.msra.mxu0 0
      %2435 = vmatprep.subr.bf16.mxu0 0
      %2436 = vmatpush1.bf16.msra.mxu0 0
      %2437 = vmatprep.subr.bf16.mxu0 0
      %2438 = vmatpush1.bf16.msra.mxu0 0
      %2439 = vmatprep.subr.bf16.mxu0 0
      %2440 = vmatpush1.bf16.msra.mxu0 0
      %2441 = vmatprep.subr.bf16.mxu0 0
      %2442 = vmatpush1.bf16.msra.mxu0 0
      %2443 = vmatprep.subr.bf16.mxu0 0
      %2444 = vmatpush1.bf16.msra.mxu0 0
      %2445 = vmatprep.subr.bf16.mxu0 0
      %2446 = vmatpush1.bf16.msra.mxu0 0
      %2447 = vmatprep.subr.bf16.mxu0 0
      %2448 = vmatpush1.bf16.msra.mxu0 0
      %2449 = vmatprep.subr.bf16.mxu0 0
      %2450 = vmatpush1.bf16.msra.mxu0 0
      %2451 = vmatprep.subr.bf16.mxu0 0
      %2452 = vmatpush1.bf16.msra.mxu0 0
      %2453 = vmatprep.subr.bf16.mxu0 0
      %2454 = vmatpush1.bf16.msra.mxu0 0
      %2455 = vmatprep.subr.bf16.mxu0 0
      %2456 = vmatpush1.bf16.msra.mxu0 0
      %2457 = vmatprep.mubr.bf16.mxu0 0
      %2458 = vmatmul.mubr.bf16.gmra.mrb[0].mxu0 %v2411
      %v2459 = vpop.f32.mrb[0].mxu0
      %v2460 = vadd.f32 0.0, %v2459
      %v2461 = vpop.f32.mrb[0].mxu0
      %v2462 = vpop.f32.mrb[0].mxu0
      %v2463 = vadd.f32 0.0, %v2462
      %v2464 = vpop.f32.mrb[0].mxu0
      %2465 = vmatprep.mubr.bf16.mxu0 0
      %2466 = vmatmul.mubr.bf16.gmra.mrb[0].mxu0 %v2414
      %v2467 = vpop.f32.mrb[0].mxu0
      %v2468 = vadd.f32 0.0, %v2467
      %v2469 = vpop.f32.mrb[0].mxu0
      %v2470 = vpop.f32.mrb[0].mxu0
      %v2471 = vadd.f32 0.0, %v2470
      %v2472 = vpop.f32.mrb[0].mxu0
      %2473 = vmatprep.mubr.bf16.mxu0 0
      %2474 = vmatmul.mubr.bf16.gmra.mrb[0].mxu0 %v2417
      %v2475 = vpop.f32.mrb[0].mxu0
      %v2476 = vadd.f32 0.0, %v2475
      %v2477 = vpop.f32.mrb[0].mxu0
      %v2478 = vpop.f32.mrb[0].mxu0
      %v2479 = vadd.f32 0.0, %v2478
      %v2480 = vpop.f32.mrb[0].mxu0
      %2481 = vmatprep.mubr.bf16.mxu0 0
      %2482 = vmatmul.mubr.bf16.gmra.mrb[0].mxu0 %v2420
      %v2483 = vpop.f32.mrb[0].mxu0
      %v2484 = vadd.f32 0.0, %v2483
      %v2485 = vpop.f32.mrb[0].mxu0
      %v2486 = vpop.f32.mrb[0].mxu0
      %v2487 = vadd.f32 0.0, %v2486
      %v2488 = vpop.f32.mrb[0].mxu0
      %2489 = vdwg.mxu0
      %2498 = vrot.lane.b32.xlu0 %v2460, 8
      %v2499 = vpop.permute.xlu0 %2498
      %2500 = vrot.lane.b32.xlu0 %v2463, 8
      %v2501 = vpop.permute.xlu0 %2500
      %2502 = vrot.lane.b32.xlu0 %v2468, 8
      %v2503 = vpop.permute.xlu0 %2502
      %2504 = vrot.lane.b32.xlu0 %v2471, 8
      %v2505 = vpop.permute.xlu0 %2504
      %2506 = vrot.lane.b32.xlu0 %v2476, 8
      %v2507 = vpop.permute.xlu0 %2506
      %2508 = vrot.lane.b32.xlu0 %v2479, 8
      %v2509 = vpop.permute.xlu0 %2508
      %2510 = vrot.lane.b32.xlu0 %v2484, 8
      %v2511 = vpop.permute.xlu0 %2510
      %2512 = vrot.lane.b32.xlu0 %v2487, 8
      %v2513 = vpop.permute.xlu0 %2512
      %vm2522 = vcmask 130112
      %2523 = vst.msk [vmem:[#allocation3] sm:$0xff] %vm2522, %v2499
      %2524 = vst.msk [vmem:[#allocation3 + $0x8] sm:$0xff] %vm2522, %v2501
      %2525 = vst.msk [vmem:[#allocation3 + $0x10] sm:$0xff] %vm2522, %v2503
      %2526 = vst.msk [vmem:[#allocation3 + $0x18] sm:$0xff] %vm2522, %v2505
      %2527 = vst.msk [vmem:[#allocation3 + $0x20] sm:$0xff] %vm2522, %v2507
      %2528 = vst.msk [vmem:[#allocation3 + $0x28] sm:$0xff] %vm2522, %v2509
      %2529 = vst.msk [vmem:[#allocation3 + $0x30] sm:$0xff] %vm2522, %v2511
      %vm2530 = vcmask 128064
      %2531 = vst.msk [vmem:[#allocation3 + $0x38] sm:$0x3f] %vm2530, %v2513
      %2532 = vrot.lane.b32.xlu0 %v1901, 112
      %v2533 = vpop.permute.xlu0 %2532
      %2534 = vrot.lane.b32.xlu0 %v1902, 112
      %v2535 = vpop.permute.xlu0 %2534
      %2536 = vrot.lane.b32.xlu0 %v1903, 112
      %v2537 = vpop.permute.xlu0 %2536
      %2538 = vrot.lane.b32.xlu0 %v1904, 112
      %v2539 = vpop.permute.xlu0 %2538
      %2540 = vrot.lane.b32.xlu0 %v1901, 80
      %v2541 = vpop.permute.xlu0 %2540
      %2542 = vrot.lane.b32.xlu0 %v1902, 80
      %v2543 = vpop.permute.xlu0 %2542
      %2544 = vrot.lane.b32.xlu0 %v1903, 80
      %v2545 = vpop.permute.xlu0 %2544
      %2546 = vrot.lane.b32.xlu0 %v1904, 80
      %v2547 = vpop.permute.xlu0 %2546
      %v2549 = vsel %vm1917, %v2533, 0
      %v2552 = vsel %vm1917, %v2535, 0
      %v2555 = vsel %vm1917, %v2537, 0
      %v2558 = vsel %vm1917, %v2539, 0
      %v2561 = vsel %vm1917, %v2541, 0
      %v2564 = vsel %vm1917, %v2543, 0
      %v2567 = vsel %vm1917, %v2545, 0
      %v2570 = vsel %vm1917, %v2547, 0
      %2572 = vmatprep.subr.bf16.mxu0 0
      %2573 = vmatpush1.bf16.xpose.msra.mxu0 %v2561
      %2574 = vmatprep.subr.bf16.mxu0 0
      %2575 = vmatpush1.bf16.xpose.msra.mxu0 %v2564
      %2576 = vmatprep.subr.bf16.mxu0 0
      %2577 = vmatpush1.bf16.xpose.msra.mxu0 %v2567
      %2578 = vmatprep.subr.bf16.mxu0 0
      %2579 = vmatpush1.bf16.xpose.msra.mxu0 %v2570
      %2580 = vmatprep.subr.bf16.mxu0 0
      %2581 = vmatpush1.bf16.xpose.msra.mxu0 0
      %2582 = vmatprep.subr.bf16.mxu0 0
      %2583 = vmatpush1.bf16.xpose.msra.mxu0 0
      %2584 = vmatprep.subr.bf16.mxu0 0
      %2585 = vmatpush1.bf16.xpose.msra.mxu0 0
      %2586 = vmatprep.subr.bf16.mxu0 0
      %2587 = vmatpush1.bf16.xpose.msra.mxu0 0
      %2588 = vmatprep.subr.bf16.mxu0 0
      %2589 = vmatpush1.bf16.xpose.msra.mxu0 0
      %2590 = vmatprep.subr.bf16.mxu0 0
      %2591 = vmatpush1.bf16.xpose.msra.mxu0 0
      %2592 = vmatprep.subr.bf16.mxu0 0
      %2593 = vmatpush1.bf16.xpose.msra.mxu0 0
      %2594 = vmatprep.subr.bf16.mxu0 0
      %2595 = vmatpush1.bf16.xpose.msra.mxu0 0
      %2596 = vmatprep.subr.bf16.mxu0 0
      %2597 = vmatpush1.bf16.xpose.msra.mxu0 0
      %2598 = vmatprep.subr.bf16.mxu0 0
      %2599 = vmatpush1.bf16.xpose.msra.mxu0 0
      %2600 = vmatprep.subr.bf16.mxu0 0
      %2601 = vmatpush1.bf16.xpose.msra.mxu0 0
      %2602 = vmatprep.subr.bf16.mxu0 0
      %2603 = vmatpush1.bf16.xpose.msra.mxu0 0
      %2604 = vmatprep.mubr.bf16.mxu0 0
      %2605 = vmatmul.mubr.bf16.gmra.mrb[0].mxu0 %v2549
      %v2606 = vpop.f32.mrb[0].mxu0
      %v2607 = vadd.f32 %v1893, %v2606
      %v2608 = vpop.f32.mrb[0].mxu0
      %v2609 = vpop.f32.mrb[0].mxu0
      %v2610 = vadd.f32 %v1894, %v2609
      %v2611 = vpop.f32.mrb[0].mxu0
      %2612 = vmatprep.mubr.bf16.mxu0 0
      %2613 = vmatmul.mubr.bf16.gmra.mrb[0].mxu0 %v2552
      %v2614 = vpop.f32.mrb[0].mxu0
      %v2615 = vadd.f32 %v1895, %v2614
      %v2616 = vpop.f32.mrb[0].mxu0
      %v2617 = vpop.f32.mrb[0].mxu0
      %v2618 = vadd.f32 %v1896, %v2617
      %v2619 = vpop.f32.mrb[0].mxu0
      %2620 = vmatprep.mubr.bf16.mxu0 0
      %2621 = vmatmul.mubr.bf16.gmra.mrb[0].mxu0 %v2555
      %v2622 = vpop.f32.mrb[0].mxu0
      %v2623 = vadd.f32 %v1897, %v2622
      %v2624 = vpop.f32.mrb[0].mxu0
      %v2625 = vpop.f32.mrb[0].mxu0
      %v2626 = vadd.f32 %v1898, %v2625
      %v2627 = vpop.f32.mrb[0].mxu0
      %2628 = vmatprep.mubr.bf16.mxu0 0
      %2629 = vmatmul.mubr.bf16.gmra.mrb[0].mxu0 %v2558
      %v2630 = vpop.f32.mrb[0].mxu0
      %v2631 = vadd.f32 %v1899, %v2630
      %v2632 = vpop.f32.mrb[0].mxu0
      %v2633 = vpop.f32.mrb[0].mxu0
      %v2634 = vadd.f32 %v1900, %v2633
      %v2635 = vpop.f32.mrb[0].mxu0
      %2636 = vdwg.mxu0
      %v2637 = vsel %vm2007, %v2607, -inf
      %2638 = vmax.xlane.f32.xlu0 %v2637
      %v2639 = vpop.xlane.xlu0 %2638
      %v2640 = vsel %vm2007, %v2610, -inf
      %2641 = vmax.xlane.f32.xlu0 %v2640
      %v2642 = vpop.xlane.xlu0 %2641
      %v2643 = vsel %vm2007, %v2615, -inf
      %2644 = vmax.xlane.f32.xlu0 %v2643
      %v2645 = vpop.xlane.xlu0 %2644
      %v2646 = vsel %vm2007, %v2618, -inf
      %2647 = vmax.xlane.f32.xlu0 %v2646
      %v2648 = vpop.xlane.xlu0 %2647
      %v2649 = vsel %vm2007, %v2623, -inf
      %2650 = vmax.xlane.f32.xlu0 %v2649
      %v2651 = vpop.xlane.xlu0 %2650
      %v2652 = vsel %vm2007, %v2626, -inf
      %2653 = vmax.xlane.f32.xlu0 %v2652
      %v2654 = vpop.xlane.xlu0 %2653
      %v2655 = vsel %vm2007, %v2631, -inf
      %2656 = vmax.xlane.f32.xlu0 %v2655
      %v2657 = vpop.xlane.xlu0 %2656
      %v2658 = vsel %vm2029, %v2634, -inf
      %2659 = vmax.xlane.f32.xlu0 %v2658
      %v2660 = vpop.xlane.xlu0 %2659
      %v2661 = vsub.f32 %v2607, %v2639
      %v2662 = vsub.f32 %v2610, %v2642
      %v2663 = vsub.f32 %v2615, %v2645
      %v2664 = vsub.f32 %v2618, %v2648
      %v2665 = vsub.f32 %v2623, %v2651
      %v2666 = vsub.f32 %v2626, %v2654
      %v2667 = vsub.f32 %v2631, %v2657
      %v2668 = vsub.f32 %v2634, %v2660
      %v2669 = vmul.f32 %v2661, 1.442695
      %v2670 = vpow.pop %v2669
      %v2671 = vmul.f32 %v2662, 1.442695
      %v2672 = vpow.pop %v2671
      %v2673 = vmul.f32 %v2663, 1.442695
      %v2674 = vpow.pop %v2673
      %v2675 = vmul.f32 %v2664, 1.442695
      %v2676 = vpow.pop %v2675
      %v2677 = vmul.f32 %v2665, 1.442695
      %v2678 = vpow.pop %v2677
      %v2679 = vmul.f32 %v2666, 1.442695
      %v2680 = vpow.pop %v2679
      %v2681 = vmul.f32 %v2667, 1.442695
      %v2682 = vpow.pop %v2681
      %v2683 = vmul.f32 %v2668, 1.442695
      %v2684 = vpow.pop %v2683
      %v2685 = vsel %vm2007, %v2670, 0.0
      %2686 = vadd.xlane.f32.xlu0 %v2685
      %v2687 = vpop.xlane.xlu0 %2686
      %v2688 = vsel %vm2007, %v2672, 0.0
      %2689 = vadd.xlane.f32.xlu0 %v2688
      %v2690 = vpop.xlane.xlu0 %2689
      %v2691 = vsel %vm2007, %v2674, 0.0
      %2692 = vadd.xlane.f32.xlu0 %v2691
      %v2693 = vpop.xlane.xlu0 %2692
      %v2694 = vsel %vm2007, %v2676, 0.0
      %2695 = vadd.xlane.f32.xlu0 %v2694
      %v2696 = vpop.xlane.xlu0 %2695
      %v2697 = vsel %vm2007, %v2678, 0.0
      %2698 = vadd.xlane.f32.xlu0 %v2697
      %v2699 = vpop.xlane.xlu0 %2698
      %v2700 = vsel %vm2007, %v2680, 0.0
      %2701 = vadd.xlane.f32.xlu0 %v2700
      %v2702 = vpop.xlane.xlu0 %2701
      %v2703 = vsel %vm2007, %v2682, 0.0
      %2704 = vadd.xlane.f32.xlu0 %v2703
      %v2705 = vpop.xlane.xlu0 %2704
      %v2706 = vsel %vm2029, %v2684, 0.0
      %2707 = vadd.xlane.f32.xlu0 %v2706
      %v2708 = vpop.xlane.xlu0 %2707
      %v2709 = vrcp.pop %v2687
      %v2710 = vmul.f32 %v2670, %v2709
      %v2711 = vrcp.pop %v2690
      %v2712 = vmul.f32 %v2672, %v2711
      %v2713 = vrcp.pop %v2693
      %v2714 = vmul.f32 %v2674, %v2713
      %v2715 = vrcp.pop %v2696
      %v2716 = vmul.f32 %v2676, %v2715
      %v2717 = vrcp.pop %v2699
      %v2718 = vmul.f32 %v2678, %v2717
      %v2719 = vrcp.pop %v2702
      %v2720 = vmul.f32 %v2680, %v2719
      %v2721 = vrcp.pop %v2705
      %v2722 = vmul.f32 %v2682, %v2721
      %v2723 = vrcp.pop %v2708
      %v2724 = vmul.f32 %v2684, %v2723
      %v2725 = vpack.c.bf16 %v2712, %v2710
      %v2726 = vpack.c.bf16 %v2716, %v2714
      %v2727 = vpack.c.bf16 %v2720, %v2718
      %v2728 = vpack.c.bf16 %v2724, %v2722
      %2729 = vrot.lane.b32.xlu0 %v1901, 48
      %v2730 = vpop.permute.xlu0 %2729
      %2731 = vrot.lane.b32.xlu0 %v1902, 48
      %v2732 = vpop.permute.xlu0 %2731
      %2733 = vrot.lane.b32.xlu0 %v1903, 48
      %v2734 = vpop.permute.xlu0 %2733
      %2735 = vrot.lane.b32.xlu0 %v1904, 48
      %v2736 = vpop.permute.xlu0 %2735
      %v2741 = vsel %vm2007, %v2725, 0
      %v2744 = vsel %vm2007, %v2726, 0
      %v2747 = vsel %vm2007, %v2727, 0
      %v2750 = vsel %vm2007, %v2728, 0
      %v2753 = vsel %vm2124, %v2736, 0
      %2755 = vmatprep.subr.bf16.mxu0 0
      %2756 = vmatpush1.bf16.msra.mxu0 %v2730
      %2757 = vmatprep.subr.bf16.mxu0 0
      %2758 = vmatpush1.bf16.msra.mxu0 %v2732
      %2759 = vmatprep.subr.bf16.mxu0 0
      %2760 = vmatpush1.bf16.msra.mxu0 %v2734
      %2761 = vmatprep.subr.bf16.mxu0 0
      %2762 = vmatpush1.bf16.msra.mxu0 %v2753
      %2763 = vmatprep.subr.bf16.mxu0 0
      %2764 = vmatpush1.bf16.msra.mxu0 0
      %2765 = vmatprep.subr.bf16.mxu0 0
      %2766 = vmatpush1.bf16.msra.mxu0 0
      %2767 = vmatprep.subr.bf16.mxu0 0
      %2768 = vmatpush1.bf16.msra.mxu0 0
      %2769 = vmatprep.subr.bf16.mxu0 0
      %2770 = vmatpush1.bf16.msra.mxu0 0
      %2771 = vmatprep.subr.bf16.mxu0 0
      %2772 = vmatpush1.bf16.msra.mxu0 0
      %2773 = vmatprep.subr.bf16.mxu0 0
      %2774 = vmatpush1.bf16.msra.mxu0 0
      %2775 = vmatprep.subr.bf16.mxu0 0
      %2776 = vmatpush1.bf16.msra.mxu0 0
      %2777 = vmatprep.subr.bf16.mxu0 0
      %2778 = vmatpush1.bf16.msra.mxu0 0
      %2779 = vmatprep.subr.bf16.mxu0 0
      %2780 = vmatpush1.bf16.msra.mxu0 0
      %2781 = vmatprep.subr.bf16.mxu0 0
      %2782 = vmatpush1.bf16.msra.mxu0 0
      %2783 = vmatprep.subr.bf16.mxu0 0
      %2784 = vmatpush1.bf16.msra.mxu0 0
      %2785 = vmatprep.subr.bf16.mxu0 0
      %2786 = vmatpush1.bf16.msra.mxu0 0
      %2787 = vmatprep.mubr.bf16.mxu0 0
      %2788 = vmatmul.mubr.bf16.gmra.mrb[0].mxu0 %v2741
      %v2789 = vpop.f32.mrb[0].mxu0
      %v2790 = vadd.f32 0.0, %v2789
      %v2791 = vpop.f32.mrb[0].mxu0
      %v2792 = vpop.f32.mrb[0].mxu0
      %v2793 = vadd.f32 0.0, %v2792
      %v2794 = vpop.f32.mrb[0].mxu0
      %2795 = vmatprep.mubr.bf16.mxu0 0
      %2796 = vmatmul.mubr.bf16.gmra.mrb[0].mxu0 %v2744
      %v2797 = vpop.f32.mrb[0].mxu0
      %v2798 = vadd.f32 0.0, %v2797
      %v2799 = vpop.f32.mrb[0].mxu0
      %v2800 = vpop.f32.mrb[0].mxu0
      %v2801 = vadd.f32 0.0, %v2800
      %v2802 = vpop.f32.mrb[0].mxu0
      %2803 = vmatprep.mubr.bf16.mxu0 0
      %2804 = vmatmul.mubr.bf16.gmra.mrb[0].mxu0 %v2747
      %v2805 = vpop.f32.mrb[0].mxu0
      %v2806 = vadd.f32 0.0, %v2805
      %v2807 = vpop.f32.mrb[0].mxu0
      %v2808 = vpop.f32.mrb[0].mxu0
      %v2809 = vadd.f32 0.0, %v2808
      %v2810 = vpop.f32.mrb[0].mxu0
      %2811 = vmatprep.mubr.bf16.mxu0 0
      %2812 = vmatmul.mubr.bf16.gmra.mrb[0].mxu0 %v2750
      %v2813 = vpop.f32.mrb[0].mxu0
      %v2814 = vadd.f32 0.0, %v2813
      %v2815 = vpop.f32.mrb[0].mxu0
      %v2816 = vpop.f32.mrb[0].mxu0
      %v2817 = vadd.f32 0.0, %v2816
      %v2818 = vpop.f32.mrb[0].mxu0
      %2819 = vdwg.mxu0
      %2828 = vrot.lane.b32.xlu0 %v2790, 16
      %v2829 = vpop.permute.xlu0 %2828
      %2830 = vrot.lane.b32.xlu0 %v2793, 16
      %v2831 = vpop.permute.xlu0 %2830
      %2832 = vrot.lane.b32.xlu0 %v2798, 16
      %v2833 = vpop.permute.xlu0 %2832
      %2834 = vrot.lane.b32.xlu0 %v2801, 16
      %v2835 = vpop.permute.xlu0 %2834
      %2836 = vrot.lane.b32.xlu0 %v2806, 16
      %v2837 = vpop.permute.xlu0 %2836
      %2838 = vrot.lane.b32.xlu0 %v2809, 16
      %v2839 = vpop.permute.xlu0 %2838
      %2840 = vrot.lane.b32.xlu0 %v2814, 16
      %v2841 = vpop.permute.xlu0 %2840
      %2842 = vrot.lane.b32.xlu0 %v2817, 16
      %v2843 = vpop.permute.xlu0 %2842
      %vm2852 = vcmask 195712
      %2853 = vst.msk [vmem:[#allocation3] sm:$0xff] %vm2852, %v2829
      %2854 = vst.msk [vmem:[#allocation3 + $0x8] sm:$0xff] %vm2852, %v2831
      %2855 = vst.msk [vmem:[#allocation3 + $0x10] sm:$0xff] %vm2852, %v2833
      %2856 = vst.msk [vmem:[#allocation3 + $0x18] sm:$0xff] %vm2852, %v2835
      %2857 = vst.msk [vmem:[#allocation3 + $0x20] sm:$0xff] %vm2852, %v2837
      %2858 = vst.msk [vmem:[#allocation3 + $0x28] sm:$0xff] %vm2852, %v2839
      %2859 = vst.msk [vmem:[#allocation3 + $0x30] sm:$0xff] %vm2852, %v2841
      %vm2860 = vcmask 193664
      %2861 = vst.msk [vmem:[#allocation3 + $0x38] sm:$0x3f] %vm2860, %v2843
      %2862 = vrot.lane.b32.xlu0 %v1901, 104
      %v2863 = vpop.permute.xlu0 %2862
      %2864 = vrot.lane.b32.xlu0 %v1902, 104
      %v2865 = vpop.permute.xlu0 %2864
      %2866 = vrot.lane.b32.xlu0 %v1903, 104
      %v2867 = vpop.permute.xlu0 %2866
      %2868 = vrot.lane.b32.xlu0 %v1904, 104
      %v2869 = vpop.permute.xlu0 %2868
      %2870 = vrot.lane.b32.xlu0 %v1901, 72
      %v2871 = vpop.permute.xlu0 %2870
      %2872 = vrot.lane.b32.xlu0 %v1902, 72
      %v2873 = vpop.permute.xlu0 %2872
      %2874 = vrot.lane.b32.xlu0 %v1903, 72
      %v2875 = vpop.permute.xlu0 %2874
      %2876 = vrot.lane.b32.xlu0 %v1904, 72
      %v2877 = vpop.permute.xlu0 %2876
      %v2879 = vsel %vm1917, %v2863, 0
      %v2882 = vsel %vm1917, %v2865, 0
      %v2885 = vsel %vm1917, %v2867, 0
      %v2888 = vsel %vm1917, %v2869, 0
      %v2891 = vsel %vm1917, %v2871, 0
      %v2894 = vsel %vm1917, %v2873, 0
      %v2897 = vsel %vm1917, %v2875, 0
      %v2900 = vsel %vm1917, %v2877, 0
      %2902 = vmatprep.subr.bf16.mxu0 0
      %2903 = vmatpush1.bf16.xpose.msra.mxu0 %v2891
      %2904 = vmatprep.subr.bf16.mxu0 0
      %2905 = vmatpush1.bf16.xpose.msra.mxu0 %v2894
      %2906 = vmatprep.subr.bf16.mxu0 0
      %2907 = vmatpush1.bf16.xpose.msra.mxu0 %v2897
      %2908 = vmatprep.subr.bf16.mxu0 0
      %2909 = vmatpush1.bf16.xpose.msra.mxu0 %v2900
      %2910 = vmatprep.subr.bf16.mxu0 0
      %2911 = vmatpush1.bf16.xpose.msra.mxu0 0
      %2912 = vmatprep.subr.bf16.mxu0 0
      %2913 = vmatpush1.bf16.xpose.msra.mxu0 0
      %2914 = vmatprep.subr.bf16.mxu0 0
      %2915 = vmatpush1.bf16.xpose.msra.mxu0 0
      %2916 = vmatprep.subr.bf16.mxu0 0
      %2917 = vmatpush1.bf16.xpose.msra.mxu0 0
      %2918 = vmatprep.subr.bf16.mxu0 0
      %2919 = vmatpush1.bf16.xpose.msra.mxu0 0
      %2920 = vmatprep.subr.bf16.mxu0 0
      %2921 = vmatpush1.bf16.xpose.msra.mxu0 0
      %2922 = vmatprep.subr.bf16.mxu0 0
      %2923 = vmatpush1.bf16.xpose.msra.mxu0 0
      %2924 = vmatprep.subr.bf16.mxu0 0
      %2925 = vmatpush1.bf16.xpose.msra.mxu0 0
      %2926 = vmatprep.subr.bf16.mxu0 0
      %2927 = vmatpush1.bf16.xpose.msra.mxu0 0
      %2928 = vmatprep.subr.bf16.mxu0 0
      %2929 = vmatpush1.bf16.xpose.msra.mxu0 0
      %2930 = vmatprep.subr.bf16.mxu0 0
      %2931 = vmatpush1.bf16.xpose.msra.mxu0 0
      %2932 = vmatprep.subr.bf16.mxu0 0
      %2933 = vmatpush1.bf16.xpose.msra.mxu0 0
      %2934 = vmatprep.mubr.bf16.mxu0 0
      %2935 = vmatmul.mubr.bf16.gmra.mrb[0].mxu0 %v2879
      %v2936 = vpop.f32.mrb[0].mxu0
      %v2937 = vadd.f32 %v1893, %v2936
      %v2938 = vpop.f32.mrb[0].mxu0
      %v2939 = vpop.f32.mrb[0].mxu0
      %v2940 = vadd.f32 %v1894, %v2939
      %v2941 = vpop.f32.mrb[0].mxu0
      %2942 = vmatprep.mubr.bf16.mxu0 0
      %2943 = vmatmul.mubr.bf16.gmra.mrb[0].mxu0 %v2882
      %v2944 = vpop.f32.mrb[0].mxu0
      %v2945 = vadd.f32 %v1895, %v2944
      %v2946 = vpop.f32.mrb[0].mxu0
      %v2947 = vpop.f32.mrb[0].mxu0
      %v2948 = vadd.f32 %v1896, %v2947
      %v2949 = vpop.f32.mrb[0].mxu0
      %2950 = vmatprep.mubr.bf16.mxu0 0
      %2951 = vmatmul.mubr.bf16.gmra.mrb[0].mxu0 %v2885
      %v2952 = vpop.f32.mrb[0].mxu0
      %v2953 = vadd.f32 %v1897, %v2952
      %v2954 = vpop.f32.mrb[0].mxu0
      %v2955 = vpop.f32.mrb[0].mxu0
      %v2956 = vadd.f32 %v1898, %v2955
      %v2957 = vpop.f32.mrb[0].mxu0
      %2958 = vmatprep.mubr.bf16.mxu0 0
      %2959 = vmatmul.mubr.bf16.gmra.mrb[0].mxu0 %v2888
      %v2960 = vpop.f32.mrb[0].mxu0
      %v2961 = vadd.f32 %v1899, %v2960
      %v2962 = vpop.f32.mrb[0].mxu0
      %v2963 = vpop.f32.mrb[0].mxu0
      %v2964 = vadd.f32 %v1900, %v2963
      %v2965 = vpop.f32.mrb[0].mxu0
      %2966 = vdwg.mxu0
      %v2967 = vsel %vm2007, %v2937, -inf
      %2968 = vmax.xlane.f32.xlu0 %v2967
      %v2969 = vpop.xlane.xlu0 %2968
      %v2970 = vsel %vm2007, %v2940, -inf
      %2971 = vmax.xlane.f32.xlu0 %v2970
      %v2972 = vpop.xlane.xlu0 %2971
      %v2973 = vsel %vm2007, %v2945, -inf
      %2974 = vmax.xlane.f32.xlu0 %v2973
      %v2975 = vpop.xlane.xlu0 %2974
      %v2976 = vsel %vm2007, %v2948, -inf
      %2977 = vmax.xlane.f32.xlu0 %v2976
      %v2978 = vpop.xlane.xlu0 %2977
      %v2979 = vsel %vm2007, %v2953, -inf
      %2980 = vmax.xlane.f32.xlu0 %v2979
      %v2981 = vpop.xlane.xlu0 %2980
      %v2982 = vsel %vm2007, %v2956, -inf
      %2983 = vmax.xlane.f32.xlu0 %v2982
      %v2984 = vpop.xlane.xlu0 %2983
      %v2985 = vsel %vm2007, %v2961, -inf
      %2986 = vmax.xlane.f32.xlu0 %v2985
      %v2987 = vpop.xlane.xlu0 %2986
      %v2988 = vsel %vm2029, %v2964, -inf
      %2989 = vmax.xlane.f32.xlu0 %v2988
      %v2990 = vpop.xlane.xlu0 %2989
      %v2991 = vsub.f32 %v2937, %v2969
      %v2992 = vsub.f32 %v2940, %v2972
      %v2993 = vsub.f32 %v2945, %v2975
      %v2994 = vsub.f32 %v2948, %v2978
      %v2995 = vsub.f32 %v2953, %v2981
      %v2996 = vsub.f32 %v2956, %v2984
      %v2997 = vsub.f32 %v2961, %v2987
      %v2998 = vsub.f32 %v2964, %v2990
      %v2999 = vmul.f32 %v2991, 1.442695
      %v3000 = vpow.pop %v2999
      %v3001 = vmul.f32 %v2992, 1.442695
      %v3002 = vpow.pop %v3001
      %v3003 = vmul.f32 %v2993, 1.442695
      %v3004 = vpow.pop %v3003
      %v3005 = vmul.f32 %v2994, 1.442695
      %v3006 = vpow.pop %v3005
      %v3007 = vmul.f32 %v2995, 1.442695
      %v3008 = vpow.pop %v3007
      %v3009 = vmul.f32 %v2996, 1.442695
      %v3010 = vpow.pop %v3009
      %v3011 = vmul.f32 %v2997, 1.442695
      %v3012 = vpow.pop %v3011
      %v3013 = vmul.f32 %v2998, 1.442695
      %v3014 = vpow.pop %v3013
      %v3015 = vsel %vm2007, %v3000, 0.0
      %3016 = vadd.xlane.f32.xlu0 %v3015
      %v3017 = vpop.xlane.xlu0 %3016
      %v3018 = vsel %vm2007, %v3002, 0.0
      %3019 = vadd.xlane.f32.xlu0 %v3018
      %v3020 = vpop.xlane.xlu0 %3019
      %v3021 = vsel %vm2007, %v3004, 0.0
      %3022 = vadd.xlane.f32.xlu0 %v3021
      %v3023 = vpop.xlane.xlu0 %3022
      %v3024 = vsel %vm2007, %v3006, 0.0
      %3025 = vadd.xlane.f32.xlu0 %v3024
      %v3026 = vpop.xlane.xlu0 %3025
      %v3027 = vsel %vm2007, %v3008, 0.0
      %3028 = vadd.xlane.f32.xlu0 %v3027
      %v3029 = vpop.xlane.xlu0 %3028
      %v3030 = vsel %vm2007, %v3010, 0.0
      %3031 = vadd.xlane.f32.xlu0 %v3030
      %v3032 = vpop.xlane.xlu0 %3031
      %v3033 = vsel %vm2007, %v3012, 0.0
      %3034 = vadd.xlane.f32.xlu0 %v3033
      %v3035 = vpop.xlane.xlu0 %3034
      %v3036 = vsel %vm2029, %v3014, 0.0
      %3037 = vadd.xlane.f32.xlu0 %v3036
      %v3038 = vpop.xlane.xlu0 %3037
      %v3039 = vrcp.pop %v3017
      %v3040 = vmul.f32 %v3000, %v3039
      %v3041 = vrcp.pop %v3020
      %v3042 = vmul.f32 %v3002, %v3041
      %v3043 = vrcp.pop %v3023
      %v3044 = vmul.f32 %v3004, %v3043
      %v3045 = vrcp.pop %v3026
      %v3046 = vmul.f32 %v3006, %v3045
      %v3047 = vrcp.pop %v3029
      %v3048 = vmul.f32 %v3008, %v3047
      %v3049 = vrcp.pop %v3032
      %v3050 = vmul.f32 %v3010, %v3049
      %v3051 = vrcp.pop %v3035
      %v3052 = vmul.f32 %v3012, %v3051
      %v3053 = vrcp.pop %v3038
      %v3054 = vmul.f32 %v3014, %v3053
      %v3055 = vpack.c.bf16 %v3042, %v3040
      %v3056 = vpack.c.bf16 %v3046, %v3044
      %v3057 = vpack.c.bf16 %v3050, %v3048
      %v3058 = vpack.c.bf16 %v3054, %v3052
      %3059 = vrot.lane.b32.xlu0 %v1901, 40
      %v3060 = vpop.permute.xlu0 %3059
      %3061 = vrot.lane.b32.xlu0 %v1902, 40
      %v3062 = vpop.permute.xlu0 %3061
      %3063 = vrot.lane.b32.xlu0 %v1903, 40
      %v3064 = vpop.permute.xlu0 %3063
      %3065 = vrot.lane.b32.xlu0 %v1904, 40
      %v3066 = vpop.permute.xlu0 %3065
      %v3071 = vsel %vm2007, %v3055, 0
      %v3074 = vsel %vm2007, %v3056, 0
      %v3077 = vsel %vm2007, %v3057, 0
      %v3080 = vsel %vm2007, %v3058, 0
      %v3083 = vsel %vm2124, %v3066, 0
      %3085 = vmatprep.subr.bf16.mxu0 0
      %3086 = vmatpush1.bf16.msra.mxu0 %v3060
      %3087 = vmatprep.subr.bf16.mxu0 0
      %3088 = vmatpush1.bf16.msra.mxu0 %v3062
      %3089 = vmatprep.subr.bf16.mxu0 0
      %3090 = vmatpush1.bf16.msra.mxu0 %v3064
      %3091 = vmatprep.subr.bf16.mxu0 0
      %3092 = vmatpush1.bf16.msra.mxu0 %v3083
      %3093 = vmatprep.subr.bf16.mxu0 0
      %3094 = vmatpush1.bf16.msra.mxu0 0
      %3095 = vmatprep.subr.bf16.mxu0 0
      %3096 = vmatpush1.bf16.msra.mxu0 0
      %3097 = vmatprep.subr.bf16.mxu0 0
      %3098 = vmatpush1.bf16.msra.mxu0 0
      %3099 = vmatprep.subr.bf16.mxu0 0
      %3100 = vmatpush1.bf16.msra.mxu0 0
      %3101 = vmatprep.subr.bf16.mxu0 0
      %3102 = vmatpush1.bf16.msra.mxu0 0
      %3103 = vmatprep.subr.bf16.mxu0 0
      %3104 = vmatpush1.bf16.msra.mxu0 0
      %3105 = vmatprep.subr.bf16.mxu0 0
      %3106 = vmatpush1.bf16.msra.mxu0 0
      %3107 = vmatprep.subr.bf16.mxu0 0
      %3108 = vmatpush1.bf16.msra.mxu0 0
      %3109 = vmatprep.subr.bf16.mxu0 0
      %3110 = vmatpush1.bf16.msra.mxu0 0
      %3111 = vmatprep.subr.bf16.mxu0 0
      %3112 = vmatpush1.bf16.msra.mxu0 0
      %3113 = vmatprep.subr.bf16.mxu0 0
      %3114 = vmatpush1.bf16.msra.mxu0 0
      %3115 = vmatprep.subr.bf16.mxu0 0
      %3116 = vmatpush1.bf16.msra.mxu0 0
      %3117 = vmatprep.mubr.bf16.mxu0 0
      %3118 = vmatmul.mubr.bf16.gmra.mrb[0].mxu0 %v3071
      %v3119 = vpop.f32.mrb[0].mxu0
      %v3120 = vadd.f32 0.0, %v3119
      %v3121 = vpop.f32.mrb[0].mxu0
      %v3122 = vpop.f32.mrb[0].mxu0
      %v3123 = vadd.f32 0.0, %v3122
      %v3124 = vpop.f32.mrb[0].mxu0
      %3125 = vmatprep.mubr.bf16.mxu0 0
      %3126 = vmatmul.mubr.bf16.gmra.mrb[0].mxu0 %v3074
      %v3127 = vpop.f32.mrb[0].mxu0
      %v3128 = vadd.f32 0.0, %v3127
      %v3129 = vpop.f32.mrb[0].mxu0
      %v3130 = vpop.f32.mrb[0].mxu0
      %v3131 = vadd.f32 0.0, %v3130
      %v3132 = vpop.f32.mrb[0].mxu0
      %3133 = vmatprep.mubr.bf16.mxu0 0
      %3134 = vmatmul.mubr.bf16.gmra.mrb[0].mxu0 %v3077
      %v3135 = vpop.f32.mrb[0].mxu0
      %v3136 = vadd.f32 0.0, %v3135
      %v3137 = vpop.f32.mrb[0].mxu0
      %v3138 = vpop.f32.mrb[0].mxu0
      %v3139 = vadd.f32 0.0, %v3138
      %v3140 = vpop.f32.mrb[0].mxu0
      %3141 = vmatprep.mubr.bf16.mxu0 0
      %3142 = vmatmul.mubr.bf16.gmra.mrb[0].mxu0 %v3080
      %v3143 = vpop.f32.mrb[0].mxu0
      %v3144 = vadd.f32 0.0, %v3143
      %v3145 = vpop.f32.mrb[0].mxu0
      %v3146 = vpop.f32.mrb[0].mxu0
      %v3147 = vadd.f32 0.0, %v3146
      %v3148 = vpop.f32.mrb[0].mxu0
      %3149 = vdwg.mxu0
      %3158 = vrot.lane.b32.xlu0 %v3120, 24
      %v3159 = vpop.permute.xlu0 %3158
      %3160 = vrot.lane.b32.xlu0 %v3123, 24
      %v3161 = vpop.permute.xlu0 %3160
      %3162 = vrot.lane.b32.xlu0 %v3128, 24
      %v3163 = vpop.permute.xlu0 %3162
      %3164 = vrot.lane.b32.xlu0 %v3131, 24
      %v3165 = vpop.permute.xlu0 %3164
      %3166 = vrot.lane.b32.xlu0 %v3136, 24
      %v3167 = vpop.permute.xlu0 %3166
      %3168 = vrot.lane.b32.xlu0 %v3139, 24
      %v3169 = vpop.permute.xlu0 %3168
      %3170 = vrot.lane.b32.xlu0 %v3144, 24
      %v3171 = vpop.permute.xlu0 %3170
      %3172 = vrot.lane.b32.xlu0 %v3147, 24
      %v3173 = vpop.permute.xlu0 %3172
      %vm3182 = vcmask 261312
      %3183 = vst.msk [vmem:[#allocation3] sm:$0xff] %vm3182, %v3159
      %3184 = vst.msk [vmem:[#allocation3 + $0x8] sm:$0xff] %vm3182, %v3161
      %3185 = vst.msk [vmem:[#allocation3 + $0x10] sm:$0xff] %vm3182, %v3163
      %3186 = vst.msk [vmem:[#allocation3 + $0x18] sm:$0xff] %vm3182, %v3165
      %3187 = vst.msk [vmem:[#allocation3 + $0x20] sm:$0xff] %vm3182, %v3167
      %3188 = vst.msk [vmem:[#allocation3 + $0x28] sm:$0xff] %vm3182, %v3169
      %3189 = vst.msk [vmem:[#allocation3 + $0x30] sm:$0xff] %vm3182, %v3171
      %vm3190 = vcmask 259264
      %3191 = vst.msk [vmem:[#allocation3 + $0x38] sm:$0x3f] %vm3190, %v3173
      %v3192 = vld [vmem:[#allocation3] sm:$0xff]
      %v3193 = vld [vmem:[#allocation3 + $0x8] sm:$0xff]
      %v3194 = vld [vmem:[#allocation3 + $0x10] sm:$0xff]
      %v3195 = vld [vmem:[#allocation3 + $0x18] sm:$0xff]
      %v3196 = vld [vmem:[#allocation3 + $0x20] sm:$0xff]
      %v3197 = vld [vmem:[#allocation3 + $0x28] sm:$0xff]
      %v3198 = vld [vmem:[#allocation3 + $0x30] sm:$0xff]
      %v3199 = vld [vmem:[#allocation3 + $0x38] sm:$0x3f]
      %v3200 = vpack.c.bf16 %v3193, %v3192
      %v3201 = vpack.c.bf16 %v3195, %v3194
      %v3202 = vpack.c.bf16 %v3197, %v3196
      %v3203 = vpack.c.bf16 %v3199, %v3198
      %v3204 = vld [vmem:[%s728] sm:$0xf]
      %v3205 = vld [vmem:[%s728 + $0x4] sm:$0xf]
      %v3206 = vld [vmem:[%s728 + $0x8] sm:$0xf]
      %v3207 = vld [vmem:[%s728 + $0xc] sm:$0xf]
      %v3208 = vld [vmem:[%s731] sm:$0x1]
      %v3210 = vlaneseq
      %v3211 = vshrl.u32 %v3210, 7
      %v3212 = vsub.s32 0, %v3211
      %v3213 = vrot.slane %v3208, %v3212
      %v3219 = vunpack.c.l.b16 %v3204
      %v3220 = vunpack.c.l.b16 %v3205
      %v3221 = vunpack.c.l.b16 %v3206
      %v3222 = vunpack.c.l.b16 %v3207
      %v3223 = vpack.c.b16 %v3220, %v3219
      %v3224 = vpack.c.b16 %v3222, %v3221
      %v3228 = vsel %vm1815, %v3200, 0
      %v3231 = vsel %vm1815, %v3201, 0
      %v3234 = vsel %vm1815, %v3202, 0
      %v3237 = vsel %vm1815, %v3203, 0
      %3239 = vmatprep.subr.bf16.mxu0 0
      %3240 = vmatpush1.bf16.msra.mxu0 %v3223
      %3241 = vmatprep.subr.bf16.mxu0 0
      %3242 = vmatpush1.bf16.msra.mxu0 %v3224
      %3243 = vmatprep.subr.bf16.mxu0 0
      %3244 = vmatpush1.bf16.msra.mxu0 0
      %3245 = vmatprep.subr.bf16.mxu0 0
      %3246 = vmatpush1.bf16.msra.mxu0 0
      %3247 = vmatprep.subr.bf16.mxu0 0
      %3248 = vmatpush1.bf16.msra.mxu0 0
      %3249 = vmatprep.subr.bf16.mxu0 0
      %3250 = vmatpush1.bf16.msra.mxu0 0
      %3251 = vmatprep.subr.bf16.mxu0 0
      %3252 = vmatpush1.bf16.msra.mxu0 0
      %3253 = vmatprep.subr.bf16.mxu0 0
      %3254 = vmatpush1.bf16.msra.mxu0 0
      %3255 = vmatprep.subr.bf16.mxu0 0
      %3256 = vmatpush1.bf16.msra.mxu0 0
      %3257 = vmatprep.subr.bf16.mxu0 0
      %3258 = vmatpush1.bf16.msra.mxu0 0
      %3259 = vmatprep.subr.bf16.mxu0 0
      %3260 = vmatpush1.bf16.msra.mxu0 0
      %3261 = vmatprep.subr.bf16.mxu0 0
      %3262 = vmatpush1.bf16.msra.mxu0 0
      %3263 = vmatprep.subr.bf16.mxu0 0
      %3264 = vmatpush1.bf16.msra.mxu0 0
      %3265 = vmatprep.subr.bf16.mxu0 0
      %3266 = vmatpush1.bf16.msra.mxu0 0
      %3267 = vmatprep.subr.bf16.mxu0 0
      %3268 = vmatpush1.bf16.msra.mxu0 0
      %3269 = vmatprep.subr.bf16.mxu0 0
      %3270 = vmatpush1.bf16.msra.mxu0 0
      %3271 = vmatprep.mubr.bf16.mxu0 0
      %3272 = vmatmul.mubr.bf16.gmra.mrb[0].mxu0 %v3228
      %v3273 = vpop.f32.mrb[0].mxu0
      %v3274 = vadd.f32 %v3213, %v3273
      %v3275 = vpop.f32.mrb[0].mxu0
      %v3276 = vpop.f32.mrb[0].mxu0
      %v3277 = vadd.f32 %v3213, %v3276
      %v3278 = vpop.f32.mrb[0].mxu0
      %3279 = vmatprep.mubr.bf16.mxu0 0
      %3280 = vmatmul.mubr.bf16.gmra.mrb[0].mxu0 %v3231
      %v3281 = vpop.f32.mrb[0].mxu0
      %v3282 = vadd.f32 %v3213, %v3281
      %v3283 = vpop.f32.mrb[0].mxu0
      %v3284 = vpop.f32.mrb[0].mxu0
      %v3285 = vadd.f32 %v3213, %v3284
      %v3286 = vpop.f32.mrb[0].mxu0
      %3287 = vmatprep.mubr.bf16.mxu0 0
      %3288 = vmatmul.mubr.bf16.gmra.mrb[0].mxu0 %v3234
      %v3289 = vpop.f32.mrb[0].mxu0
      %v3290 = vadd.f32 %v3213, %v3289
      %v3291 = vpop.f32.mrb[0].mxu0
      %v3292 = vpop.f32.mrb[0].mxu0
      %v3293 = vadd.f32 %v3213, %v3292
      %v3294 = vpop.f32.mrb[0].mxu0
      %3295 = vmatprep.mubr.bf16.mxu0 0
      %3296 = vmatmul.mubr.bf16.gmra.mrb[0].mxu0 %v3237
      %v3297 = vpop.f32.mrb[0].mxu0
      %v3298 = vadd.f32 %v3213, %v3297
      %v3299 = vpop.f32.mrb[0].mxu0
      %v3300 = vpop.f32.mrb[0].mxu0
      %v3301 = vadd.f32 %v3213, %v3300
      %v3302 = vpop.f32.mrb[0].mxu0
      %3303 = vdwg.mxu0
      %v3304 = vadd.f32 %v1780, %v3274
      %v3305 = vadd.f32 %v1781, %v3277
      %v3306 = vadd.f32 %v1782, %v3282
      %v3307 = vadd.f32 %v1783, %v3285
      %v3308 = vadd.f32 %v1784, %v3290
      %v3309 = vadd.f32 %v1785, %v3293
      %v3310 = vadd.f32 %v1786, %v3298
      %v3311 = vadd.f32 %v1787, %v3301
      %v3312 = vld [vmem:[%s734] sm:$0x1]
      %v3313 = vld [vmem:[%s737] sm:$0x1]
      %v3314 = vsel %vm1815, %v3304, 0.0
      %3315 = vadd.xlane.f32.xlu0 %v3314
      %v3316 = vpop.xlane.xlu0 %3315
      %v3317 = vsel %vm1815, %v3305, 0.0
      %3318 = vadd.xlane.f32.xlu0 %v3317
      %v3319 = vpop.xlane.xlu0 %3318
      %v3320 = vsel %vm1815, %v3306, 0.0
      %3321 = vadd.xlane.f32.xlu0 %v3320
      %v3322 = vpop.xlane.xlu0 %3321
      %v3323 = vsel %vm1815, %v3307, 0.0
      %3324 = vadd.xlane.f32.xlu0 %v3323
      %v3325 = vpop.xlane.xlu0 %3324
      %v3326 = vsel %vm1815, %v3308, 0.0
      %3327 = vadd.xlane.f32.xlu0 %v3326
      %v3328 = vpop.xlane.xlu0 %3327
      %v3329 = vsel %vm1815, %v3309, 0.0
      %3330 = vadd.xlane.f32.xlu0 %v3329
      %v3331 = vpop.xlane.xlu0 %3330
      %v3332 = vsel %vm1815, %v3310, 0.0
      %3333 = vadd.xlane.f32.xlu0 %v3332
      %v3334 = vpop.xlane.xlu0 %3333
      %vm3335 = vcmask 259072
      %v3336 = vsel %vm3335, %v3311, 0.0
      %3337 = vadd.xlane.f32.xlu0 %v3336
      %v3338 = vpop.xlane.xlu0 %3337
      %v3339 = vrcp.pop 32.0
      %v3340 = vmul.f32 %v3316, %v3339
      %v3341 = vmul.f32 %v3319, %v3339
      %v3342 = vmul.f32 %v3322, %v3339
      %v3343 = vmul.f32 %v3325, %v3339
      %v3344 = vmul.f32 %v3328, %v3339
      %v3345 = vmul.f32 %v3331, %v3339
      %v3346 = vmul.f32 %v3334, %v3339
      %v3347 = vmul.f32 %v3338, %v3339
      %v3348 = vsub.f32 %v3304, %v3340
      %v3349 = vsub.f32 %v3305, %v3341
      %v3350 = vsub.f32 %v3306, %v3342
      %v3351 = vsub.f32 %v3307, %v3343
      %v3352 = vsub.f32 %v3308, %v3344
      %v3353 = vsub.f32 %v3309, %v3345
      %v3354 = vsub.f32 %v3310, %v3346
      %v3355 = vsub.f32 %v3311, %v3347
      %v3356 = vmul.f32 %v3348, %v3348
      %v3357 = vmul.f32 %v3349, %v3349
      %v3358 = vmul.f32 %v3350, %v3350
      %v3359 = vmul.f32 %v3351, %v3351
      %v3360 = vmul.f32 %v3352, %v3352
      %v3361 = vmul.f32 %v3353, %v3353
      %v3362 = vmul.f32 %v3354, %v3354
      %v3363 = vmul.f32 %v3355, %v3355
      %v3364 = vsel %vm1815, %v3356, 0.0
      %3365 = vadd.xlane.f32.xlu0 %v3364
      %v3366 = vpop.xlane.xlu0 %3365
      %v3367 = vsel %vm1815, %v3357, 0.0
      %3368 = vadd.xlane.f32.xlu0 %v3367
      %v3369 = vpop.xlane.xlu0 %3368
      %v3370 = vsel %vm1815, %v3358, 0.0
      %3371 = vadd.xlane.f32.xlu0 %v3370
      %v3372 = vpop.xlane.xlu0 %3371
      %v3373 = vsel %vm1815, %v3359, 0.0
      %3374 = vadd.xlane.f32.xlu0 %v3373
      %v3375 = vpop.xlane.xlu0 %3374
      %v3376 = vsel %vm1815, %v3360, 0.0
      %3377 = vadd.xlane.f32.xlu0 %v3376
      %v3378 = vpop.xlane.xlu0 %3377
      %v3379 = vsel %vm1815, %v3361, 0.0
      %3380 = vadd.xlane.f32.xlu0 %v3379
      %v3381 = vpop.xlane.xlu0 %3380
      %v3382 = vsel %vm1815, %v3362, 0.0
      %3383 = vadd.xlane.f32.xlu0 %v3382
      %v3384 = vpop.xlane.xlu0 %3383
      %v3385 = vsel %vm3335, %v3363, 0.0
      %3386 = vadd.xlane.f32.xlu0 %v3385
      %v3387 = vpop.xlane.xlu0 %3386
      %v3388 = vmul.f32 %v3366, %v3339
      %v3389 = vmul.f32 %v3369, %v3339
      %v3390 = vmul.f32 %v3372, %v3339
      %v3391 = vmul.f32 %v3375, %v3339
      %v3392 = vmul.f32 %v3378, %v3339
      %v3393 = vmul.f32 %v3381, %v3339
      %v3394 = vmul.f32 %v3384, %v3339
      %v3395 = vmul.f32 %v3387, %v3339
      %v3396 = vadd.f32 %v3388, 1e-05
      %v3397 = vadd.f32 %v3389, 1e-05
      %v3398 = vadd.f32 %v3390, 1e-05
      %v3399 = vadd.f32 %v3391, 1e-05
      %v3400 = vadd.f32 %v3392, 1e-05
      %v3401 = vadd.f32 %v3393, 1e-05
      %v3402 = vadd.f32 %v3394, 1e-05
      %v3403 = vadd.f32 %v3395, 1e-05
      %v3404 = vrsqrt.pop %v3396
      %v3405 = vrsqrt.pop %v3397
      %v3406 = vrsqrt.pop %v3398
      %v3407 = vrsqrt.pop %v3399
      %v3408 = vrsqrt.pop %v3400
      %v3409 = vrsqrt.pop %v3401
      %v3410 = vrsqrt.pop %v3402
      %v3411 = vrsqrt.pop %v3403
      %v3412 = vmul.f32 %v3348, %v3404
      %v3413 = vmul.f32 %v3349, %v3405
      %v3414 = vmul.f32 %v3350, %v3406
      %v3415 = vmul.f32 %v3351, %v3407
      %v3416 = vmul.f32 %v3352, %v3408
      %v3417 = vmul.f32 %v3353, %v3409
      %v3418 = vmul.f32 %v3354, %v3410
      %v3419 = vmul.f32 %v3355, %v3411
      %v3421 = vlaneseq
      %v3422 = vshrl.u32 %v3421, 7
      %v3423 = vsub.s32 0, %v3422
      %v3424 = vrot.slane %v3312, %v3423
      %v3426 = vmul.f32 %v3412, %v3424
      %v3427 = vmul.f32 %v3413, %v3424
      %v3428 = vmul.f32 %v3414, %v3424
      %v3429 = vmul.f32 %v3415, %v3424
      %v3430 = vmul.f32 %v3416, %v3424
      %v3431 = vmul.f32 %v3417, %v3424
      %v3432 = vmul.f32 %v3418, %v3424
      %v3433 = vmul.f32 %v3419, %v3424
      %v3435 = vlaneseq
      %v3436 = vshrl.u32 %v3435, 7
      %v3437 = vsub.s32 0, %v3436
      %v3438 = vrot.slane %v3313, %v3437
      %v3440 = vadd.f32 %v3426, %v3438
      %v3441 = vadd.f32 %v3427, %v3438
      %v3442 = vadd.f32 %v3428, %v3438
      %v3443 = vadd.f32 %v3429, %v3438
      %v3444 = vadd.f32 %v3430, %v3438
      %v3445 = vadd.f32 %v3431, %v3438
      %v3446 = vadd.f32 %v3432, %v3438
      %v3447 = vadd.f32 %v3433, %v3438
      %v3448 = vpack.c.bf16 %v3441, %v3440
      %v3449 = vpack.c.bf16 %v3443, %v3442
      %v3450 = vpack.c.bf16 %v3445, %v3444
      %v3451 = vpack.c.bf16 %v3447, %v3446
      %v3452 = vld [vmem:[%s742] sm:$0xf]
      %v3453 = vld [vmem:[%s742 + $0x4] sm:$0xf]
      %v3454 = vld [vmem:[%s742 + $0x8] sm:$0xf]
      %v3455 = vld [vmem:[%s742 + $0xc] sm:$0xf]
      %v3456 = vld [vmem:[%s745] sm:$0x1]
      %v3458 = vlaneseq
      %v3459 = vshrl.u32 %v3458, 7
      %v3460 = vsub.s32 0, %v3459
      %v3461 = vrot.slane %v3456, %v3460
      %v3467 = vunpack.c.l.b16 %v3452
      %v3468 = vunpack.c.l.b16 %v3453
      %v3469 = vunpack.c.l.b16 %v3454
      %v3470 = vunpack.c.l.b16 %v3455
      %v3471 = vpack.c.b16 %v3468, %v3467
      %v3472 = vpack.c.b16 %v3470, %v3469
      %v3476 = vsel %vm1815, %v3448, 0
      %v3479 = vsel %vm1815, %v3449, 0
      %v3482 = vsel %vm1815, %v3450, 0
      %v3485 = vsel %vm1815, %v3451, 0
      %3487 = vmatprep.subr.bf16.mxu0 0
      %3488 = vmatpush1.bf16.msra.mxu0 %v3471
      %3489 = vmatprep.subr.bf16.mxu0 0
      %3490 = vmatpush1.bf16.msra.mxu0 %v3472
      %3491 = vmatprep.subr.bf16.mxu0 0
      %3492 = vmatpush1.bf16.msra.mxu0 0
      %3493 = vmatprep.subr.bf16.mxu0 0
      %3494 = vmatpush1.bf16.msra.mxu0 0
      %3495 = vmatprep.subr.bf16.mxu0 0
      %3496 = vmatpush1.bf16.msra.mxu0 0
      %3497 = vmatprep.subr.bf16.mxu0 0
      %3498 = vmatpush1.bf16.msra.mxu0 0
      %3499 = vmatprep.subr.bf16.mxu0 0
      %3500 = vmatpush1.bf16.msra.mxu0 0
      %3501 = vmatprep.subr.bf16.mxu0 0
      %3502 = vmatpush1.bf16.msra.mxu0 0
      %3503 = vmatprep.subr.bf16.mxu0 0
      %3504 = vmatpush1.bf16.msra.mxu0 0
      %3505 = vmatprep.subr.bf16.mxu0 0
      %3506 = vmatpush1.bf16.msra.mxu0 0
      %3507 = vmatprep.subr.bf16.mxu0 0
      %3508 = vmatpush1.bf16.msra.mxu0 0
      %3509 = vmatprep.subr.bf16.mxu0 0
      %3510 = vmatpush1.bf16.msra.mxu0 0
      %3511 = vmatprep.subr.bf16.mxu0 0
      %3512 = vmatpush1.bf16.msra.mxu0 0
      %3513 = vmatprep.subr.bf16.mxu0 0
      %3514 = vmatpush1.bf16.msra.mxu0 0
      %3515 = vmatprep.subr.bf16.mxu0 0
      %3516 = vmatpush1.bf16.msra.mxu0 0
      %3517 = vmatprep.subr.bf16.mxu0 0
      %3518 = vmatpush1.bf16.msra.mxu0 0
      %3519 = vmatprep.mubr.bf16.mxu0 0
      %3520 = vmatmul.mubr.bf16.gmra.mrb[0].mxu0 %v3476
      %v3521 = vpop.f32.mrb[0].mxu0
      %v3522 = vadd.f32 %v3461, %v3521
      %v3523 = vpop.f32.mrb[0].mxu0
      %v3524 = vpop.f32.mrb[0].mxu0
      %v3525 = vadd.f32 %v3461, %v3524
      %v3526 = vpop.f32.mrb[0].mxu0
      %3527 = vmatprep.mubr.bf16.mxu0 0
      %3528 = vmatmul.mubr.bf16.gmra.mrb[0].mxu0 %v3479
      %v3529 = vpop.f32.mrb[0].mxu0
      %v3530 = vadd.f32 %v3461, %v3529
      %v3531 = vpop.f32.mrb[0].mxu0
      %v3532 = vpop.f32.mrb[0].mxu0
      %v3533 = vadd.f32 %v3461, %v3532
      %v3534 = vpop.f32.mrb[0].mxu0
      %3535 = vmatprep.mubr.bf16.mxu0 0
      %3536 = vmatmul.mubr.bf16.gmra.mrb[0].mxu0 %v3482
      %v3537 = vpop.f32.mrb[0].mxu0
      %v3538 = vadd.f32 %v3461, %v3537
      %v3539 = vpop.f32.mrb[0].mxu0
      %v3540 = vpop.f32.mrb[0].mxu0
      %v3541 = vadd.f32 %v3461, %v3540
      %v3542 = vpop.f32.mrb[0].mxu0
      %3543 = vmatprep.mubr.bf16.mxu0 0
      %3544 = vmatmul.mubr.bf16.gmra.mrb[0].mxu0 %v3485
      %v3545 = vpop.f32.mrb[0].mxu0
      %v3546 = vadd.f32 %v3461, %v3545
      %v3547 = vpop.f32.mrb[0].mxu0
      %v3548 = vpop.f32.mrb[0].mxu0
      %v3549 = vadd.f32 %v3461, %v3548
      %v3550 = vpop.f32.mrb[0].mxu0
      %3551 = vdwg.mxu0
      %v3552 = vmul.f32 %v3522, 0.5
      %v3553 = vmul.f32 %v3525, 0.5
      %v3554 = vmul.f32 %v3530, 0.5
      %v3555 = vmul.f32 %v3533, 0.5
      %v3556 = vmul.f32 %v3538, 0.5
      %v3557 = vmul.f32 %v3541, 0.5
      %v3558 = vmul.f32 %v3546, 0.5
      %v3559 = vmul.f32 %v3549, 0.5
      %v3560 = vmul.f32 %v3522, 0.70710677
      %v3561 = vmul.f32 %v3525, 0.70710677
      %v3562 = vmul.f32 %v3530, 0.70710677
      %v3563 = vmul.f32 %v3533, 0.70710677
      %v3564 = vmul.f32 %v3538, 0.70710677
      %v3565 = vmul.f32 %v3541, 0.70710677
      %v3566 = vmul.f32 %v3546, 0.70710677
      %v3567 = vmul.f32 %v3549, 0.70710677
      %v3568 = verf.f32.pop %v3560
      %v3569 = verf.f32.pop %v3561
      %v3570 = verf.f32.pop %v3562
      %v3571 = verf.f32.pop %v3563
      %v3572 = verf.f32.pop %v3564
      %v3573 = verf.f32.pop %v3565
      %v3574 = verf.f32.pop %v3566
      %v3575 = verf.f32.pop %v3567
      %v3576 = vadd.f32 %v3568, 1.0
      %v3577 = vadd.f32 %v3569, 1.0
      %v3578 = vadd.f32 %v3570, 1.0
      %v3579 = vadd.f32 %v3571, 1.0
      %v3580 = vadd.f32 %v3572, 1.0
      %v3581 = vadd.f32 %v3573, 1.0
      %v3582 = vadd.f32 %v3574, 1.0
      %v3583 = vadd.f32 %v3575, 1.0
      %v3584 = vmul.f32 %v3552, %v3576
      %v3585 = vmul.f32 %v3553, %v3577
      %v3586 = vmul.f32 %v3554, %v3578
      %v3587 = vmul.f32 %v3555, %v3579
      %v3588 = vmul.f32 %v3556, %v3580
      %v3589 = vmul.f32 %v3557, %v3581
      %v3590 = vmul.f32 %v3558, %v3582
      %v3591 = vmul.f32 %v3559, %v3583
      %v3592 = vpack.c.bf16 %v3585, %v3584
      %v3593 = vpack.c.bf16 %v3587, %v3586
      %v3594 = vpack.c.bf16 %v3589, %v3588
      %v3595 = vpack.c.bf16 %v3591, %v3590
      %v3596 = vld [vmem:[%s750] sm:$0xf]
      %v3597 = vld [vmem:[%s750 + $0x4] sm:$0xf]
      %v3598 = vld [vmem:[%s750 + $0x8] sm:$0xf]
      %v3599 = vld [vmem:[%s750 + $0xc] sm:$0xf]
      %v3600 = vld [vmem:[%s750 + $0x10] sm:$0xf]
      %v3601 = vld [vmem:[%s750 + $0x14] sm:$0xf]
      %v3602 = vld [vmem:[%s750 + $0x18] sm:$0xf]
      %v3603 = vld [vmem:[%s750 + $0x1c] sm:$0xf]
      %v3604 = vld [vmem:[%s753] sm:$0x1]
      %v3606 = vlaneseq
      %v3607 = vshrl.u32 %v3606, 7
      %v3608 = vsub.s32 0, %v3607
      %v3609 = vrot.slane %v3604, %v3608
      %v3619 = vunpack.c.l.b16 %v3596
      %v3620 = vunpack.c.l.b16 %v3597
      %v3621 = vunpack.c.l.b16 %v3598
      %v3622 = vunpack.c.l.b16 %v3599
      %v3623 = vunpack.c.l.b16 %v3600
      %v3624 = vunpack.c.l.b16 %v3601
      %v3625 = vunpack.c.l.b16 %v3602
      %v3626 = vunpack.c.l.b16 %v3603
      %v3627 = vpack.c.b16 %v3620, %v3619
      %v3628 = vpack.c.b16 %v3622, %v3621
      %v3629 = vpack.c.b16 %v3624, %v3623
      %v3630 = vpack.c.b16 %v3626, %v3625
      %vm3635 = vcmask 523264
      %v3637 = vsel %vm3635, %v3592, 0
      %v3640 = vsel %vm3635, %v3593, 0
      %v3643 = vsel %vm3635, %v3594, 0
      %v3646 = vsel %vm3635, %v3595, 0
      %3648 = vmatprep.subr.bf16.mxu0 0
      %3649 = vmatpush1.bf16.msra.mxu0 %v3627
      %3650 = vmatprep.subr.bf16.mxu0 0
      %3651 = vmatpush1.bf16.msra.mxu0 %v3628
      %3652 = vmatprep.subr.bf16.mxu0 0
      %3653 = vmatpush1.bf16.msra.mxu0 %v3629
      %3654 = vmatprep.subr.bf16.mxu0 0
      %3655 = vmatpush1.bf16.msra.mxu0 %v3630
      %3656 = vmatprep.subr.bf16.mxu0 0
      %3657 = vmatpush1.bf16.msra.mxu0 0
      %3658 = vmatprep.subr.bf16.mxu0 0
      %3659 = vmatpush1.bf16.msra.mxu0 0
      %3660 = vmatprep.subr.bf16.mxu0 0
      %3661 = vmatpush1.bf16.msra.mxu0 0
      %3662 = vmatprep.subr.bf16.mxu0 0
      %3663 = vmatpush1.bf16.msra.mxu0 0
      %3664 = vmatprep.subr.bf16.mxu0 0
      %3665 = vmatpush1.bf16.msra.mxu0 0
      %3666 = vmatprep.subr.bf16.mxu0 0
      %3667 = vmatpush1.bf16.msra.mxu0 0
      %3668 = vmatprep.subr.bf16.mxu0 0
      %3669 = vmatpush1.bf16.msra.mxu0 0
      %3670 = vmatprep.subr.bf16.mxu0 0
      %3671 = vmatpush1.bf16.msra.mxu0 0
      %3672 = vmatprep.subr.bf16.mxu0 0
      %3673 = vmatpush1.bf16.msra.mxu0 0
      %3674 = vmatprep.subr.bf16.mxu0 0
      %3675 = vmatpush1.bf16.msra.mxu0 0
      %3676 = vmatprep.subr.bf16.mxu0 0
      %3677 = vmatpush1.bf16.msra.mxu0 0
      %3678 = vmatprep.subr.bf16.mxu0 0
      %3679 = vmatpush1.bf16.msra.mxu0 0
      %3680 = vmatprep.mubr.bf16.mxu0 0
      %3681 = vmatmul.mubr.bf16.gmra.mrb[0].mxu0 %v3637
      %v3682 = vpop.f32.mrb[0].mxu0
      %v3683 = vadd.f32 %v3609, %v3682
      %v3684 = vpop.f32.mrb[0].mxu0
      %v3685 = vpop.f32.mrb[0].mxu0
      %v3686 = vadd.f32 %v3609, %v3685
      %v3687 = vpop.f32.mrb[0].mxu0
      %3688 = vmatprep.mubr.bf16.mxu0 0
      %3689 = vmatmul.mubr.bf16.gmra.mrb[0].mxu0 %v3640
      %v3690 = vpop.f32.mrb[0].mxu0
      %v3691 = vadd.f32 %v3609, %v3690
      %v3692 = vpop.f32.mrb[0].mxu0
      %v3693 = vpop.f32.mrb[0].mxu0
      %v3694 = vadd.f32 %v3609, %v3693
      %v3695 = vpop.f32.mrb[0].mxu0
      %3696 = vmatprep.mubr.bf16.mxu0 0
      %3697 = vmatmul.mubr.bf16.gmra.mrb[0].mxu0 %v3643
      %v3698 = vpop.f32.mrb[0].mxu0
      %v3699 = vadd.f32 %v3609, %v3698
      %v3700 = vpop.f32.mrb[0].mxu0
      %v3701 = vpop.f32.mrb[0].mxu0
      %v3702 = vadd.f32 %v3609, %v3701
      %v3703 = vpop.f32.mrb[0].mxu0
      %3704 = vmatprep.mubr.bf16.mxu0 0
      %3705 = vmatmul.mubr.bf16.gmra.mrb[0].mxu0 %v3646
      %v3706 = vpop.f32.mrb[0].mxu0
      %v3707 = vadd.f32 %v3609, %v3706
      %v3708 = vpop.f32.mrb[0].mxu0
      %v3709 = vpop.f32.mrb[0].mxu0
      %v3710 = vadd.f32 %v3609, %v3709
      %v3711 = vpop.f32.mrb[0].mxu0
      %3712 = vdwg.mxu0
      %v3713 = vadd.f32 %v3440, %v3683
      %v3714 = vadd.f32 %v3441, %v3686
      %v3715 = vadd.f32 %v3442, %v3691
      %v3716 = vadd.f32 %v3443, %v3694
      %v3717 = vadd.f32 %v3444, %v3699
      %v3718 = vadd.f32 %v3445, %v3702
      %v3719 = vadd.f32 %v3446, %v3707
      %v3720 = vadd.f32 %v3447, %v3710
      %v3721 = vld [vmem:[%s756] sm:$0x1]
      %v3722 = vld [vmem:[%s759] sm:$0x1]
      %v3723 = vsel %vm1815, %v3713, 0.0
      %3724 = vadd.xlane.f32.xlu0 %v3723
      %v3725 = vpop.xlane.xlu0 %3724
      %v3726 = vsel %vm1815, %v3714, 0.0
      %3727 = vadd.xlane.f32.xlu0 %v3726
      %v3728 = vpop.xlane.xlu0 %3727
      %v3729 = vsel %vm1815, %v3715, 0.0
      %3730 = vadd.xlane.f32.xlu0 %v3729
      %v3731 = vpop.xlane.xlu0 %3730
      %v3732 = vsel %vm1815, %v3716, 0.0
      %3733 = vadd.xlane.f32.xlu0 %v3732
      %v3734 = vpop.xlane.xlu0 %3733
      %v3735 = vsel %vm1815, %v3717, 0.0
      %3736 = vadd.xlane.f32.xlu0 %v3735
      %v3737 = vpop.xlane.xlu0 %3736
      %v3738 = vsel %vm1815, %v3718, 0.0
      %3739 = vadd.xlane.f32.xlu0 %v3738
      %v3740 = vpop.xlane.xlu0 %3739
      %v3741 = vsel %vm1815, %v3719, 0.0
      %3742 = vadd.xlane.f32.xlu0 %v3741
      %v3743 = vpop.xlane.xlu0 %3742
      %v3744 = vsel %vm3335, %v3720, 0.0
      %3745 = vadd.xlane.f32.xlu0 %v3744
      %v3746 = vpop.xlane.xlu0 %3745
      %v3747 = vmul.f32 %v3725, %v3339
      %v3748 = vmul.f32 %v3728, %v3339
      %v3749 = vmul.f32 %v3731, %v3339
      %v3750 = vmul.f32 %v3734, %v3339
      %v3751 = vmul.f32 %v3737, %v3339
      %v3752 = vmul.f32 %v3740, %v3339
      %v3753 = vmul.f32 %v3743, %v3339
      %v3754 = vmul.f32 %v3746, %v3339
      %v3755 = vsub.f32 %v3713, %v3747
      %v3756 = vsub.f32 %v3714, %v3748
      %v3757 = vsub.f32 %v3715, %v3749
      %v3758 = vsub.f32 %v3716, %v3750
      %v3759 = vsub.f32 %v3717, %v3751
      %v3760 = vsub.f32 %v3718, %v3752
      %v3761 = vsub.f32 %v3719, %v3753
      %v3762 = vsub.f32 %v3720, %v3754
      %v3763 = vmul.f32 %v3755, %v3755
      %v3764 = vmul.f32 %v3756, %v3756
      %v3765 = vmul.f32 %v3757, %v3757
      %v3766 = vmul.f32 %v3758, %v3758
      %v3767 = vmul.f32 %v3759, %v3759
      %v3768 = vmul.f32 %v3760, %v3760
      %v3769 = vmul.f32 %v3761, %v3761
      %v3770 = vmul.f32 %v3762, %v3762
      %v3771 = vsel %vm1815, %v3763, 0.0
      %3772 = vadd.xlane.f32.xlu0 %v3771
      %v3773 = vpop.xlane.xlu0 %3772
      %v3774 = vsel %vm1815, %v3764, 0.0
      %3775 = vadd.xlane.f32.xlu0 %v3774
      %v3776 = vpop.xlane.xlu0 %3775
      %v3777 = vsel %vm1815, %v3765, 0.0
      %3778 = vadd.xlane.f32.xlu0 %v3777
      %v3779 = vpop.xlane.xlu0 %3778
      %v3780 = vsel %vm1815, %v3766, 0.0
      %3781 = vadd.xlane.f32.xlu0 %v3780
      %v3782 = vpop.xlane.xlu0 %3781
      %v3783 = vsel %vm1815, %v3767, 0.0
      %3784 = vadd.xlane.f32.xlu0 %v3783
      %v3785 = vpop.xlane.xlu0 %3784
      %v3786 = vsel %vm1815, %v3768, 0.0
      %3787 = vadd.xlane.f32.xlu0 %v3786
      %v3788 = vpop.xlane.xlu0 %3787
      %v3789 = vsel %vm1815, %v3769, 0.0
      %3790 = vadd.xlane.f32.xlu0 %v3789
      %v3791 = vpop.xlane.xlu0 %3790
      %v3792 = vsel %vm3335, %v3770, 0.0
      %3793 = vadd.xlane.f32.xlu0 %v3792
      %v3794 = vpop.xlane.xlu0 %3793
      %v3795 = vmul.f32 %v3773, %v3339
      %v3796 = vmul.f32 %v3776, %v3339
      %v3797 = vmul.f32 %v3779, %v3339
      %v3798 = vmul.f32 %v3782, %v3339
      %v3799 = vmul.f32 %v3785, %v3339
      %v3800 = vmul.f32 %v3788, %v3339
      %v3801 = vmul.f32 %v3791, %v3339
      %v3802 = vmul.f32 %v3794, %v3339
      %v3803 = vadd.f32 %v3795, 1e-05
      %v3804 = vadd.f32 %v3796, 1e-05
      %v3805 = vadd.f32 %v3797, 1e-05
      %v3806 = vadd.f32 %v3798, 1e-05
      %v3807 = vadd.f32 %v3799, 1e-05
      %v3808 = vadd.f32 %v3800, 1e-05
      %v3809 = vadd.f32 %v3801, 1e-05
      %v3810 = vadd.f32 %v3802, 1e-05
      %v3811 = vrsqrt.pop %v3803
      %v3812 = vrsqrt.pop %v3804
      %v3813 = vrsqrt.pop %v3805
      %v3814 = vrsqrt.pop %v3806
      %v3815 = vrsqrt.pop %v3807
      %v3816 = vrsqrt.pop %v3808
      %v3817 = vrsqrt.pop %v3809
      %v3818 = vrsqrt.pop %v3810
      %v3819 = vmul.f32 %v3755, %v3811
      %v3820 = vmul.f32 %v3756, %v3812
      %v3821 = vmul.f32 %v3757, %v3813
      %v3822 = vmul.f32 %v3758, %v3814
      %v3823 = vmul.f32 %v3759, %v3815
      %v3824 = vmul.f32 %v3760, %v3816
      %v3825 = vmul.f32 %v3761, %v3817
      %v3826 = vmul.f32 %v3762, %v3818
      %v3828 = vlaneseq
      %v3829 = vshrl.u32 %v3828, 7
      %v3830 = vsub.s32 0, %v3829
      %v3831 = vrot.slane %v3721, %v3830
      %v3833 = vmul.f32 %v3819, %v3831
      %v3834 = vmul.f32 %v3820, %v3831
      %v3835 = vmul.f32 %v3821, %v3831
      %v3836 = vmul.f32 %v3822, %v3831
      %v3837 = vmul.f32 %v3823, %v3831
      %v3838 = vmul.f32 %v3824, %v3831
      %v3839 = vmul.f32 %v3825, %v3831
      %v3840 = vmul.f32 %v3826, %v3831
      %v3842 = vlaneseq
      %v3843 = vshrl.u32 %v3842, 7
      %v3844 = vsub.s32 0, %v3843
      %v3845 = vrot.slane %v3722, %v3844
      %v3847 = vadd.f32 %v3833, %v3845
      %v3848 = vadd.f32 %v3834, %v3845
      %v3849 = vadd.f32 %v3835, %v3845
      %v3850 = vadd.f32 %v3836, %v3845
      %v3851 = vadd.f32 %v3837, %v3845
      %v3852 = vadd.f32 %v3838, %v3845
      %v3853 = vadd.f32 %v3839, %v3845
      %v3854 = vadd.f32 %v3840, %v3845
      %3855 = vst.msk [vmem:[#allocation2] sm:$0xff] %vm1815, %v3847
      %3856 = vst.msk [vmem:[#allocation2 + $0x8] sm:$0xff] %vm1815, %v3848
      %3857 = vst.msk [vmem:[#allocation2 + $0x10] sm:$0xff] %vm1815, %v3849
      %3858 = vst.msk [vmem:[#allocation2 + $0x18] sm:$0xff] %vm1815, %v3850
      %3859 = vst.msk [vmem:[#allocation2 + $0x20] sm:$0xff] %vm1815, %v3851
      %3860 = vst.msk [vmem:[#allocation2 + $0x28] sm:$0xff] %vm1815, %v3852
      %3861 = vst.msk [vmem:[#allocation2 + $0x30] sm:$0xff] %vm1815, %v3853
      %3862 = vst.msk [vmem:[#allocation2 + $0x38] sm:$0x3f] %vm3335, %v3854
      %3863 = vst.msk [vmem:[%s19] sm:$0xff] %vm1815, %v3847
      %3864 = vst.msk [vmem:[%s19 + $0x8] sm:$0xff] %vm1815, %v3848
      %3865 = vst.msk [vmem:[%s19 + $0x10] sm:$0xff] %vm1815, %v3849
      %3866 = vst.msk [vmem:[%s19 + $0x18] sm:$0xff] %vm1815, %v3850
      %3867 = vst.msk [vmem:[%s19 + $0x20] sm:$0xff] %vm1815, %v3851
      %3868 = vst.msk [vmem:[%s19 + $0x28] sm:$0xff] %vm1815, %v3852
      %3869 = vst.msk [vmem:[%s19 + $0x30] sm:$0xff] %vm1815, %v3853
      %3870 = vst.msk [vmem:[%s19 + $0x38] sm:$0x3f] %vm3335, %v3854
      // Predicated region
      $region101: #{hubert_encoder_forward.5} parent=95 // pred_check
        %p3871 = pneg %p502
      $region102: #{hubert_encoder_forward.5} parent=95 // pred_check_branch
        %3873 = sbr.rel (%p3871) target = $region104
      $region103: #{hubert_encoder_forward.5} parent=95 // pred_region
        _
      $region104: #{hubert_encoder_forward.5} parent=95 // pred_fallthru
        _
      // Predicated region
      $region105: #{hubert_encoder_forward.5} parent=95 // pred_check
        %p3874 = pneg %p502
      $region106: #{hubert_encoder_forward.5} parent=95 // pred_check_branch
        %3876 = sbr.rel (%p3874) target = $region108
      $region107: #{hubert_encoder_forward.5} parent=95 // pred_region
        _
      $region108: #{hubert_encoder_forward.5} parent=95 // pred_fallthru
        _
    $region96: #{hubert_encoder_forward.5} parent=5 // pred_fallthru
      _
    %p3877 = scmp.le.s32.totalorder 2, %s25
    // Predicated region
    $region109: #{hubert_encoder_forward.5} parent=5 // pred_check
      %p3878 = pneg %p3877
    $region110: #{hubert_encoder_forward.5} parent=5 // pred_check_branch
      %3880 = sbr.rel (%p3878) target = $region112
    $region111: #{hubert_encoder_forward.5} parent=5 // pred_region
      %s3881 = ssub.s32 %s25, 2
    $region112: #{hubert_encoder_forward.5} parent=5 // pred_fallthru
      _
  $region6: #{hubert_encoder_forward.5} parent=0 // loop_footer
    %s29 = sadd.s32 1, %s25
  $region7: #{hubert_encoder_forward.5} parent=0 // loop_footer_branch
    %24 = sbr.rel target = $region3
  $region8: #{hubert_encoder_forward.5} parent=0 // loop_exit
    _

</llo_original>
